<compile_context>
chip_gen: v7x
topology: tpu7x:2x2x1
jax: 0.10.0
libtpu: 0.0.40
codegen_flags: <defaults>
</compile_context>

<pallas_src>
import math

import jax
import jax.numpy as jnp
from jax import lax
from jax.experimental import pallas as pl
from jax.experimental.pallas import tpu as pltpu

# ----- module hyper-parameters (small, consistent with SparseRIMCell.__init__) -----
BATCH = 2
BATCH_PAD = 8                    # pad batch to a full 8-row sublane tile
INPUT_SIZE = 16
HIDDEN_SIZE = 32
NUM_UNITS = 4
TOP_K = 2
INPUT_KEY_SIZE = 16
INPUT_VALUE_SIZE = 32
NUM_INPUT_HEADS = 1              # value/score head-mean is identity for 1 head
COMM_KEY_SIZE = 16
COMM_VALUE_SIZE = HIDDEN_SIZE    # RIMCell.__init__ forces comm_value_size == hidden_size
NUM_COMM_HEADS = 4

UH = NUM_UNITS * HIDDEN_SIZE         # 128  flat hidden lanes
UV = NUM_UNITS * INPUT_VALUE_SIZE    # 128  flat GRU-input lanes
UK = NUM_UNITS * INPUT_KEY_SIZE      # 64   flat query lanes
NG = NUM_COMM_HEADS * NUM_UNITS      # 16   merged (head, unit) axis
ROWS = BATCH_PAD * NG                # 128  rows of the fused comm attention
QK_PAD = 128                         # q / k column blocks padded to 128 lanes


def sparse_rim_cell_kernel(
    x_ref, h_ref,
    wk_ref, bk_ref, wv_ref, bv_ref, wq_ref, seg_ref, expm_ref,
    wgru_ref, bgru_ref,
    rrep_ref, rred_ref, mu_ref, wqkv_ref, mhq_ref, bm_ref, mhv_ref, wo_ref,
    hs_out_ref, maskrep_out_ref,
):
    x = x_ref[...]                       # (BP, Din)
    h = h_ref[...]                       # (BP, U*H) unit-major lanes
    BP = x.shape[0]
    U, H = NUM_UNITS, HIDDEN_SIZE

    # ---------------- SparseInputAttention (null row folded analytically) ----------------
    # key/value of the zero "null" input are just the biases; only the real input
    # goes through the MXU.  Weights are pre-tiled over units in the wrapper.
    key_t = jnp.dot(x, wk_ref[...], preferred_element_type=jnp.float32) + bk_ref[...]   # (BP, U*Kd)
    xv = jnp.dot(x, wv_ref[...], preferred_element_type=jnp.float32)                    # (BP, U*Vd)
    q = jnp.dot(h, wq_ref[...], preferred_element_type=jnp.float32)                     # (BP, U*Kd), 1/sqrt(Kd) folded in

    # ONE seg matmul for both real and null per-unit scores (stacked on sublanes)
    qk = jnp.concatenate([q * key_t, q * bk_ref[...]], axis=0)                          # (2BP, U*Kd)
    s2 = jnp.dot(qk, seg_ref[...], preferred_element_type=jnp.float32)                  # (2BP, U)
    s_real = s2[:BP]
    s_null = s2[BP:]

    # top-k active units: vectorized rank on the real-input score, lowest index wins ties
    # TODO(synk): SparseInputAttention source not provided; ranking follows the base
    # InputAttention (raw score of the non-null input), not s_real - s_null.
    s_i = s_real[:, :, None]
    s_j = s_real[:, None, :]
    idx_i = lax.broadcasted_iota(jnp.int32, (BP, U, U), 1)
    idx_j = lax.broadcasted_iota(jnp.int32, (BP, U, U), 2)
    beats = jnp.logical_or(s_j > s_i, jnp.logical_and(s_j == s_i, idx_j < idx_i))
    rank = jnp.sum(beats.astype(jnp.float32), axis=2)                                   # (BP, U)
    mask = (rank < TOP_K).astype(jnp.float32)                                           # 1.0 = active

    # closed-form 2-element softmax over (real, null); ONE expm matmul broadcasts both
    # the mask and the probability over each unit's 32 lanes.  input_dropout == identity.
    p_real = jax.nn.sigmoid(s_real - s_null)                                            # (BP, U)
    mp = jnp.dot(jnp.concatenate([mask, p_real], axis=0), expm_ref[...],
                 preferred_element_type=jnp.float32)                                    # (2BP, U*H)
    mask_rep = mp[:BP]
    p_rep = mp[BP:]
    # p*val_real + (1-p)*val_null == p*(x@Wv) + bv   (the bias cancels)
    inputs = (p_rep * xv + bv_ref[...]) * mask_rep                                      # (BP, U*Vd)

    # ---------------- per-unit GRU: single fused matmul over [inputs | h] ----------------
    xh = jnp.concatenate([inputs, h], axis=1)                                           # (BP, 256)
    g = jnp.dot(xh, wgru_ref[...], preferred_element_type=jnp.float32) + bgru_ref[...]  # (BP, 512)
    r = jax.nn.sigmoid(g[:, :UH])
    z = jax.nn.sigmoid(g[:, UH:2 * UH])
    n = jnp.tanh(g[:, 2 * UH:3 * UH] + r * g[:, 3 * UH:])
    h_rnn = (1.0 - z) * n + z * h                                                       # (BP, U*H)
    # blocked_grad.apply is identity in the forward pass.

    # ---------------- communication attention, fused on a (batch*head*unit) row axis ----
    # row r = (batch, head, unit); all heads/units/batches share ONE score matmul,
    # ONE 128-lane softmax and ONE PV matmul.  No reshapes / transposes / per-head glue.
    h_rep = jnp.dot(rrep_ref[...], h_rnn, preferred_element_type=jnp.float32)           # (ROWS, U*H)
    h_sel = h_rep * mu_ref[...]                                                          # keep own unit's lanes
    qkv = jnp.dot(h_sel, wqkv_ref[...], preferred_element_type=jnp.float32)             # (ROWS, 3*128)
    q_c = qkv[:, :QK_PAD] * mhq_ref[...]         # own head's query (1/sqrt(Ck) folded in)
    k_c = qkv[:, QK_PAD:2 * QK_PAD]              # keys of all heads (mask selects below)
    v_c = qkv[:, 2 * QK_PAD:]                    # values of all heads, (ROWS, Hc*Cv)

    sc = lax.dot_general(q_c, k_c, (((1,), (1,)), ((), ())),
                         preferred_element_type=jnp.float32) + bm_ref[...]               # (ROWS, ROWS)
    sc_max = jnp.max(sc, axis=-1, keepdims=True)
    e = jnp.exp(sc - sc_max)
    p = e * pl.reciprocal(jnp.sum(e, axis=-1, keepdims=True), approx=True)               # comm_dropout == identity
    # (query-side masking of inactive units dropped: their h_new is discarded below)

    ctx = jnp.dot(p, v_c, preferred_element_type=jnp.float32) * mhv_ref[...]             # own head's context
    contrib = jnp.dot(ctx, wo_ref[...], preferred_element_type=jnp.float32) * mu_ref[...]
    context = jnp.dot(rred_ref[...], contrib, preferred_element_type=jnp.float32)        # (BP, U*H), sums heads

    # ---------------- masked state update (lane-dense outputs) ----------------
    h_new = h_rnn + context
    hs_out_ref[...] = mask_rep * h_new + (1.0 - mask_rep) * h
    maskrep_out_ref[...] = mask_rep


PACKED_ORDER = ('wk_t', 'bk_t', 'wv_t', 'bv_t', 'wq_bd', 'seg', 'expm',
                'w_gru', 'b_gru', 'r_rep', 'r_red', 'mu', 'w_qkv', 'mhq', 'bm',
                'mhv', 'wo_all')


def init_params(key):
    ks = jax.random.split(key, 13)

    def uni(k, shape, fan_in):
        b = 1.0 / math.sqrt(fan_in)
        return jax.random.uniform(k, shape, jnp.float32, -b, b)

    def grp(k, shape):
        return 0.01 * jax.random.normal(k, shape, jnp.float32)

    return dict(
        # input attention: key / value Linear (with bias), group-linear query
        wk=uni(ks[0], (INPUT_SIZE, NUM_INPUT_HEADS * INPUT_KEY_SIZE), INPUT_SIZE),
        bk=uni(ks[1], (1, NUM_INPUT_HEADS * INPUT_KEY_SIZE), INPUT_SIZE),
        wv=uni(ks[2], (INPUT_SIZE, NUM_INPUT_HEADS * INPUT_VALUE_SIZE), INPUT_SIZE),
        bv=uni(ks[3], (1, NUM_INPUT_HEADS * INPUT_VALUE_SIZE), INPUT_SIZE),
        wq=grp(ks[4], (NUM_UNITS, HIDDEN_SIZE, NUM_INPUT_HEADS * INPUT_KEY_SIZE)),
        # per-unit GRU cell (gate order r, z, n as in torch.nn.GRUCell)
        w_ih=uni(ks[5], (NUM_UNITS, INPUT_VALUE_SIZE, 3 * HIDDEN_SIZE), HIDDEN_SIZE),
        w_hh=uni(ks[6], (NUM_UNITS, HIDDEN_SIZE, 3 * HIDDEN_SIZE), HIDDEN_SIZE),
        b_ih=uni(ks[7], (NUM_UNITS, 3 * HIDDEN_SIZE), HIDDEN_SIZE),
        b_hh=uni(ks[8], (NUM_UNITS, 3 * HIDDEN_SIZE), HIDDEN_SIZE),
        # communication attention (group-linear q/k/v/out, no bias)
        wqc=grp(ks[9], (NUM_UNITS, HIDDEN_SIZE, NUM_COMM_HEADS * COMM_KEY_SIZE)),
        wkc=grp(ks[10], (NUM_UNITS, HIDDEN_SIZE, NUM_COMM_HEADS * COMM_KEY_SIZE)),
        wvc=grp(ks[11], (NUM_UNITS, HIDDEN_SIZE, NUM_COMM_HEADS * COMM_VALUE_SIZE)),
        woc=grp(ks[12], (NUM_UNITS, NUM_COMM_HEADS * COMM_VALUE_SIZE, HIDDEN_SIZE)),
    )


def pack_params(p):
    """One-time repack of all weights into lane-dense / block-diag / constant-mask form."""
    U, H = NUM_UNITS, HIDDEN_SIZE
    Kd, Vd = INPUT_KEY_SIZE, INPUT_VALUE_SIZE
    Hc, Ck, Cv = NUM_COMM_HEADS, COMM_KEY_SIZE, COMM_VALUE_SIZE
    eye = jnp.eye(U, dtype=jnp.float32)

    # --- input attention: tile key/value weights over units, block-diag query ---
    wk_t = jnp.tile(p['wk'], (1, U))                         # (Din, U*Kd)
    bk_t = jnp.tile(p['bk'], (1, U))                         # (1, U*Kd)
    wv_t = jnp.tile(p['wv'], (1, U))                         # (Din, U*Vd)
    bv_t = jnp.tile(p['bv'], (1, U))                         # (1, U*Vd)
    wq_bd = (jnp.einsum('uhk,uv->uhvk', p['wq'], eye)
             .reshape(U * H, U * Kd)) / math.sqrt(Kd)        # 1/sqrt(Kd) folded in
    seg = jnp.repeat(eye, Kd, axis=1).T                      # (U*Kd, U) per-unit lane sum
    expm = jnp.repeat(eye, H, axis=1)                        # (U, U*H) per-unit lane broadcast

    # --- per-unit GRU: one (256, 512) weight with [r | z | gi_n | gh_n] columns ---
    wih = p['w_ih'].reshape(U, Vd, 3, H)
    whh = p['w_hh'].reshape(U, H, 3, H)

    def bd(w3):                                              # (U, din, H) -> (U*din, U*H)
        return jnp.einsum('uio,uv->uivo', w3, eye).reshape(U * w3.shape[1], U * H)

    zV = jnp.zeros((U * Vd, U * H), jnp.float32)
    zH = jnp.zeros((U * H, U * H), jnp.float32)
    w_gru = jnp.concatenate([
        jnp.concatenate([bd(wih[:, :, 0]), bd(wih[:, :, 1]), bd(wih[:, :, 2]), zV], axis=1),
        jnp.concatenate([bd(whh[:, :, 0]), bd(whh[:, :, 1]), zH, bd(whh[:, :, 2])], axis=1),
    ], axis=0)                                               # (256, 512)
    bih = p['b_ih'].reshape(U, 3, H)
    bhh = p['b_hh'].reshape(U, 3, H)
    b_gru = jnp.concatenate([
        (bih[:, 0] + bhh[:, 0]).reshape(1, U * H),
        (bih[:, 1] + bhh[:, 1]).reshape(1, U * H),
        bih[:, 2].reshape(1, U * H),
        bhh[:, 2].reshape(1, U * H)], axis=1)                # (1, 512)

    # --- communication attention: constants for the fused (batch*head*unit)-row form ---
    r_idx = jnp.arange(ROWS)
    b_of_r = r_idx // NG                                     # batch index of each row
    g_of_r = r_idx % NG
    u_of_r = g_of_r % U                                      # unit index of each row
    hd_of_r = g_of_r // U                                    # head index of each row
    lane = jnp.arange(UH)

    r_rep = (b_of_r[:, None] == jnp.arange(BATCH_PAD)[None, :]).astype(jnp.float32)  # (ROWS, BP)
    r_red = r_rep.T                                                                   # (BP, ROWS)
    mu = (lane[None, :] // H == u_of_r[:, None]).astype(jnp.float32)                  # (ROWS, U*H)
    mhq = ((lane[None, :] < Hc * Ck)
           & (lane[None, :] // Ck == hd_of_r[:, None])).astype(jnp.float32)           # (ROWS, 128)
    mhv = (lane[None, :] // Cv == hd_of_r[:, None]).astype(jnp.float32)               # (ROWS, Hc*Cv)
    same = ((b_of_r[:, None] == b_of_r[None, :])
            & (hd_of_r[:, None] == hd_of_r[None, :]))
    bm = jnp.where(same, 0.0, -1e30).astype(jnp.float32)                              # (ROWS, ROWS)

    wq_all = jnp.zeros((U * H, QK_PAD), jnp.float32).at[:, :Hc * Ck].set(
        p['wqc'].reshape(U * H, Hc * Ck) / math.sqrt(Ck))    # 1/sqrt(Ck) folded in
    wk_all = jnp.zeros((U * H, QK_PAD), jnp.float32).at[:, :Hc * Ck].set(
        p['wkc'].reshape(U * H, Hc * Ck))
    wv_all = p['wvc'].reshape(U * H, Hc * Cv)                # (128, 128)
    w_qkv = jnp.concatenate([wq_all, wk_all, wv_all], axis=1)  # (128, 384)
    wo_all = jnp.transpose(p['woc'], (1, 0, 2)).reshape(Hc * Cv, U * H)  # (128, 128)

    return dict(wk_t=wk_t, bk_t=bk_t, wv_t=wv_t, bv_t=bv_t, wq_bd=wq_bd, seg=seg,
                expm=expm, w_gru=w_gru, b_gru=b_gru, r_rep=r_rep, r_red=r_red, mu=mu,
                w_qkv=w_qkv, mhq=mhq, bm=bm, mhv=mhv, wo_all=wo_all)


@jax.jit
def sparse_rim_cell_forward(x, hs, packed):
    B = x.shape[0]
    # pad the batch to a full 8-row sublane tile; padding rows are zeros and are
    # sliced away after the kernel (they never contaminate real rows).
    x_p = jnp.zeros((BATCH_PAD, INPUT_SIZE), jnp.float32).at[:B].set(x)
    h_p = jnp.zeros((BATCH_PAD, UH), jnp.float32).at[:B].set(hs.reshape(B, UH))
    args = (x_p, h_p) + tuple(packed[name] for name in PACKED_ORDER)

    def full_spec(a):
        return pl.BlockSpec(a.shape, lambda i, n=a.ndim: (0,) * n)

    hs_flat, mask_rep = pl.pallas_call(
        sparse_rim_cell_kernel,
        grid=(1,),
        in_specs=[full_spec(a) for a in args],
        out_specs=(pl.BlockSpec((BATCH_PAD, UH), lambda i: (0, 0)),
                   pl.BlockSpec((BATCH_PAD, UH), lambda i: (0, 0))),
        out_shape=(jax.ShapeDtypeStruct((BATCH_PAD, UH), jnp.float32),
                   jax.ShapeDtypeStruct((BATCH_PAD, UH), jnp.float32)),
        compiler_params=pltpu.CompilerParams(dimension_semantics=("arbitrary",)),
    )(*args)

    hs_new = hs_flat[:B].reshape(B, NUM_UNITS, HIDDEN_SIZE)
    mask = mask_rep[:B].reshape(B, NUM_UNITS, HIDDEN_SIZE)[:, :, 0]
    # TODO(synk): SparseInputAttention's Beta-Bernoulli (eta_0, nu_0) regularization
    # loss source was not provided; reg_loss is returned as a constant 0.0.
    reg_loss = jnp.zeros((), jnp.float32)
    # SparseRIMCell.forward (GRU / cs=None) returns (hs, None, None, ctx=None, reg_loss);
    # the active-unit mask is returned additionally for inspection.
    return hs_new, mask, reg_loss


if __name__ == "__main__":
    root = jax.random.PRNGKey(0)
    kx, kh, kp = jax.random.split(root, 3)

    x = jax.random.normal(kx, (BATCH, INPUT_SIZE), jnp.float32)
    hs = jax.random.normal(kh, (BATCH, NUM_UNITS, HIDDEN_SIZE), jnp.float32)
    params = init_params(kp)
    packed = pack_params(params)   # one-time weight repack, outside the kernel

    hs_new, mask, reg_loss = sparse_rim_cell_forward(x, hs, packed)
    jax.block_until_ready((hs_new, mask, reg_loss))

    assert hs_new.shape == (BATCH, NUM_UNITS, HIDDEN_SIZE)
    assert mask.shape == (BATCH, NUM_UNITS)
    # exactly k active units per batch element
    assert bool(jnp.all(jnp.sum(mask, axis=1) == TOP_K))
    assert bool(jnp.all(jnp.isfinite(hs_new)))
    print("KERNEL_OK")
</pallas_src>

<mosaic_0001>
module attributes {stable_mosaic.version = 11 : i64} {
  func.func @sparse_rim_cell_kernel(%arg0: i32, %arg1: memref<8x16xf32, #tpu.memory_space<vmem>>, %arg2: memref<8x128xf32, #tpu.memory_space<vmem>>, %arg3: memref<16x64xf32, #tpu.memory_space<vmem>>, %arg4: memref<1x64xf32, #tpu.memory_space<vmem>>, %arg5: memref<16x128xf32, #tpu.memory_space<vmem>>, %arg6: memref<1x128xf32, #tpu.memory_space<vmem>>, %arg7: memref<128x64xf32, #tpu.memory_space<vmem>>, %arg8: memref<64x4xf32, #tpu.memory_space<vmem>>, %arg9: memref<4x128xf32, #tpu.memory_space<vmem>>, %arg10: memref<256x512xf32, #tpu.memory_space<vmem>>, %arg11: memref<1x512xf32, #tpu.memory_space<vmem>>, %arg12: memref<128x8xf32, #tpu.memory_space<vmem>>, %arg13: memref<8x128xf32, #tpu.memory_space<vmem>>, %arg14: memref<128x128xf32, #tpu.memory_space<vmem>>, %arg15: memref<128x384xf32, #tpu.memory_space<vmem>>, %arg16: memref<128x128xf32, #tpu.memory_space<vmem>>, %arg17: memref<128x128xf32, #tpu.memory_space<vmem>>, %arg18: memref<128x128xf32, #tpu.memory_space<vmem>>, %arg19: memref<128x128xf32, #tpu.memory_space<vmem>>, %arg20: memref<8x128xf32, #tpu.memory_space<vmem>>, %arg21: memref<8x128xf32, #tpu.memory_space<vmem>>) attributes {dimension_semantics = [#tpu.dimension_semantics<arbitrary>], iteration_bounds = array<i64: 1>, scalar_prefetch = 0 : i64, scratch_operands = 0 : i64, tpu.core_type = #tpu.core_type<tc>, window_params = [{pipeline_mode = #tpu.pipeline_mode<synchronous>, transform_indices = @transform_0, window_bounds = array<i64: 8, 16>}, {pipeline_mode = #tpu.pipeline_mode<synchronous>, transform_indices = @transform_1, window_bounds = array<i64: 8, 128>}, {pipeline_mode = #tpu.pipeline_mode<synchronous>, transform_indices = @transform_2, window_bounds = array<i64: 16, 64>}, {pipeline_mode = #tpu.pipeline_mode<synchronous>, transform_indices = @transform_3, window_bounds = array<i64: 1, 64>}, {pipeline_mode = #tpu.pipeline_mode<synchronous>, transform_indices = @transform_4, window_bounds = array<i64: 16, 128>}, {pipeline_mode = #tpu.pipeline_mode<synchronous>, transform_indices = @transform_5, window_bounds = array<i64: 1, 128>}, {pipeline_mode = #tpu.pipeline_mode<synchronous>, transform_indices = @transform_6, window_bounds = array<i64: 128, 64>}, {pipeline_mode = #tpu.pipeline_mode<synchronous>, transform_indices = @transform_7, window_bounds = array<i64: 64, 4>}, {pipeline_mode = #tpu.pipeline_mode<synchronous>, transform_indices = @transform_8, window_bounds = array<i64: 4, 128>}, {pipeline_mode = #tpu.pipeline_mode<synchronous>, transform_indices = @transform_9, window_bounds = array<i64: 256, 512>}, {pipeline_mode = #tpu.pipeline_mode<synchronous>, transform_indices = @transform_10, window_bounds = array<i64: 1, 512>}, {pipeline_mode = #tpu.pipeline_mode<synchronous>, transform_indices = @transform_11, window_bounds = array<i64: 128, 8>}, {pipeline_mode = #tpu.pipeline_mode<synchronous>, transform_indices = @transform_12, window_bounds = array<i64: 8, 128>}, {pipeline_mode = #tpu.pipeline_mode<synchronous>, transform_indices = @transform_13, window_bounds = array<i64: 128, 128>}, {pipeline_mode = #tpu.pipeline_mode<synchronous>, transform_indices = @transform_14, window_bounds = array<i64: 128, 384>}, {pipeline_mode = #tpu.pipeline_mode<synchronous>, transform_indices = @transform_15, window_bounds = array<i64: 128, 128>}, {pipeline_mode = #tpu.pipeline_mode<synchronous>, transform_indices = @transform_16, window_bounds = array<i64: 128, 128>}, {pipeline_mode = #tpu.pipeline_mode<synchronous>, transform_indices = @transform_17, window_bounds = array<i64: 128, 128>}, {pipeline_mode = #tpu.pipeline_mode<synchronous>, transform_indices = @transform_18, window_bounds = array<i64: 128, 128>}, {pipeline_mode = #tpu.pipeline_mode<synchronous>, transform_indices = @transform_19, window_bounds = array<i64: 8, 128>}, {pipeline_mode = #tpu.pipeline_mode<synchronous>, transform_indices = @transform_20, window_bounds = array<i64: 8, 128>}]} {
    %c0 = arith.constant 0 : index
    %c0_0 = arith.constant 0 : index
    %0 = vector.load %arg1[%c0, %c0_0] : memref<8x16xf32, #tpu.memory_space<vmem>>, vector<8x16xf32>
    %c0_1 = arith.constant 0 : index
    %c0_2 = arith.constant 0 : index
    %1 = vector.load %arg2[%c0_1, %c0_2] : memref<8x128xf32, #tpu.memory_space<vmem>>, vector<8x128xf32>
    %c0_3 = arith.constant 0 : index
    %c0_4 = arith.constant 0 : index
    %2 = vector.load %arg3[%c0_3, %c0_4] : memref<16x64xf32, #tpu.memory_space<vmem>>, vector<16x64xf32>
    %cst = arith.constant dense<0.000000e+00> : vector<8x64xf32>
    %3 = tpu.matmul %0, %2, %cst {dimension_numbers = #tpu.dot_dimension_numbers<[1], [0], [0], [1], [0, 0, 1, 1], [], []>} : vector<8x16xf32>, vector<16x64xf32>, vector<8x64xf32> -> vector<8x64xf32>
    %c0_5 = arith.constant 0 : index
    %c0_6 = arith.constant 0 : index
    %4 = vector.load %arg4[%c0_5, %c0_6] : memref<1x64xf32, #tpu.memory_space<vmem>>, vector<1x64xf32>
    %5 = vector.broadcast %4 : vector<1x64xf32> to vector<8x64xf32>
    %6 = arith.addf %3, %5 : vector<8x64xf32>
    %c0_7 = arith.constant 0 : index
    %c0_8 = arith.constant 0 : index
    %7 = vector.load %arg5[%c0_7, %c0_8] : memref<16x128xf32, #tpu.memory_space<vmem>>, vector<16x128xf32>
    %cst_9 = arith.constant dense<0.000000e+00> : vector<8x128xf32>
    %8 = tpu.matmul %0, %7, %cst_9 {dimension_numbers = #tpu.dot_dimension_numbers<[1], [0], [0], [1], [0, 0, 1, 1], [], []>} : vector<8x16xf32>, vector<16x128xf32>, vector<8x128xf32> -> vector<8x128xf32>
    %c0_10 = arith.constant 0 : index
    %c0_11 = arith.constant 0 : index
    %9 = vector.load %arg7[%c0_10, %c0_11] : memref<128x64xf32, #tpu.memory_space<vmem>>, vector<128x64xf32>
    %cst_12 = arith.constant dense<0.000000e+00> : vector<8x64xf32>
    %10 = tpu.matmul %1, %9, %cst_12 {dimension_numbers = #tpu.dot_dimension_numbers<[1], [0], [0], [1], [0, 0, 1, 1], [], []>} : vector<8x128xf32>, vector<128x64xf32>, vector<8x64xf32> -> vector<8x64xf32>
    %11 = arith.mulf %10, %6 : vector<8x64xf32>
    %c0_13 = arith.constant 0 : index
    %c0_14 = arith.constant 0 : index
    %12 = vector.load %arg4[%c0_13, %c0_14] : memref<1x64xf32, #tpu.memory_space<vmem>>, vector<1x64xf32>
    %13 = vector.broadcast %12 : vector<1x64xf32> to vector<8x64xf32>
    %14 = arith.mulf %10, %13 : vector<8x64xf32>
    %15 = tpu.concatenate %11, %14 in 0 : vector<8x64xf32>, vector<8x64xf32> -> vector<16x64xf32>
    %c0_15 = arith.constant 0 : index
    %c0_16 = arith.constant 0 : index
    %16 = vector.load %arg8[%c0_15, %c0_16] : memref<64x4xf32, #tpu.memory_space<vmem>>, vector<64x4xf32>
    %cst_17 = arith.constant dense<0.000000e+00> : vector<16x4xf32>
    %17 = tpu.matmul %15, %16, %cst_17 {dimension_numbers = #tpu.dot_dimension_numbers<[1], [0], [0], [1], [0, 0, 1, 1], [], []>} : vector<16x64xf32>, vector<64x4xf32>, vector<16x4xf32> -> vector<16x4xf32>
    %18 = vector.extract_strided_slice %17 {offsets = [0, 0], sizes = [8, 4], strides = [1, 1]} : vector<16x4xf32> to vector<8x4xf32>
    %19 = vector.extract_strided_slice %17 {offsets = [8, 0], sizes = [8, 4], strides = [1, 1]} : vector<16x4xf32> to vector<8x4xf32>
    %20 = vector.shape_cast %18 : vector<8x4xf32> to vector<8x4x1xf32>
    %21 = vector.shape_cast %18 : vector<8x4xf32> to vector<8x1x4xf32>
    %22 = tpu.iota {dimensions = array<i32: 1>} : vector<8x4x4xi32>
    %23 = tpu.iota {dimensions = array<i32: 2>} : vector<8x4x4xi32>
    %24 = vector.broadcast %21 : vector<8x1x4xf32> to vector<8x4x4xf32>
    %25 = vector.broadcast %20 : vector<8x4x1xf32> to vector<8x4x4xf32>
    %26 = arith.cmpf ogt, %24, %25 : vector<8x4x4xf32>
    %27 = vector.broadcast %21 : vector<8x1x4xf32> to vector<8x4x4xf32>
    %28 = vector.broadcast %20 : vector<8x4x1xf32> to vector<8x4x4xf32>
    %29 = arith.cmpf oeq, %27, %28 : vector<8x4x4xf32>
    %30 = arith.cmpi slt, %23, %22 : vector<8x4x4xi32>
    %31 = arith.andi %29, %30 : vector<8x4x4xi1>
    %32 = arith.ori %26, %31 : vector<8x4x4xi1>
    %33 = arith.extui %32 : vector<8x4x4xi1> to vector<8x4x4xi32>
    %34 = arith.sitofp %33 : vector<8x4x4xi32> to vector<8x4x4xf32>
    %cst_18 = arith.constant dense<0.000000e+00> : vector<8x4xf32>
    %35 = vector.multi_reduction <add>, %34, %cst_18 [2] : vector<8x4x4xf32> to vector<8x4xf32>
    %cst_19 = arith.constant 2.000000e+00 : f32
    %36 = vector.broadcast %cst_19 : f32 to vector<8x4xf32>
    %37 = arith.cmpf olt, %35, %36 : vector<8x4xf32>
    %38 = arith.extui %37 : vector<8x4xi1> to vector<8x4xi32>
    %39 = arith.sitofp %38 : vector<8x4xi32> to vector<8x4xf32>
    %40 = arith.subf %18, %19 : vector<8x4xf32>
    %41 = arith.negf %40 : vector<8x4xf32>
    %42 = math.exp %41 : vector<8x4xf32>
    %cst_20 = arith.constant 1.000000e+00 : f32
    %43 = vector.broadcast %cst_20 : f32 to vector<8x4xf32>
    %44 = arith.addf %43, %42 : vector<8x4xf32>
    %45 = arith.divf %43, %44 : vector<8x4xf32>
    %46 = tpu.concatenate %39, %45 in 0 : vector<8x4xf32>, vector<8x4xf32> -> vector<16x4xf32>
    %c0_21 = arith.constant 0 : index
    %c0_22 = arith.constant 0 : index
    %47 = vector.load %arg9[%c0_21, %c0_22] : memref<4x128xf32, #tpu.memory_space<vmem>>, vector<4x128xf32>
    %cst_23 = arith.constant dense<0.000000e+00> : vector<16x128xf32>
    %48 = tpu.matmul %46, %47, %cst_23 {dimension_numbers = #tpu.dot_dimension_numbers<[1], [0], [0], [1], [0, 0, 1, 1], [], []>} : vector<16x4xf32>, vector<4x128xf32>, vector<16x128xf32> -> vector<16x128xf32>
    %49 = vector.extract_strided_slice %48 {offsets = [0, 0], sizes = [8, 128], strides = [1, 1]} : vector<16x128xf32> to vector<8x128xf32>
    %50 = vector.extract_strided_slice %48 {offsets = [8, 0], sizes = [8, 128], strides = [1, 1]} : vector<16x128xf32> to vector<8x128xf32>
    %51 = arith.mulf %50, %8 : vector<8x128xf32>
    %c0_24 = arith.constant 0 : index
    %c0_25 = arith.constant 0 : index
    %52 = vector.load %arg6[%c0_24, %c0_25] : memref<1x128xf32, #tpu.memory_space<vmem>>, vector<1x128xf32>
    %53 = vector.broadcast %52 : vector<1x128xf32> to vector<8x128xf32>
    %54 = arith.addf %51, %53 : vector<8x128xf32>
    %55 = arith.mulf %54, %49 : vector<8x128xf32>
    %56 = tpu.concatenate %55, %1 in 1 : vector<8x128xf32>, vector<8x128xf32> -> vector<8x256xf32>
    %c0_26 = arith.constant 0 : index
    %c0_27 = arith.constant 0 : index
    %57 = vector.load %arg10[%c0_26, %c0_27] : memref<256x512xf32, #tpu.memory_space<vmem>>, vector<256x512xf32>
    %cst_28 = arith.constant dense<0.000000e+00> : vector<8x512xf32>
    %58 = tpu.matmul %56, %57, %cst_28 {dimension_numbers = #tpu.dot_dimension_numbers<[1], [0], [0], [1], [0, 0, 1, 1], [], []>} : vector<8x256xf32>, vector<256x512xf32>, vector<8x512xf32> -> vector<8x512xf32>
    %c0_29 = arith.constant 0 : index
    %c0_30 = arith.constant 0 : index
    %59 = vector.load %arg11[%c0_29, %c0_30] : memref<1x512xf32, #tpu.memory_space<vmem>>, vector<1x512xf32>
    %60 = vector.broadcast %59 : vector<1x512xf32> to vector<8x512xf32>
    %61 = arith.addf %58, %60 : vector<8x512xf32>
    %62 = vector.extract_strided_slice %61 {offsets = [0, 0], sizes = [8, 128], strides = [1, 1]} : vector<8x512xf32> to vector<8x128xf32>
    %63 = arith.negf %62 : vector<8x128xf32>
    %64 = math.exp %63 : vector<8x128xf32>
    %cst_31 = arith.constant 1.000000e+00 : f32
    %65 = vector.broadcast %cst_31 : f32 to vector<8x128xf32>
    %66 = arith.addf %65, %64 : vector<8x128xf32>
    %67 = arith.divf %65, %66 : vector<8x128xf32>
    %68 = vector.extract_strided_slice %61 {offsets = [0, 128], sizes = [8, 128], strides = [1, 1]} : vector<8x512xf32> to vector<8x128xf32>
    %69 = arith.negf %68 : vector<8x128xf32>
    %70 = math.exp %69 : vector<8x128xf32>
    %cst_32 = arith.constant 1.000000e+00 : f32
    %71 = vector.broadcast %cst_32 : f32 to vector<8x128xf32>
    %72 = arith.addf %71, %70 : vector<8x128xf32>
    %73 = arith.divf %71, %72 : vector<8x128xf32>
    %74 = vector.extract_strided_slice %61 {offsets = [0, 256], sizes = [8, 128], strides = [1, 1]} : vector<8x512xf32> to vector<8x128xf32>
    %75 = vector.extract_strided_slice %61 {offsets = [0, 384], sizes = [8, 128], strides = [1, 1]} : vector<8x512xf32> to vector<8x128xf32>
    %76 = arith.mulf %67, %75 : vector<8x128xf32>
    %77 = arith.addf %74, %76 : vector<8x128xf32>
    %78 = math.tanh %77 : vector<8x128xf32>
    %cst_33 = arith.constant 1.000000e+00 : f32
    %79 = vector.broadcast %cst_33 : f32 to vector<8x128xf32>
    %80 = arith.subf %79, %73 : vector<8x128xf32>
    %81 = arith.mulf %80, %78 : vector<8x128xf32>
    %82 = arith.mulf %73, %1 : vector<8x128xf32>
    %83 = arith.addf %81, %82 : vector<8x128xf32>
    %c0_34 = arith.constant 0 : index
    %c0_35 = arith.constant 0 : index
    %84 = vector.load %arg12[%c0_34, %c0_35] : memref<128x8xf32, #tpu.memory_space<vmem>>, vector<128x8xf32>
    %cst_36 = arith.constant dense<0.000000e+00> : vector<128x128xf32>
    %85 = tpu.matmul %84, %83, %cst_36 {dimension_numbers = #tpu.dot_dimension_numbers<[1], [0], [0], [1], [0, 0, 1, 1], [], []>} : vector<128x8xf32>, vector<8x128xf32>, vector<128x128xf32> -> vector<128x128xf32>
    %c0_37 = arith.constant 0 : index
    %c0_38 = arith.constant 0 : index
    %86 = vector.load %arg14[%c0_37, %c0_38] : memref<128x128xf32, #tpu.memory_space<vmem>>, vector<128x128xf32>
    %87 = arith.mulf %85, %86 : vector<128x128xf32>
    %c0_39 = arith.constant 0 : index
    %c0_40 = arith.constant 0 : index
    %88 = vector.load %arg15[%c0_39, %c0_40] : memref<128x384xf32, #tpu.memory_space<vmem>>, vector<128x384xf32>
    %cst_41 = arith.constant dense<0.000000e+00> : vector<128x384xf32>
    %89 = tpu.matmul %87, %88, %cst_41 {dimension_numbers = #tpu.dot_dimension_numbers<[1], [0], [0], [1], [0, 0, 1, 1], [], []>} : vector<128x128xf32>, vector<128x384xf32>, vector<128x384xf32> -> vector<128x384xf32>
    %90 = vector.extract_strided_slice %89 {offsets = [0, 0], sizes = [128, 128], strides = [1, 1]} : vector<128x384xf32> to vector<128x128xf32>
    %c0_42 = arith.constant 0 : index
    %c0_43 = arith.constant 0 : index
    %91 = vector.load %arg16[%c0_42, %c0_43] : memref<128x128xf32, #tpu.memory_space<vmem>>, vector<128x128xf32>
    %92 = arith.mulf %90, %91 : vector<128x128xf32>
    %93 = vector.extract_strided_slice %89 {offsets = [0, 128], sizes = [128, 128], strides = [1, 1]} : vector<128x384xf32> to vector<128x128xf32>
    %94 = vector.extract_strided_slice %89 {offsets = [0, 256], sizes = [128, 128], strides = [1, 1]} : vector<128x384xf32> to vector<128x128xf32>
    %cst_44 = arith.constant dense<0.000000e+00> : vector<128x128xf32>
    %95 = tpu.matmul %92, %93, %cst_44 {dimension_numbers = #tpu.dot_dimension_numbers<[1], [1], [0], [0], [0, 0, 1, 0], [], []>} : vector<128x128xf32>, vector<128x128xf32>, vector<128x128xf32> -> vector<128x128xf32>
    %c0_45 = arith.constant 0 : index
    %c0_46 = arith.constant 0 : index
    %96 = vector.load %arg17[%c0_45, %c0_46] : memref<128x128xf32, #tpu.memory_space<vmem>>, vector<128x128xf32>
    %97 = arith.addf %95, %96 : vector<128x128xf32>
    %cst_47 = arith.constant dense<0xFF800000> : vector<128xf32>
    %98 = vector.multi_reduction <maximumf>, %97, %cst_47 [1] : vector<128x128xf32> to vector<128xf32>
    %99 = vector.shape_cast %98 : vector<128xf32> to vector<128x1xf32>
    %100 = vector.broadcast %99 : vector<128x1xf32> to vector<128x128xf32>
    %101 = arith.subf %97, %100 : vector<128x128xf32>
    %102 = math.exp %101 : vector<128x128xf32>
    %cst_48 = arith.constant dense<0.000000e+00> : vector<128xf32>
    %103 = vector.multi_reduction <add>, %102, %cst_48 [1] : vector<128x128xf32> to vector<128xf32>
    %104 = vector.shape_cast %103 : vector<128xf32> to vector<128x1xf32>
    %105 = tpu.reciprocal %104 {approx = true} : vector<128x1xf32> -> vector<128x1xf32>
    %106 = vector.broadcast %105 : vector<128x1xf32> to vector<128x128xf32>
    %107 = arith.mulf %102, %106 : vector<128x128xf32>
    %cst_49 = arith.constant dense<0.000000e+00> : vector<128x128xf32>
    %108 = tpu.matmul %107, %94, %cst_49 {dimension_numbers = #tpu.dot_dimension_numbers<[1], [0], [0], [1], [0, 0, 1, 1], [], []>} : vector<128x128xf32>, vector<128x128xf32>, vector<128x128xf32> -> vector<128x128xf32>
    %c0_50 = arith.constant 0 : index
    %c0_51 = arith.constant 0 : index
    %109 = vector.load %arg18[%c0_50, %c0_51] : memref<128x128xf32, #tpu.memory_space<vmem>>, vector<128x128xf32>
    %110 = arith.mulf %108, %109 : vector<128x128xf32>
    %c0_52 = arith.constant 0 : index
    %c0_53 = arith.constant 0 : index
    %111 = vector.load %arg19[%c0_52, %c0_53] : memref<128x128xf32, #tpu.memory_space<vmem>>, vector<128x128xf32>
    %cst_54 = arith.constant dense<0.000000e+00> : vector<128x128xf32>
    %112 = tpu.matmul %110, %111, %cst_54 {dimension_numbers = #tpu.dot_dimension_numbers<[1], [0], [0], [1], [0, 0, 1, 1], [], []>} : vector<128x128xf32>, vector<128x128xf32>, vector<128x128xf32> -> vector<128x128xf32>
    %c0_55 = arith.constant 0 : index
    %c0_56 = arith.constant 0 : index
    %113 = vector.load %arg14[%c0_55, %c0_56] : memref<128x128xf32, #tpu.memory_space<vmem>>, vector<128x128xf32>
    %114 = arith.mulf %112, %113 : vector<128x128xf32>
    %c0_57 = arith.constant 0 : index
    %c0_58 = arith.constant 0 : index
    %115 = vector.load %arg13[%c0_57, %c0_58] : memref<8x128xf32, #tpu.memory_space<vmem>>, vector<8x128xf32>
    %cst_59 = arith.constant dense<0.000000e+00> : vector<8x128xf32>
    %116 = tpu.matmul %115, %114, %cst_59 {dimension_numbers = #tpu.dot_dimension_numbers<[1], [0], [0], [1], [0, 0, 1, 1], [], []>} : vector<8x128xf32>, vector<128x128xf32>, vector<8x128xf32> -> vector<8x128xf32>
    %117 = arith.addf %83, %116 : vector<8x128xf32>
    %118 = arith.mulf %49, %117 : vector<8x128xf32>
    %cst_60 = arith.constant 1.000000e+00 : f32
    %119 = vector.broadcast %cst_60 : f32 to vector<8x128xf32>
    %120 = arith.subf %119, %49 : vector<8x128xf32>
    %121 = arith.mulf %120, %1 : vector<8x128xf32>
    %122 = arith.addf %118, %121 : vector<8x128xf32>
    %c0_61 = arith.constant 0 : index
    %c0_62 = arith.constant 0 : index
    %123 = vector.load %arg20[%c0_61, %c0_62] : memref<8x128xf32, #tpu.memory_space<vmem>>, vector<8x128xf32>
    tpu.vector_store %arg20[%c0_61, %c0_62], %122 {strides = array<i32>} : memref<8x128xf32, #tpu.memory_space<vmem>>, vector<8x128xf32>,
    %c0_63 = arith.constant 0 : index
    %c0_64 = arith.constant 0 : index
    %124 = vector.load %arg21[%c0_63, %c0_64] : memref<8x128xf32, #tpu.memory_space<vmem>>, vector<8x128xf32>
    tpu.vector_store %arg21[%c0_63, %c0_64], %49 {strides = array<i32>} : memref<8x128xf32, #tpu.memory_space<vmem>>, vector<8x128xf32>,
    return
  }
  func.func @transform_0(%arg0: i32) -> (i32, i32) {
    %c0_i32 = arith.constant 0 : i32
    %c0_i32_0 = arith.constant 0 : i32
    %c0_i32_1 = arith.constant 0 : i32
    return %c0_i32, %c0_i32_0 : i32, i32
  }
  func.func @transform_1(%arg0: i32) -> (i32, i32) {
    %c0_i32 = arith.constant 0 : i32
    %c0_i32_0 = arith.constant 0 : i32
    %c0_i32_1 = arith.constant 0 : i32
    return %c0_i32, %c0_i32_0 : i32, i32
  }
  func.func @transform_2(%arg0: i32) -> (i32, i32) {
    %c0_i32 = arith.constant 0 : i32
    %c0_i32_0 = arith.constant 0 : i32
    %c0_i32_1 = arith.constant 0 : i32
    return %c0_i32, %c0_i32_0 : i32, i32
  }
  func.func @transform_3(%arg0: i32) -> (i32, i32) {
    %c0_i32 = arith.constant 0 : i32
    %c0_i32_0 = arith.constant 0 : i32
    %c0_i32_1 = arith.constant 0 : i32
    return %c0_i32, %c0_i32_0 : i32, i32
  }
  func.func @transform_4(%arg0: i32) -> (i32, i32) {
    %c0_i32 = arith.constant 0 : i32
    %c0_i32_0 = arith.constant 0 : i32
    %c0_i32_1 = arith.constant 0 : i32
    return %c0_i32, %c0_i32_0 : i32, i32
  }
  func.func @transform_5(%arg0: i32) -> (i32, i32) {
    %c0_i32 = arith.constant 0 : i32
    %c0_i32_0 = arith.constant 0 : i32
    %c0_i32_1 = arith.constant 0 : i32
    return %c0_i32, %c0_i32_0 : i32, i32
  }
  func.func @transform_6(%arg0: i32) -> (i32, i32) {
    %c0_i32 = arith.constant 0 : i32
    %c0_i32_0 = arith.constant 0 : i32
    %c0_i32_1 = arith.constant 0 : i32
    return %c0_i32, %c0_i32_0 : i32, i32
  }
  func.func @transform_7(%arg0: i32) -> (i32, i32) {
    %c0_i32 = arith.constant 0 : i32
    %c0_i32_0 = arith.constant 0 : i32
    %c0_i32_1 = arith.constant 0 : i32
    return %c0_i32, %c0_i32_0 : i32, i32
  }
  func.func @transform_8(%arg0: i32) -> (i32, i32) {
    %c0_i32 = arith.constant 0 : i32
    %c0_i32_0 = arith.constant 0 : i32
    %c0_i32_1 = arith.constant 0 : i32
    return %c0_i32, %c0_i32_0 : i32, i32
  }
  func.func @transform_9(%arg0: i32) -> (i32, i32) {
    %c0_i32 = arith.constant 0 : i32
    %c0_i32_0 = arith.constant 0 : i32
    %c0_i32_1 = arith.constant 0 : i32
    return %c0_i32, %c0_i32_0 : i32, i32
  }
  func.func @transform_10(%arg0: i32) -> (i32, i32) {
    %c0_i32 = arith.constant 0 : i32
    %c0_i32_0 = arith.constant 0 : i32
    %c0_i32_1 = arith.constant 0 : i32
    return %c0_i32, %c0_i32_0 : i32, i32
  }
  func.func @transform_11(%arg0: i32) -> (i32, i32) {
    %c0_i32 = arith.constant 0 : i32
    %c0_i32_0 = arith.constant 0 : i32
    %c0_i32_1 = arith.constant 0 : i32
    return %c0_i32, %c0_i32_0 : i32, i32
  }
  func.func @transform_12(%arg0: i32) -> (i32, i32) {
    %c0_i32 = arith.constant 0 : i32
    %c0_i32_0 = arith.constant 0 : i32
    %c0_i32_1 = arith.constant 0 : i32
    return %c0_i32, %c0_i32_0 : i32, i32
  }
  func.func @transform_13(%arg0: i32) -> (i32, i32) {
    %c0_i32 = arith.constant 0 : i32
    %c0_i32_0 = arith.constant 0 : i32
    %c0_i32_1 = arith.constant 0 : i32
    return %c0_i32, %c0_i32_0 : i32, i32
  }
  func.func @transform_14(%arg0: i32) -> (i32, i32) {
    %c0_i32 = arith.constant 0 : i32
    %c0_i32_0 = arith.constant 0 : i32
    %c0_i32_1 = arith.constant 0 : i32
    return %c0_i32, %c0_i32_0 : i32, i32
  }
  func.func @transform_15(%arg0: i32) -> (i32, i32) {
    %c0_i32 = arith.constant 0 : i32
    %c0_i32_0 = arith.constant 0 : i32
    %c0_i32_1 = arith.constant 0 : i32
    return %c0_i32, %c0_i32_0 : i32, i32
  }
  func.func @transform_16(%arg0: i32) -> (i32, i32) {
    %c0_i32 = arith.constant 0 : i32
    %c0_i32_0 = arith.constant 0 : i32
    %c0_i32_1 = arith.constant 0 : i32
    return %c0_i32, %c0_i32_0 : i32, i32
  }
  func.func @transform_17(%arg0: i32) -> (i32, i32) {
    %c0_i32 = arith.constant 0 : i32
    %c0_i32_0 = arith.constant 0 : i32
    %c0_i32_1 = arith.constant 0 : i32
    return %c0_i32, %c0_i32_0 : i32, i32
  }
  func.func @transform_18(%arg0: i32) -> (i32, i32) {
    %c0_i32 = arith.constant 0 : i32
    %c0_i32_0 = arith.constant 0 : i32
    %c0_i32_1 = arith.constant 0 : i32
    return %c0_i32, %c0_i32_0 : i32, i32
  }
  func.func @transform_19(%arg0: i32) -> (i32, i32) {
    %c0_i32 = arith.constant 0 : i32
    %c0_i32_0 = arith.constant 0 : i32
    %c0_i32_1 = arith.constant 0 : i32
    return %c0_i32, %c0_i32_0 : i32, i32
  }
  func.func @transform_20(%arg0: i32) -> (i32, i32) {
    %c0_i32 = arith.constant 0 : i32
    %c0_i32_0 = arith.constant 0 : i32
    %c0_i32_1 = arith.constant 0 : i32
    return %c0_i32, %c0_i32_0 : i32, i32
  }
}

</mosaic_0001>

<llo_original>
// kernel: sparse_rim_cell_forward.1
$region0: #{sparse_rim_cell_forward.1}
  #allocation0 [shape = 'u32[]', space=smem, size = 0x4, offset = 0x4, fixed_abs, tag = 'smem constant byte address 0x4 - core index']
  #allocation1 [shape = 'u32[144,128]{1,0:T(1,128)}', space=vmem, size = 0x12000, scoped, tag = 'internal scratch']
  %s0 = inlined_call_operand.vmem [shape: f32[8,16], index: 0, kind: input, shape index: {}]
  %s1 = inlined_call_operand.vmem [shape: f32[8,128], index: 1, kind: input, shape index: {}]
  %s2 = inlined_call_operand.vmem [shape: f32[16,64], index: 2, kind: input, shape index: {}]
  %s3 = inlined_call_operand.hbm [shape: f32[1,64], index: 3, kind: input, shape index: {}]
  %s4 = inlined_call_operand.vmem [shape: f32[16,128], index: 4, kind: input, shape index: {}]
  %s5 = inlined_call_operand.hbm [shape: f32[1,128], index: 5, kind: input, shape index: {}]
  %s6 = inlined_call_operand.vmem [shape: f32[128,64], index: 6, kind: input, shape index: {}]
  %s7 = inlined_call_operand.vmem [shape: f32[64,4], index: 7, kind: input, shape index: {}]
  %s8 = inlined_call_operand.hbm [shape: f32[4,128], index: 8, kind: input, shape index: {}]
  %s9 = inlined_call_operand.hbm [shape: f32[256,512], index: 9, kind: input, shape index: {}]
  %s10 = inlined_call_operand.hbm [shape: f32[1,512], index: 10, kind: input, shape index: {}]
  %s11 = inlined_call_operand.vmem [shape: f32[128,8], index: 11, kind: input, shape index: {}]
  %s12 = inlined_call_operand.vmem [shape: f32[8,128], index: 12, kind: input, shape index: {}]
  %s13 = inlined_call_operand.hbm [shape: f32[128,128], index: 13, kind: input, shape index: {}]
  %s14 = inlined_call_operand.vmem [shape: f32[128,384], index: 14, kind: input, shape index: {}]
  %s15 = inlined_call_operand.hbm [shape: f32[128,128], index: 15, kind: input, shape index: {}]
  %s16 = inlined_call_operand.hbm [shape: f32[128,128], index: 16, kind: input, shape index: {}]
  %s17 = inlined_call_operand.hbm [shape: f32[128,128], index: 17, kind: input, shape index: {}]
  %s18 = inlined_call_operand.hbm [shape: f32[128,128], index: 18, kind: input, shape index: {}]
  %s19 = inlined_call_operand.vmem [shape: f32[8,128], index: 19, kind: output, shape index: {0}]
  %s20 = inlined_call_operand.vmem [shape: f32[8,128], index: 20, kind: output, shape index: {1}]
  %21 = xla_tuple %s19, %s20
  %s22 = sld [smem:[#allocation0]]
  $region134: #{sparse_rim_cell_forward.1} parent=0
    _
  %s24 = ssub.s32 1, %s22
  %s25 = scalar_select 0, %s24, %s22
  $region1: #{sparse_rim_cell_forward.1} parent=0
    #allocation2 [shape = 'u8[512]{0}', space=vmem, size = 0x400, scoped, tag = 'input window, operand 3, single buffered']
    #allocation3 [shape = 's32[1]{0}', space=sflag, size = 0x4, scoped, tag = 'scoped memory for sparse_rim_cell_forward.1']
    #allocation4 [shape = 'u8[512]{0}', space=vmem, size = 0x400, scoped, tag = 'input window, operand 5, single buffered']
    #allocation5 [shape = 's32[1]{0}', space=sflag, size = 0x4, scoped, tag = 'scoped memory for sparse_rim_cell_forward.1']
    #allocation6 [shape = 'u8[2048]{0}', space=vmem, size = 0x800, scoped, tag = 'input window, operand 8, single buffered']
    #allocation7 [shape = 'u8[524288]{0}', space=vmem, size = 0x80000, scoped, tag = 'input window, operand 9, single buffered']
    #allocation8 [shape = 's32[1]{0}', space=sflag, size = 0x4, scoped, tag = 'scoped memory for sparse_rim_cell_forward.1']
    #allocation9 [shape = 'u8[2048]{0}', space=vmem, size = 0x800, scoped, tag = 'input window, operand 10, single buffered']
    #allocation10 [shape = 'u8[65536]{0}', space=vmem, size = 0x10000, scoped, tag = 'input window, operand 13, single buffered']
    #allocation11 [shape = 's32[1]{0}', space=sflag, size = 0x4, scoped, tag = 'scoped memory for sparse_rim_cell_forward.1']
    #allocation12 [shape = 'u8[65536]{0}', space=vmem, size = 0x10000, scoped, tag = 'input window, operand 15, single buffered']
    #allocation13 [shape = 'u8[65536]{0}', space=vmem, size = 0x10000, scoped, tag = 'input window, operand 16, single buffered']
    #allocation14 [shape = 's32[1]{0}', space=sflag, size = 0x4, scoped, tag = 'scoped memory for sparse_rim_cell_forward.1']
    #allocation15 [shape = 'u8[65536]{0}', space=vmem, size = 0x10000, scoped, tag = 'input window, operand 17, single buffered']
    #allocation16 [shape = 'u8[65536]{0}', space=vmem, size = 0x10000, scoped, tag = 'input window, operand 18, single buffered']
    #allocation17 [shape = 's32[1]{0}', space=sflag, size = 0x4, scoped, tag = 'scoped memory for sparse_rim_cell_forward.1']
    %26 = vsyncpa [#allocation3], 0
    %27 = vsyncpa [#allocation5], 0
    %28 = vsyncpa [#allocation8], 0
    %29 = vsyncpa [#allocation11], 0
    %30 = vsyncpa [#allocation14], 0
    %31 = vsyncpa [#allocation17], 0
    // Predicated region
    $region2: #{sparse_rim_cell_forward.1} parent=1 // pred_check
      _
    $region3: #{sparse_rim_cell_forward.1} parent=1 // pred_check_branch
      %33 = sbr.rel (0) target = $region5
    $region4: #{sparse_rim_cell_forward.1} parent=1 // pred_region
      _
    $region5: #{sparse_rim_cell_forward.1} parent=1 // pred_fallthru
      _
    // Predicated region
    $region6: #{sparse_rim_cell_forward.1} parent=1 // pred_check
      _
    $region7: #{sparse_rim_cell_forward.1} parent=1 // pred_check_branch
      %35 = sbr.rel (0) target = $region9
    $region8: #{sparse_rim_cell_forward.1} parent=1 // pred_region
      _
    $region9: #{sparse_rim_cell_forward.1} parent=1 // pred_fallthru
      _
    // Predicated region
    $region10: #{sparse_rim_cell_forward.1} parent=1 // pred_check
      _
    $region11: #{sparse_rim_cell_forward.1} parent=1 // pred_check_branch
      %37 = sbr.rel (0) target = $region13
    $region12: #{sparse_rim_cell_forward.1} parent=1 // pred_region
      _
    $region13: #{sparse_rim_cell_forward.1} parent=1 // pred_fallthru
      _
    // Predicated region
    $region14: #{sparse_rim_cell_forward.1} parent=1 // pred_check
      _
    $region15: #{sparse_rim_cell_forward.1} parent=1 // pred_check_branch
      %39 = sbr.rel (0) target = $region17
    $region16: #{sparse_rim_cell_forward.1} parent=1 // pred_region
      %s41 = ssub.s32 16, 16
      %42 = vsyncadd [#allocation3], %s41
      %s44 = sshll.u32 [#allocation2], 4
      %s45 = int_to_ptr.vmem [resolvable:$true] %s44
      %47 = dma.hbm_to_vmem [thread:$0]  %s3, 16, %s45, [#allocation3]
    $region17: #{sparse_rim_cell_forward.1} parent=1 // pred_fallthru
      _
    // Predicated region
    $region18: #{sparse_rim_cell_forward.1} parent=1 // pred_check
      _
    $region19: #{sparse_rim_cell_forward.1} parent=1 // pred_check_branch
      %49 = sbr.rel (0) target = $region21
    $region20: #{sparse_rim_cell_forward.1} parent=1 // pred_region
      _
    $region21: #{sparse_rim_cell_forward.1} parent=1 // pred_fallthru
      _
    // Predicated region
    $region22: #{sparse_rim_cell_forward.1} parent=1 // pred_check
      _
    $region23: #{sparse_rim_cell_forward.1} parent=1 // pred_check_branch
      %51 = sbr.rel (0) target = $region25
    $region24: #{sparse_rim_cell_forward.1} parent=1 // pred_region
      %s53 = ssub.s32 16, 16
      %54 = vsyncadd [#allocation5], %s53
      %s56 = sshll.u32 [#allocation4], 4
      %s57 = int_to_ptr.vmem [resolvable:$true] %s56
      %59 = dma.hbm_to_vmem [thread:$0]  %s5, 16, %s57, [#allocation5]
    $region25: #{sparse_rim_cell_forward.1} parent=1 // pred_fallthru
      _
    // Predicated region
    $region26: #{sparse_rim_cell_forward.1} parent=1 // pred_check
      _
    $region27: #{sparse_rim_cell_forward.1} parent=1 // pred_check_branch
      %61 = sbr.rel (0) target = $region29
    $region28: #{sparse_rim_cell_forward.1} parent=1 // pred_region
      _
    $region29: #{sparse_rim_cell_forward.1} parent=1 // pred_fallthru
      _
    // Predicated region
    $region30: #{sparse_rim_cell_forward.1} parent=1 // pred_check
      _
    $region31: #{sparse_rim_cell_forward.1} parent=1 // pred_check_branch
      %63 = sbr.rel (0) target = $region33
    $region32: #{sparse_rim_cell_forward.1} parent=1 // pred_region
      _
    $region33: #{sparse_rim_cell_forward.1} parent=1 // pred_fallthru
      _
    // Predicated region
    $region34: #{sparse_rim_cell_forward.1} parent=1 // pred_check
      _
    $region35: #{sparse_rim_cell_forward.1} parent=1 // pred_check_branch
      %65 = sbr.rel (0) target = $region37
    $region36: #{sparse_rim_cell_forward.1} parent=1 // pred_region
      %s67 = ssub.s32 64, 64
      %68 = vsyncadd [#allocation5], %s67
      %s70 = sshll.u32 [#allocation6], 4
      %s71 = int_to_ptr.vmem [resolvable:$true] %s70
      %73 = dma.hbm_to_vmem [thread:$0]  %s8, 64, %s71, [#allocation5]
    $region37: #{sparse_rim_cell_forward.1} parent=1 // pred_fallthru
      _
    // Predicated region
    $region38: #{sparse_rim_cell_forward.1} parent=1 // pred_check
      _
    $region39: #{sparse_rim_cell_forward.1} parent=1 // pred_check_branch
      %75 = sbr.rel (0) target = $region41
    $region40: #{sparse_rim_cell_forward.1} parent=1 // pred_region
      %s77 = ssub.s32 16384, 16384
      %78 = vsyncadd [#allocation8], %s77
      %s79 = sshll.u32 [#allocation7], 4
      %s80 = int_to_ptr.vmem [resolvable:$true] %s79
      %85 = dma.hbm_to_vmem [thread:$0]  %s9, 16384, %s80, [#allocation8], 512, 512, 32
    $region41: #{sparse_rim_cell_forward.1} parent=1 // pred_fallthru
      _
    // Predicated region
    $region42: #{sparse_rim_cell_forward.1} parent=1 // pred_check
      _
    $region43: #{sparse_rim_cell_forward.1} parent=1 // pred_check_branch
      %87 = sbr.rel (0) target = $region45
    $region44: #{sparse_rim_cell_forward.1} parent=1 // pred_region
      %s89 = ssub.s32 64, 64
      %90 = vsyncadd [#allocation8], %s89
      %s92 = sshll.u32 [#allocation9], 4
      %s93 = int_to_ptr.vmem [resolvable:$true] %s92
      %95 = dma.hbm_to_vmem [thread:$0]  %s10, 64, %s93, [#allocation8]
    $region45: #{sparse_rim_cell_forward.1} parent=1 // pred_fallthru
      _
    // Predicated region
    $region46: #{sparse_rim_cell_forward.1} parent=1 // pred_check
      _
    $region47: #{sparse_rim_cell_forward.1} parent=1 // pred_check_branch
      %97 = sbr.rel (0) target = $region49
    $region48: #{sparse_rim_cell_forward.1} parent=1 // pred_region
      _
    $region49: #{sparse_rim_cell_forward.1} parent=1 // pred_fallthru
      _
    // Predicated region
    $region50: #{sparse_rim_cell_forward.1} parent=1 // pred_check
      _
    $region51: #{sparse_rim_cell_forward.1} parent=1 // pred_check_branch
      %99 = sbr.rel (0) target = $region53
    $region52: #{sparse_rim_cell_forward.1} parent=1 // pred_region
      _
    $region53: #{sparse_rim_cell_forward.1} parent=1 // pred_fallthru
      _
    // Predicated region
    $region54: #{sparse_rim_cell_forward.1} parent=1 // pred_check
      _
    $region55: #{sparse_rim_cell_forward.1} parent=1 // pred_check_branch
      %101 = sbr.rel (0) target = $region57
    $region56: #{sparse_rim_cell_forward.1} parent=1 // pred_region
      %s103 = ssub.s32 2048, 2048
      %104 = vsyncadd [#allocation11], %s103
      %s105 = sshll.u32 [#allocation10], 4
      %s106 = int_to_ptr.vmem [resolvable:$true] %s105
      %111 = dma.hbm_to_vmem [thread:$0]  %s13, 2048, %s106, [#allocation11], 128, 128, 8
    $region57: #{sparse_rim_cell_forward.1} parent=1 // pred_fallthru
      _
    // Predicated region
    $region58: #{sparse_rim_cell_forward.1} parent=1 // pred_check
      _
    $region59: #{sparse_rim_cell_forward.1} parent=1 // pred_check_branch
      %113 = sbr.rel (0) target = $region61
    $region60: #{sparse_rim_cell_forward.1} parent=1 // pred_region
      _
    $region61: #{sparse_rim_cell_forward.1} parent=1 // pred_fallthru
      _
    // Predicated region
    $region62: #{sparse_rim_cell_forward.1} parent=1 // pred_check
      _
    $region63: #{sparse_rim_cell_forward.1} parent=1 // pred_check_branch
      %115 = sbr.rel (0) target = $region65
    $region64: #{sparse_rim_cell_forward.1} parent=1 // pred_region
      %s117 = ssub.s32 2048, 2048
      %118 = vsyncadd [#allocation11], %s117
      %s119 = sshll.u32 [#allocation12], 4
      %s120 = int_to_ptr.vmem [resolvable:$true] %s119
      %125 = dma.hbm_to_vmem [thread:$0]  %s15, 2048, %s120, [#allocation11], 128, 128, 8
    $region65: #{sparse_rim_cell_forward.1} parent=1 // pred_fallthru
      _
    // Predicated region
    $region66: #{sparse_rim_cell_forward.1} parent=1 // pred_check
      _
    $region67: #{sparse_rim_cell_forward.1} parent=1 // pred_check_branch
      %127 = sbr.rel (0) target = $region69
    $region68: #{sparse_rim_cell_forward.1} parent=1 // pred_region
      %s129 = ssub.s32 2048, 2048
      %130 = vsyncadd [#allocation14], %s129
      %s131 = sshll.u32 [#allocation13], 4
      %s132 = int_to_ptr.vmem [resolvable:$true] %s131
      %137 = dma.hbm_to_vmem [thread:$0]  %s16, 2048, %s132, [#allocation14], 128, 128, 8
    $region69: #{sparse_rim_cell_forward.1} parent=1 // pred_fallthru
      _
    // Predicated region
    $region70: #{sparse_rim_cell_forward.1} parent=1 // pred_check
      _
    $region71: #{sparse_rim_cell_forward.1} parent=1 // pred_check_branch
      %139 = sbr.rel (0) target = $region73
    $region72: #{sparse_rim_cell_forward.1} parent=1 // pred_region
      %s141 = ssub.s32 2048, 2048
      %142 = vsyncadd [#allocation14], %s141
      %s143 = sshll.u32 [#allocation15], 4
      %s144 = int_to_ptr.vmem [resolvable:$true] %s143
      %149 = dma.hbm_to_vmem [thread:$0]  %s17, 2048, %s144, [#allocation14], 128, 128, 8
    $region73: #{sparse_rim_cell_forward.1} parent=1 // pred_fallthru
      _
    // Predicated region
    $region74: #{sparse_rim_cell_forward.1} parent=1 // pred_check
      _
    $region75: #{sparse_rim_cell_forward.1} parent=1 // pred_check_branch
      %151 = sbr.rel (0) target = $region77
    $region76: #{sparse_rim_cell_forward.1} parent=1 // pred_region
      %s153 = ssub.s32 2048, 2048
      %154 = vsyncadd [#allocation17], %s153
      %s155 = sshll.u32 [#allocation16], 4
      %s156 = int_to_ptr.vmem [resolvable:$true] %s155
      %161 = dma.hbm_to_vmem [thread:$0]  %s18, 2048, %s156, [#allocation17], 128, 128, 8
    $region77: #{sparse_rim_cell_forward.1} parent=1 // pred_fallthru
      _
    // Predicated region
    $region78: #{sparse_rim_cell_forward.1} parent=1 // pred_check
      _
    $region79: #{sparse_rim_cell_forward.1} parent=1 // pred_check_branch
      %163 = sbr.rel (0) target = $region81
    $region80: #{sparse_rim_cell_forward.1} parent=1 // pred_region
      %164 = dma.done [#allocation3], 16
    $region81: #{sparse_rim_cell_forward.1} parent=1 // pred_fallthru
      _
    // Predicated region
    $region82: #{sparse_rim_cell_forward.1} parent=1 // pred_check
      _
    $region83: #{sparse_rim_cell_forward.1} parent=1 // pred_check_branch
      %166 = sbr.rel (0) target = $region85
    $region84: #{sparse_rim_cell_forward.1} parent=1 // pred_region
      %167 = dma.done [#allocation5], 16
    $region85: #{sparse_rim_cell_forward.1} parent=1 // pred_fallthru
      _
    // Predicated region
    $region86: #{sparse_rim_cell_forward.1} parent=1 // pred_check
      _
    $region87: #{sparse_rim_cell_forward.1} parent=1 // pred_check_branch
      %169 = sbr.rel (0) target = $region89
    $region88: #{sparse_rim_cell_forward.1} parent=1 // pred_region
      %170 = dma.done [#allocation5], 64
    $region89: #{sparse_rim_cell_forward.1} parent=1 // pred_fallthru
      _
    // Predicated region
    $region90: #{sparse_rim_cell_forward.1} parent=1 // pred_check
      _
    $region91: #{sparse_rim_cell_forward.1} parent=1 // pred_check_branch
      %172 = sbr.rel (0) target = $region93
    $region92: #{sparse_rim_cell_forward.1} parent=1 // pred_region
      %173 = dma.done [#allocation8], 16384
    $region93: #{sparse_rim_cell_forward.1} parent=1 // pred_fallthru
      _
    // Predicated region
    $region94: #{sparse_rim_cell_forward.1} parent=1 // pred_check
      _
    $region95: #{sparse_rim_cell_forward.1} parent=1 // pred_check_branch
      %175 = sbr.rel (0) target = $region97
    $region96: #{sparse_rim_cell_forward.1} parent=1 // pred_region
      %176 = dma.done [#allocation8], 64
    $region97: #{sparse_rim_cell_forward.1} parent=1 // pred_fallthru
      _
    // Predicated region
    $region98: #{sparse_rim_cell_forward.1} parent=1 // pred_check
      _
    $region99: #{sparse_rim_cell_forward.1} parent=1 // pred_check_branch
      %178 = sbr.rel (0) target = $region101
    $region100: #{sparse_rim_cell_forward.1} parent=1 // pred_region
      %179 = dma.done [#allocation11], 2048
    $region101: #{sparse_rim_cell_forward.1} parent=1 // pred_fallthru
      _
    // Predicated region
    $region102: #{sparse_rim_cell_forward.1} parent=1 // pred_check
      _
    $region103: #{sparse_rim_cell_forward.1} parent=1 // pred_check_branch
      %181 = sbr.rel (0) target = $region105
    $region104: #{sparse_rim_cell_forward.1} parent=1 // pred_region
      %182 = dma.done [#allocation11], 2048
    $region105: #{sparse_rim_cell_forward.1} parent=1 // pred_fallthru
      _
    // Predicated region
    $region106: #{sparse_rim_cell_forward.1} parent=1 // pred_check
      _
    $region107: #{sparse_rim_cell_forward.1} parent=1 // pred_check_branch
      %184 = sbr.rel (0) target = $region109
    $region108: #{sparse_rim_cell_forward.1} parent=1 // pred_region
      %185 = dma.done [#allocation14], 2048
    $region109: #{sparse_rim_cell_forward.1} parent=1 // pred_fallthru
      _
    // Predicated region
    $region110: #{sparse_rim_cell_forward.1} parent=1 // pred_check
      _
    $region111: #{sparse_rim_cell_forward.1} parent=1 // pred_check_branch
      %187 = sbr.rel (0) target = $region113
    $region112: #{sparse_rim_cell_forward.1} parent=1 // pred_region
      %188 = dma.done [#allocation14], 2048
    $region113: #{sparse_rim_cell_forward.1} parent=1 // pred_fallthru
      _
    // Predicated region
    $region114: #{sparse_rim_cell_forward.1} parent=1 // pred_check
      _
    $region115: #{sparse_rim_cell_forward.1} parent=1 // pred_check_branch
      %190 = sbr.rel (0) target = $region117
    $region116: #{sparse_rim_cell_forward.1} parent=1 // pred_region
      %191 = dma.done [#allocation17], 2048
    $region117: #{sparse_rim_cell_forward.1} parent=1 // pred_fallthru
      _
    %v192 = vld [vmem:[%s0] sm:$0xff]
    %v193 = vld [vmem:[%s1] sm:$0xff]
    %v194 = vld [vmem:[%s2] sm:$0xff]
    %v195 = vld [vmem:[%s2 + $0x8] sm:$0xff]
    %v196 = vld [vmem:[#allocation2] sm:$0x1]
    %v198 = vlaneseq
    %v199 = vshrl.u32 %v198, 7
    %v200 = vsub.s32 0, %v199
    %v201 = vrot.slane %v196, %v200
    %vm203 = vcmask 130048
    %v205 = vsel %vm203, %v192, 0
    %207 = vmatprep.subr.mxu0 0.0
    %208 = vmatpush1.msra.mxu0 %v194
    %209 = vmatprep.subr.mxu0 0.0
    %210 = vmatpush1.msra.mxu0 %v195
    %211 = vmatprep.subr.mxu0 0.0
    %212 = vmatpush1.msra.mxu0 0.0
    %213 = vmatprep.subr.mxu0 0.0
    %214 = vmatpush1.msra.mxu0 0.0
    %215 = vmatprep.subr.mxu0 0.0
    %216 = vmatpush1.msra.mxu0 0.0
    %217 = vmatprep.subr.mxu0 0.0
    %218 = vmatpush1.msra.mxu0 0.0
    %219 = vmatprep.subr.mxu0 0.0
    %220 = vmatpush1.msra.mxu0 0.0
    %221 = vmatprep.subr.mxu0 0.0
    %222 = vmatpush1.msra.mxu0 0.0
    %223 = vmatprep.subr.mxu0 0.0
    %224 = vmatpush1.msra.mxu0 0.0
    %225 = vmatprep.subr.mxu0 0.0
    %226 = vmatpush1.msra.mxu0 0.0
    %227 = vmatprep.subr.mxu0 0.0
    %228 = vmatpush1.msra.mxu0 0.0
    %229 = vmatprep.subr.mxu0 0.0
    %230 = vmatpush1.msra.mxu0 0.0
    %231 = vmatprep.subr.mxu0 0.0
    %232 = vmatpush1.msra.mxu0 0.0
    %233 = vmatprep.subr.mxu0 0.0
    %234 = vmatpush1.msra.mxu0 0.0
    %235 = vmatprep.subr.mxu0 0.0
    %236 = vmatpush1.msra.mxu0 0.0
    %237 = vmatprep.subr.mxu0 0.0
    %238 = vmatpush1.msra.mxu0 0.0
    %239 = vmatprep.subr.mxu0 0.0
    %240 = vmatpush1.msra.mxu0 0.0
    %241 = vmatprep.subr.mxu0 0.0
    %242 = vmatpush1.msra.mxu0 0.0
    %243 = vmatprep.subr.mxu0 0.0
    %244 = vmatpush1.msra.mxu0 0.0
    %245 = vmatprep.subr.mxu0 0.0
    %246 = vmatpush1.msra.mxu0 0.0
    %247 = vmatprep.subr.mxu0 0.0
    %248 = vmatpush1.msra.mxu0 0.0
    %249 = vmatprep.subr.mxu0 0.0
    %250 = vmatpush1.msra.mxu0 0.0
    %251 = vmatprep.subr.mxu0 0.0
    %252 = vmatpush1.msra.mxu0 0.0
    %253 = vmatprep.subr.mxu0 0.0
    %254 = vmatpush1.msra.mxu0 0.0
    %255 = vmatprep.subr.mxu0 0.0
    %256 = vmatpush1.msra.mxu0 0.0
    %257 = vmatprep.subr.mxu0 0.0
    %258 = vmatpush1.msra.mxu0 0.0
    %259 = vmatprep.subr.mxu0 0.0
    %260 = vmatpush1.msra.mxu0 0.0
    %261 = vmatprep.subr.mxu0 0.0
    %262 = vmatpush1.msra.mxu0 0.0
    %263 = vmatprep.subr.mxu0 0.0
    %264 = vmatpush1.msra.mxu0 0.0
    %265 = vmatprep.subr.mxu0 0.0
    %266 = vmatpush1.msra.mxu0 0.0
    %267 = vmatprep.subr.mxu0 0.0
    %268 = vmatpush1.msra.mxu0 0.0
    %269 = vmatprep.subr.mxu0 0.0
    %270 = vmatpush1.msra.mxu0 0.0
    %271 = vmatprep.mubr.f32.mxu0 0.0
    %272 = vmatmul.mubr.f32.gmra.mrb[0].mxu0 %v205
    %v273 = vpop.f32.mrb[0].mxu0
    %v274 = vadd.f32 %v201, %v273
    %v275 = vpop.f32.mrb[0].mxu0
    %276 = vdwg.mxu0
    %v277 = vld [vmem:[%s4] sm:$0xff]
    %v278 = vld [vmem:[%s4 + $0x8] sm:$0xff]
    %279 = vmatprep.subr.mxu0 0.0
    %280 = vmatpush1.msra.mxu0 %v277
    %281 = vmatprep.subr.mxu0 0.0
    %282 = vmatpush1.msra.mxu0 %v278
    %283 = vmatprep.subr.mxu0 0.0
    %284 = vmatpush1.msra.mxu0 0.0
    %285 = vmatprep.subr.mxu0 0.0
    %286 = vmatpush1.msra.mxu0 0.0
    %287 = vmatprep.subr.mxu0 0.0
    %288 = vmatpush1.msra.mxu0 0.0
    %289 = vmatprep.subr.mxu0 0.0
    %290 = vmatpush1.msra.mxu0 0.0
    %291 = vmatprep.subr.mxu0 0.0
    %292 = vmatpush1.msra.mxu0 0.0
    %293 = vmatprep.subr.mxu0 0.0
    %294 = vmatpush1.msra.mxu0 0.0
    %295 = vmatprep.subr.mxu0 0.0
    %296 = vmatpush1.msra.mxu0 0.0
    %297 = vmatprep.subr.mxu0 0.0
    %298 = vmatpush1.msra.mxu0 0.0
    %299 = vmatprep.subr.mxu0 0.0
    %300 = vmatpush1.msra.mxu0 0.0
    %301 = vmatprep.subr.mxu0 0.0
    %302 = vmatpush1.msra.mxu0 0.0
    %303 = vmatprep.subr.mxu0 0.0
    %304 = vmatpush1.msra.mxu0 0.0
    %305 = vmatprep.subr.mxu0 0.0
    %306 = vmatpush1.msra.mxu0 0.0
    %307 = vmatprep.subr.mxu0 0.0
    %308 = vmatpush1.msra.mxu0 0.0
    %309 = vmatprep.subr.mxu0 0.0
    %310 = vmatpush1.msra.mxu0 0.0
    %311 = vmatprep.subr.mxu0 0.0
    %312 = vmatpush1.msra.mxu0 0.0
    %313 = vmatprep.subr.mxu0 0.0
    %314 = vmatpush1.msra.mxu0 0.0
    %315 = vmatprep.subr.mxu0 0.0
    %316 = vmatpush1.msra.mxu0 0.0
    %317 = vmatprep.subr.mxu0 0.0
    %318 = vmatpush1.msra.mxu0 0.0
    %319 = vmatprep.subr.mxu0 0.0
    %320 = vmatpush1.msra.mxu0 0.0
    %321 = vmatprep.subr.mxu0 0.0
    %322 = vmatpush1.msra.mxu0 0.0
    %323 = vmatprep.subr.mxu0 0.0
    %324 = vmatpush1.msra.mxu0 0.0
    %325 = vmatprep.subr.mxu0 0.0
    %326 = vmatpush1.msra.mxu0 0.0
    %327 = vmatprep.subr.mxu0 0.0
    %328 = vmatpush1.msra.mxu0 0.0
    %329 = vmatprep.subr.mxu0 0.0
    %330 = vmatpush1.msra.mxu0 0.0
    %331 = vmatprep.subr.mxu0 0.0
    %332 = vmatpush1.msra.mxu0 0.0
    %333 = vmatprep.subr.mxu0 0.0
    %334 = vmatpush1.msra.mxu0 0.0
    %335 = vmatprep.subr.mxu0 0.0
    %336 = vmatpush1.msra.mxu0 0.0
    %337 = vmatprep.subr.mxu0 0.0
    %338 = vmatpush1.msra.mxu0 0.0
    %339 = vmatprep.subr.mxu0 0.0
    %340 = vmatpush1.msra.mxu0 0.0
    %341 = vmatprep.subr.mxu0 0.0
    %342 = vmatpush1.msra.mxu0 0.0
    %343 = vmatprep.mubr.f32.mxu0 0.0
    %344 = vmatmul.mubr.f32.gmra.mrb[0].mxu0 %v205
    %v345 = vpop.f32.mrb[0].mxu0
    %v346 = vadd.f32 0.0, %v345
    %v347 = vpop.f32.mrb[0].mxu0
    %348 = vdwg.mxu0
    %v349 = vld [vmem:[%s6] sm:$0xff]
    %v350 = vld [vmem:[%s6 + $0x8] sm:$0xff]
    %v351 = vld [vmem:[%s6 + $0x10] sm:$0xff]
    %v352 = vld [vmem:[%s6 + $0x18] sm:$0xff]
    %v353 = vld [vmem:[%s6 + $0x20] sm:$0xff]
    %v354 = vld [vmem:[%s6 + $0x28] sm:$0xff]
    %v355 = vld [vmem:[%s6 + $0x30] sm:$0xff]
    %v356 = vld [vmem:[%s6 + $0x38] sm:$0xff]
    %v357 = vld [vmem:[%s6 + $0x40] sm:$0xff]
    %v358 = vld [vmem:[%s6 + $0x48] sm:$0xff]
    %v359 = vld [vmem:[%s6 + $0x50] sm:$0xff]
    %v360 = vld [vmem:[%s6 + $0x58] sm:$0xff]
    %v361 = vld [vmem:[%s6 + $0x60] sm:$0xff]
    %v362 = vld [vmem:[%s6 + $0x68] sm:$0xff]
    %v363 = vld [vmem:[%s6 + $0x70] sm:$0xff]
    %v364 = vld [vmem:[%s6 + $0x78] sm:$0xff]
    %365 = vmatprep.subr.mxu0 0.0
    %366 = vmatpush1.msra.mxu0 %v349
    %367 = vmatprep.subr.mxu0 0.0
    %368 = vmatpush1.msra.mxu0 %v350
    %369 = vmatprep.subr.mxu0 0.0
    %370 = vmatpush1.msra.mxu0 %v351
    %371 = vmatprep.subr.mxu0 0.0
    %372 = vmatpush1.msra.mxu0 %v352
    %373 = vmatprep.subr.mxu0 0.0
    %374 = vmatpush1.msra.mxu0 %v353
    %375 = vmatprep.subr.mxu0 0.0
    %376 = vmatpush1.msra.mxu0 %v354
    %377 = vmatprep.subr.mxu0 0.0
    %378 = vmatpush1.msra.mxu0 %v355
    %379 = vmatprep.subr.mxu0 0.0
    %380 = vmatpush1.msra.mxu0 %v356
    %381 = vmatprep.subr.mxu0 0.0
    %382 = vmatpush1.msra.mxu0 %v357
    %383 = vmatprep.subr.mxu0 0.0
    %384 = vmatpush1.msra.mxu0 %v358
    %385 = vmatprep.subr.mxu0 0.0
    %386 = vmatpush1.msra.mxu0 %v359
    %387 = vmatprep.subr.mxu0 0.0
    %388 = vmatpush1.msra.mxu0 %v360
    %389 = vmatprep.subr.mxu0 0.0
    %390 = vmatpush1.msra.mxu0 %v361
    %391 = vmatprep.subr.mxu0 0.0
    %392 = vmatpush1.msra.mxu0 %v362
    %393 = vmatprep.subr.mxu0 0.0
    %394 = vmatpush1.msra.mxu0 %v363
    %395 = vmatprep.subr.mxu0 0.0
    %396 = vmatpush1.msra.mxu0 %v364
    %397 = vmatprep.subr.mxu0 0.0
    %398 = vmatpush1.msra.mxu0 0.0
    %399 = vmatprep.subr.mxu0 0.0
    %400 = vmatpush1.msra.mxu0 0.0
    %401 = vmatprep.subr.mxu0 0.0
    %402 = vmatpush1.msra.mxu0 0.0
    %403 = vmatprep.subr.mxu0 0.0
    %404 = vmatpush1.msra.mxu0 0.0
    %405 = vmatprep.subr.mxu0 0.0
    %406 = vmatpush1.msra.mxu0 0.0
    %407 = vmatprep.subr.mxu0 0.0
    %408 = vmatpush1.msra.mxu0 0.0
    %409 = vmatprep.subr.mxu0 0.0
    %410 = vmatpush1.msra.mxu0 0.0
    %411 = vmatprep.subr.mxu0 0.0
    %412 = vmatpush1.msra.mxu0 0.0
    %413 = vmatprep.subr.mxu0 0.0
    %414 = vmatpush1.msra.mxu0 0.0
    %415 = vmatprep.subr.mxu0 0.0
    %416 = vmatpush1.msra.mxu0 0.0
    %417 = vmatprep.subr.mxu0 0.0
    %418 = vmatpush1.msra.mxu0 0.0
    %419 = vmatprep.subr.mxu0 0.0
    %420 = vmatpush1.msra.mxu0 0.0
    %421 = vmatprep.subr.mxu0 0.0
    %422 = vmatpush1.msra.mxu0 0.0
    %423 = vmatprep.subr.mxu0 0.0
    %424 = vmatpush1.msra.mxu0 0.0
    %425 = vmatprep.subr.mxu0 0.0
    %426 = vmatpush1.msra.mxu0 0.0
    %427 = vmatprep.subr.mxu0 0.0
    %428 = vmatpush1.msra.mxu0 0.0
    %429 = vmatprep.mubr.f32.mxu0 0.0
    %430 = vmatmul.mubr.f32.gmra.mrb[0].mxu0 %v193
    %v431 = vpop.f32.mrb[0].mxu0
    %v432 = vadd.f32 0.0, %v431
    %v433 = vpop.f32.mrb[0].mxu0
    %434 = vdwg.mxu0
    %v435 = vmul.f32 %v432, %v274
    %v436 = vmul.f32 %v432, %v201
    %v437 = vld [vmem:[%s7] sm:$0xff]
    %v438 = vld [vmem:[%s7 + $0x8] sm:$0xff]
    %v439 = vld [vmem:[%s7 + $0x10] sm:$0xff]
    %v440 = vld [vmem:[%s7 + $0x18] sm:$0xff]
    %v441 = vld [vmem:[%s7 + $0x20] sm:$0xff]
    %v442 = vld [vmem:[%s7 + $0x28] sm:$0xff]
    %v443 = vld [vmem:[%s7 + $0x30] sm:$0xff]
    %v444 = vld [vmem:[%s7 + $0x38] sm:$0xff]
    %vm445 = vcmask 523264
    %v447 = vsel %vm445, %v435, 0
    %v450 = vsel %vm445, %v436, 0
    %452 = vmatprep.subr.mxu0 0.0
    %453 = vmatpush1.msra.mxu0 %v437
    %454 = vmatprep.subr.mxu0 0.0
    %455 = vmatpush1.msra.mxu0 %v438
    %456 = vmatprep.subr.mxu0 0.0
    %457 = vmatpush1.msra.mxu0 %v439
    %458 = vmatprep.subr.mxu0 0.0
    %459 = vmatpush1.msra.mxu0 %v440
    %460 = vmatprep.subr.mxu0 0.0
    %461 = vmatpush1.msra.mxu0 %v441
    %462 = vmatprep.subr.mxu0 0.0
    %463 = vmatpush1.msra.mxu0 %v442
    %464 = vmatprep.subr.mxu0 0.0
    %465 = vmatpush1.msra.mxu0 %v443
    %466 = vmatprep.subr.mxu0 0.0
    %467 = vmatpush1.msra.mxu0 %v444
    %468 = vmatprep.subr.mxu0 0.0
    %469 = vmatpush1.msra.mxu0 0.0
    %470 = vmatprep.subr.mxu0 0.0
    %471 = vmatpush1.msra.mxu0 0.0
    %472 = vmatprep.subr.mxu0 0.0
    %473 = vmatpush1.msra.mxu0 0.0
    %474 = vmatprep.subr.mxu0 0.0
    %475 = vmatpush1.msra.mxu0 0.0
    %476 = vmatprep.subr.mxu0 0.0
    %477 = vmatpush1.msra.mxu0 0.0
    %478 = vmatprep.subr.mxu0 0.0
    %479 = vmatpush1.msra.mxu0 0.0
    %480 = vmatprep.subr.mxu0 0.0
    %481 = vmatpush1.msra.mxu0 0.0
    %482 = vmatprep.subr.mxu0 0.0
    %483 = vmatpush1.msra.mxu0 0.0
    %484 = vmatprep.subr.mxu0 0.0
    %485 = vmatpush1.msra.mxu0 0.0
    %486 = vmatprep.subr.mxu0 0.0
    %487 = vmatpush1.msra.mxu0 0.0
    %488 = vmatprep.subr.mxu0 0.0
    %489 = vmatpush1.msra.mxu0 0.0
    %490 = vmatprep.subr.mxu0 0.0
    %491 = vmatpush1.msra.mxu0 0.0
    %492 = vmatprep.subr.mxu0 0.0
    %493 = vmatpush1.msra.mxu0 0.0
    %494 = vmatprep.subr.mxu0 0.0
    %495 = vmatpush1.msra.mxu0 0.0
    %496 = vmatprep.subr.mxu0 0.0
    %497 = vmatpush1.msra.mxu0 0.0
    %498 = vmatprep.subr.mxu0 0.0
    %499 = vmatpush1.msra.mxu0 0.0
    %500 = vmatprep.subr.mxu0 0.0
    %501 = vmatpush1.msra.mxu0 0.0
    %502 = vmatprep.subr.mxu0 0.0
    %503 = vmatpush1.msra.mxu0 0.0
    %504 = vmatprep.subr.mxu0 0.0
    %505 = vmatpush1.msra.mxu0 0.0
    %506 = vmatprep.subr.mxu0 0.0
    %507 = vmatpush1.msra.mxu0 0.0
    %508 = vmatprep.subr.mxu0 0.0
    %509 = vmatpush1.msra.mxu0 0.0
    %510 = vmatprep.subr.mxu0 0.0
    %511 = vmatpush1.msra.mxu0 0.0
    %512 = vmatprep.subr.mxu0 0.0
    %513 = vmatpush1.msra.mxu0 0.0
    %514 = vmatprep.subr.mxu0 0.0
    %515 = vmatpush1.msra.mxu0 0.0
    %516 = vmatprep.mubr.f32.mxu0 0.0
    %517 = vmatmul.mubr.f32.gmra.mrb[0].mxu0 %v447
    %v518 = vpop.f32.mrb[0].mxu0
    %v519 = vadd.f32 0.0, %v518
    %v520 = vpop.f32.mrb[0].mxu0
    %521 = vmatprep.mubr.f32.mxu0 0.0
    %522 = vmatmul.mubr.f32.gmra.mrb[0].mxu0 %v450
    %v523 = vpop.f32.mrb[0].mxu0
    %v524 = vadd.f32 0.0, %v523
    %v525 = vpop.f32.mrb[0].mxu0
    %526 = vdwg.mxu0
    %v527 = vlaneseq
    %v528 = vshrl.u32 %v527, 7
    %v529 = vsub.s32 0, %v528
    %v530 = vrot.slane %v519, %v529
    %532 = vbcast.lane.b32.xlu0 %v530, 256
    %v533 = vpop.permute.xlu0 %532
    %v534 = vlaneseq
    %v535 = vshrl.u32 %v534, 7
    %v536 = vsub.s32 1, %v535
    %v537 = vrot.slane %v519, %v536
    %539 = vbcast.lane.b32.xlu0 %v537, 256
    %v540 = vpop.permute.xlu0 %539
    %v541 = vlaneseq
    %v542 = vshrl.u32 %v541, 7
    %v543 = vsub.s32 2, %v542
    %v544 = vrot.slane %v519, %v543
    %546 = vbcast.lane.b32.xlu0 %v544, 256
    %v547 = vpop.permute.xlu0 %546
    %v548 = vlaneseq
    %v549 = vshrl.u32 %v548, 7
    %v550 = vsub.s32 3, %v549
    %v551 = vrot.slane %v519, %v550
    %553 = vbcast.lane.b32.xlu0 %v551, 256
    %v554 = vpop.permute.xlu0 %553
    %v555 = vlaneseq
    %v556 = vshrl.u32 %v555, 7
    %v557 = vsub.s32 4, %v556
    %v558 = vrot.slane %v519, %v557
    %560 = vbcast.lane.b32.xlu0 %v558, 256
    %v561 = vpop.permute.xlu0 %560
    %v562 = vlaneseq
    %v563 = vshrl.u32 %v562, 7
    %v564 = vsub.s32 5, %v563
    %v565 = vrot.slane %v519, %v564
    %567 = vbcast.lane.b32.xlu0 %v565, 256
    %v568 = vpop.permute.xlu0 %567
    %v569 = vlaneseq
    %v570 = vshrl.u32 %v569, 7
    %v571 = vsub.s32 6, %v570
    %v572 = vrot.slane %v519, %v571
    %574 = vbcast.lane.b32.xlu0 %v572, 256
    %v575 = vpop.permute.xlu0 %574
    %v576 = vlaneseq
    %v577 = vshrl.u32 %v576, 7
    %v578 = vsub.s32 7, %v577
    %v579 = vrot.slane %v519, %v578
    %581 = vbcast.lane.b32.xlu0 %v579, 256
    %v582 = vpop.permute.xlu0 %581
    %v584 = vcombine.high %v519, %v519
    %v586 = vunpack.c.l.s4 1966171168
    %v587 = vunpack.c.0.s8 %v586
    %v588 = vlaneseq
    %v589 = vshrl.u32 %v588, 7
    %v590 = vsub.s32 %v587, %v589
    %v591 = vrot.slane %v519, %v590
    %v593 = vunpack.c.l.s4 1966171168
    %v594 = vunpack.c.0.s8 %v593
    %v595 = vlaneseq
    %v596 = vshrl.u32 %v595, 7
    %v597 = vsub.s32 %v594, %v596
    %v598 = vrot.slane %v584, %v597
    %v599 = vcombine.high %v591, %v591
    %v600 = vcombine.high %v598, %v598
    %v602 = vunpack.c.l.s4 1966171168
    %v603 = vunpack.c.0.s8 %v602
    %v604 = vlaneseq
    %v605 = vshrl.u32 %v604, 7
    %v606 = vsub.s32 %v603, %v605
    %v607 = vrot.slane %v591, %v606
    %v609 = vunpack.c.l.s4 1966171168
    %v610 = vunpack.c.0.s8 %v609
    %v611 = vlaneseq
    %v612 = vshrl.u32 %v611, 7
    %v613 = vsub.s32 %v610, %v612
    %v614 = vrot.slane %v598, %v613
    %v616 = vunpack.c.l.s4 1966171168
    %v617 = vunpack.c.0.s8 %v616
    %v618 = vlaneseq
    %v619 = vshrl.u32 %v618, 7
    %v620 = vsub.s32 %v617, %v619
    %v621 = vrot.slane %v599, %v620
    %v623 = vunpack.c.l.s4 1966171168
    %v624 = vunpack.c.0.s8 %v623
    %v625 = vlaneseq
    %v626 = vshrl.u32 %v625, 7
    %v627 = vsub.s32 %v624, %v626
    %v628 = vrot.slane %v600, %v627
    %v629 = vcombine.high %v607, %v607
    %v630 = vcombine.high %v614, %v614
    %v631 = vcombine.high %v621, %v621
    %v632 = vcombine.high %v628, %v628
    %v633 = vlaneseq
    %v634 = vshrl.u32 %v633, 7
    %v635 = vlaneseq
    %v636 = vand.u32 %v635, 127
    %v637 = vlaneseq
    %v638 = vshrl.u32 %v637, 7
    %v639 = vsub.s32 0, %v638
    %v640 = vrot.slane %v607, %v639
    %v641 = vlaneseq
    %v642 = vshrl.u32 %v641, 7
    %v643 = vsub.s32 0, %v642
    %v644 = vrot.slane %v621, %v643
    %v645 = vlaneseq
    %v646 = vshrl.u32 %v645, 7
    %v647 = vsub.s32 0, %v646
    %v648 = vrot.slane %v629, %v647
    %v649 = vlaneseq
    %v650 = vshrl.u32 %v649, 7
    %v651 = vsub.s32 0, %v650
    %v652 = vrot.slane %v631, %v651
    %v653 = vlaneseq
    %v654 = vshrl.u32 %v653, 7
    %v655 = vsub.s32 0, %v654
    %v656 = vrot.slane %v614, %v655
    %v657 = vlaneseq
    %v658 = vshrl.u32 %v657, 7
    %v659 = vsub.s32 0, %v658
    %v660 = vrot.slane %v628, %v659
    %v661 = vlaneseq
    %v662 = vshrl.u32 %v661, 7
    %v663 = vsub.s32 0, %v662
    %v664 = vrot.slane %v630, %v663
    %v665 = vlaneseq
    %v666 = vshrl.u32 %v665, 7
    %v667 = vsub.s32 0, %v666
    %v668 = vrot.slane %v632, %v667
    %vm677 = vcmp.gt.f32.partialorder %v640, %v533
    %vm678 = vcmp.gt.f32.partialorder %v644, %v540
    %vm679 = vcmp.gt.f32.partialorder %v648, %v547
    %vm680 = vcmp.gt.f32.partialorder %v652, %v554
    %vm681 = vcmp.gt.f32.partialorder %v656, %v561
    %vm682 = vcmp.gt.f32.partialorder %v660, %v568
    %vm683 = vcmp.gt.f32.partialorder %v664, %v575
    %vm684 = vcmp.gt.f32.partialorder %v668, %v582
    %vm685 = vcmp.eq.f32.partialorder %v640, %v533
    %vm686 = vcmp.eq.f32.partialorder %v644, %v540
    %vm687 = vcmp.eq.f32.partialorder %v648, %v547
    %vm688 = vcmp.eq.f32.partialorder %v652, %v554
    %vm689 = vcmp.eq.f32.partialorder %v656, %v561
    %vm690 = vcmp.eq.f32.partialorder %v660, %v568
    %vm691 = vcmp.eq.f32.partialorder %v664, %v575
    %vm692 = vcmp.eq.f32.partialorder %v668, %v582
    %vm693 = vcmp.lt.s32.totalorder %v636, %v634
    %vm694 = vmand %vm685, %vm693
    %vm695 = vmand %vm686, %vm693
    %vm696 = vmand %vm687, %vm693
    %vm697 = vmand %vm688, %vm693
    %vm698 = vmand %vm689, %vm693
    %vm699 = vmand %vm690, %vm693
    %vm700 = vmand %vm691, %vm693
    %vm701 = vmand %vm692, %vm693
    %vm702 = vmor %vm677, %vm694
    %vm703 = vmor %vm678, %vm695
    %vm704 = vmor %vm679, %vm696
    %vm705 = vmor %vm680, %vm697
    %vm706 = vmor %vm681, %vm698
    %vm707 = vmor %vm682, %vm699
    %vm708 = vmor %vm683, %vm700
    %vm709 = vmor %vm684, %vm701
    %v710 = vsel %vm702, 1, 0
    %v711 = vsel %vm703, 1, 0
    %v712 = vsel %vm704, 1, 0
    %v713 = vsel %vm705, 1, 0
    %v714 = vsel %vm706, 1, 0
    %v715 = vsel %vm707, 1, 0
    %v716 = vsel %vm708, 1, 0
    %v717 = vsel %vm709, 1, 0
    %v718 = vcvt.s32.f32 %v710
    %v719 = vcvt.s32.f32 %v711
    %v720 = vcvt.s32.f32 %v712
    %v721 = vcvt.s32.f32 %v713
    %v722 = vcvt.s32.f32 %v714
    %v723 = vcvt.s32.f32 %v715
    %v724 = vcvt.s32.f32 %v716
    %v725 = vcvt.s32.f32 %v717
    %vm726 = vcmask 27648
    %v727 = vsel %vm726, %v718, 0.0
    %728 = vadd.xlane.f32.xlu0 %v727
    %v729 = vpop.xlane.xlu0 %728
    %v730 = vsel %vm726, %v719, 0.0
    %731 = vadd.xlane.f32.xlu0 %v730
    %v732 = vpop.xlane.xlu0 %731
    %v733 = vsel %vm726, %v720, 0.0
    %734 = vadd.xlane.f32.xlu0 %v733
    %v735 = vpop.xlane.xlu0 %734
    %v736 = vsel %vm726, %v721, 0.0
    %737 = vadd.xlane.f32.xlu0 %v736
    %v738 = vpop.xlane.xlu0 %737
    %v739 = vsel %vm726, %v722, 0.0
    %740 = vadd.xlane.f32.xlu0 %v739
    %v741 = vpop.xlane.xlu0 %740
    %v742 = vsel %vm726, %v723, 0.0
    %743 = vadd.xlane.f32.xlu0 %v742
    %v744 = vpop.xlane.xlu0 %743
    %v745 = vsel %vm726, %v724, 0.0
    %746 = vadd.xlane.f32.xlu0 %v745
    %v747 = vpop.xlane.xlu0 %746
    %v748 = vsel %vm726, %v725, 0.0
    %749 = vadd.xlane.f32.xlu0 %v748
    %v750 = vpop.xlane.xlu0 %749
    %vm751 = vcmp.lt.f32.partialorder %v729, 2.0
    %vm752 = vcmp.lt.f32.partialorder %v732, 2.0
    %vm753 = vcmp.lt.f32.partialorder %v735, 2.0
    %vm754 = vcmp.lt.f32.partialorder %v738, 2.0
    %vm755 = vcmp.lt.f32.partialorder %v741, 2.0
    %vm756 = vcmp.lt.f32.partialorder %v744, 2.0
    %vm757 = vcmp.lt.f32.partialorder %v747, 2.0
    %vm758 = vcmp.lt.f32.partialorder %v750, 2.0
    %v759 = vsel %vm751, 1, 0
    %v760 = vsel %vm752, 1, 0
    %v761 = vsel %vm753, 1, 0
    %v762 = vsel %vm754, 1, 0
    %v763 = vsel %vm755, 1, 0
    %v764 = vsel %vm756, 1, 0
    %v765 = vsel %vm757, 1, 0
    %v766 = vsel %vm758, 1, 0
    %v767 = vcvt.s32.f32 %v759
    %v768 = vcvt.s32.f32 %v760
    %v769 = vcvt.s32.f32 %v761
    %v770 = vcvt.s32.f32 %v762
    %v771 = vcvt.s32.f32 %v763
    %v772 = vcvt.s32.f32 %v764
    %v773 = vcvt.s32.f32 %v765
    %v774 = vcvt.s32.f32 %v766
    %v775 = vsub.f32 %v519, %v524
    %v776 = vxor.u32 %v775, 2147483648
    %v777 = vmul.f32 %v776, 1.442695
    %v778 = vpow.pop %v777
    %v779 = vadd.f32 %v778, 1.0
    %v780 = vrcp.pop %v779
    %v781 = vmul.f32 1.0, %v780
    %v790 = vlaneseq
    %v791 = vshrl.u32 %v790, 7
    %v792 = vsub.s32 %v636, %v791
    %v793 = vrot.slane %v767, %v792
    %v794 = vlaneseq
    %v795 = vshrl.u32 %v794, 7
    %v796 = vsub.s32 %v636, %v795
    %v797 = vrot.slane %v768, %v796
    %v798 = vlaneseq
    %v799 = vshrl.u32 %v798, 7
    %v800 = vsub.s32 %v636, %v799
    %v801 = vrot.slane %v769, %v800
    %v802 = vlaneseq
    %v803 = vshrl.u32 %v802, 7
    %v804 = vsub.s32 %v636, %v803
    %v805 = vrot.slane %v770, %v804
    %v806 = vlaneseq
    %v807 = vshrl.u32 %v806, 7
    %v808 = vsub.s32 %v636, %v807
    %v809 = vrot.slane %v771, %v808
    %v810 = vlaneseq
    %v811 = vshrl.u32 %v810, 7
    %v812 = vsub.s32 %v636, %v811
    %v813 = vrot.slane %v772, %v812
    %v814 = vlaneseq
    %v815 = vshrl.u32 %v814, 7
    %v816 = vsub.s32 %v636, %v815
    %v817 = vrot.slane %v773, %v816
    %v818 = vlaneseq
    %v819 = vshrl.u32 %v818, 7
    %v820 = vsub.s32 %v636, %v819
    %v821 = vrot.slane %v774, %v820
    %vm822 = vcmask 1041409
    %v823 = vsel %vm822, %v797, %v793
    %vm824 = vcmask 1042434
    %v825 = vsel %vm824, %v801, %v823
    %vm826 = vcmask 1043459
    %v827 = vsel %vm826, %v805, %v825
    %vm828 = vcmask 1044484
    %v829 = vsel %vm828, %v809, %v827
    %vm830 = vcmask 1045509
    %v831 = vsel %vm830, %v813, %v829
    %vm832 = vcmask 1046534
    %v833 = vsel %vm832, %v817, %v831
    %vm834 = vcmask 1047559
    %v835 = vsel %vm834, %v821, %v833
    %v836 = vld [vmem:[#allocation6] sm:$0xf]
    %vm837 = vcmask 31744
    %v838 = vsel %vm837, %v835, 0
    %v841 = vsel %vm837, %v781, 0
    %vm843 = vcmask 1043456
    %v845 = vsel %vm843, %v836, 0
    %847 = vmatprep.subr.mxu0 0.0
    %848 = vmatpush1.msra.mxu0 %v845
    %849 = vmatprep.subr.mxu0 0.0
    %850 = vmatpush1.msra.mxu0 0.0
    %851 = vmatprep.subr.mxu0 0.0
    %852 = vmatpush1.msra.mxu0 0.0
    %853 = vmatprep.subr.mxu0 0.0
    %854 = vmatpush1.msra.mxu0 0.0
    %855 = vmatprep.subr.mxu0 0.0
    %856 = vmatpush1.msra.mxu0 0.0
    %857 = vmatprep.subr.mxu0 0.0
    %858 = vmatpush1.msra.mxu0 0.0
    %859 = vmatprep.subr.mxu0 0.0
    %860 = vmatpush1.msra.mxu0 0.0
    %861 = vmatprep.subr.mxu0 0.0
    %862 = vmatpush1.msra.mxu0 0.0
    %863 = vmatprep.subr.mxu0 0.0
    %864 = vmatpush1.msra.mxu0 0.0
    %865 = vmatprep.subr.mxu0 0.0
    %866 = vmatpush1.msra.mxu0 0.0
    %867 = vmatprep.subr.mxu0 0.0
    %868 = vmatpush1.msra.mxu0 0.0
    %869 = vmatprep.subr.mxu0 0.0
    %870 = vmatpush1.msra.mxu0 0.0
    %871 = vmatprep.subr.mxu0 0.0
    %872 = vmatpush1.msra.mxu0 0.0
    %873 = vmatprep.subr.mxu0 0.0
    %874 = vmatpush1.msra.mxu0 0.0
    %875 = vmatprep.subr.mxu0 0.0
    %876 = vmatpush1.msra.mxu0 0.0
    %877 = vmatprep.subr.mxu0 0.0
    %878 = vmatpush1.msra.mxu0 0.0
    %879 = vmatprep.subr.mxu0 0.0
    %880 = vmatpush1.msra.mxu0 0.0
    %881 = vmatprep.subr.mxu0 0.0
    %882 = vmatpush1.msra.mxu0 0.0
    %883 = vmatprep.subr.mxu0 0.0
    %884 = vmatpush1.msra.mxu0 0.0
    %885 = vmatprep.subr.mxu0 0.0
    %886 = vmatpush1.msra.mxu0 0.0
    %887 = vmatprep.subr.mxu0 0.0
    %888 = vmatpush1.msra.mxu0 0.0
    %889 = vmatprep.subr.mxu0 0.0
    %890 = vmatpush1.msra.mxu0 0.0
    %891 = vmatprep.subr.mxu0 0.0
    %892 = vmatpush1.msra.mxu0 0.0
    %893 = vmatprep.subr.mxu0 0.0
    %894 = vmatpush1.msra.mxu0 0.0
    %895 = vmatprep.subr.mxu0 0.0
    %896 = vmatpush1.msra.mxu0 0.0
    %897 = vmatprep.subr.mxu0 0.0
    %898 = vmatpush1.msra.mxu0 0.0
    %899 = vmatprep.subr.mxu0 0.0
    %900 = vmatpush1.msra.mxu0 0.0
    %901 = vmatprep.subr.mxu0 0.0
    %902 = vmatpush1.msra.mxu0 0.0
    %903 = vmatprep.subr.mxu0 0.0
    %904 = vmatpush1.msra.mxu0 0.0
    %905 = vmatprep.subr.mxu0 0.0
    %906 = vmatpush1.msra.mxu0 0.0
    %907 = vmatprep.subr.mxu0 0.0
    %908 = vmatpush1.msra.mxu0 0.0
    %909 = vmatprep.subr.mxu0 0.0
    %910 = vmatpush1.msra.mxu0 0.0
    %911 = vmatprep.mubr.f32.mxu0 0.0
    %912 = vmatmul.mubr.f32.gmra.mrb[0].mxu0 %v838
    %v913 = vpop.f32.mrb[0].mxu0
    %v914 = vadd.f32 0.0, %v913
    %v915 = vpop.f32.mrb[0].mxu0
    %916 = vmatprep.mubr.f32.mxu0 0.0
    %917 = vmatmul.mubr.f32.gmra.mrb[0].mxu0 %v841
    %v918 = vpop.f32.mrb[0].mxu0
    %v919 = vadd.f32 0.0, %v918
    %v920 = vpop.f32.mrb[0].mxu0
    %921 = vdwg.mxu0
    %v922 = vmul.f32 %v919, %v346
    %v923 = vld [vmem:[#allocation4] sm:$0x1]
    %v925 = vlaneseq
    %v926 = vshrl.u32 %v925, 7
    %v927 = vsub.s32 0, %v926
    %v928 = vrot.slane %v923, %v927
    %v930 = vadd.f32 %v922, %v928
    %v931 = vmul.f32 %v930, %v914
    %v932 = vld [vmem:[#allocation7] sm:$0xff]
    %v933 = vld [vmem:[#allocation7 + $0x8] sm:$0xff]
    %v934 = vld [vmem:[#allocation7 + $0x10] sm:$0xff]
    %v935 = vld [vmem:[#allocation7 + $0x18] sm:$0xff]
    %v936 = vld [vmem:[#allocation7 + $0x20] sm:$0xff]
    %v937 = vld [vmem:[#allocation7 + $0x28] sm:$0xff]
    %v938 = vld [vmem:[#allocation7 + $0x30] sm:$0xff]
    %v939 = vld [vmem:[#allocation7 + $0x38] sm:$0xff]
    %v940 = vld [vmem:[#allocation7 + $0x40] sm:$0xff]
    %v941 = vld [vmem:[#allocation7 + $0x48] sm:$0xff]
    %v942 = vld [vmem:[#allocation7 + $0x50] sm:$0xff]
    %v943 = vld [vmem:[#allocation7 + $0x58] sm:$0xff]
    %v944 = vld [vmem:[#allocation7 + $0x60] sm:$0xff]
    %v945 = vld [vmem:[#allocation7 + $0x68] sm:$0xff]
    %v946 = vld [vmem:[#allocation7 + $0x70] sm:$0xff]
    %v947 = vld [vmem:[#allocation7 + $0x78] sm:$0xff]
    %v948 = vld [vmem:[#allocation7 + $0x80] sm:$0xff]
    %v949 = vld [vmem:[#allocation7 + $0x88] sm:$0xff]
    %v950 = vld [vmem:[#allocation7 + $0x90] sm:$0xff]
    %v951 = vld [vmem:[#allocation7 + $0x98] sm:$0xff]
    %v952 = vld [vmem:[#allocation7 + $0xa0] sm:$0xff]
    %v953 = vld [vmem:[#allocation7 + $0xa8] sm:$0xff]
    %v954 = vld [vmem:[#allocation7 + $0xb0] sm:$0xff]
    %v955 = vld [vmem:[#allocation7 + $0xb8] sm:$0xff]
    %v956 = vld [vmem:[#allocation7 + $0xc0] sm:$0xff]
    %v957 = vld [vmem:[#allocation7 + $0xc8] sm:$0xff]
    %v958 = vld [vmem:[#allocation7 + $0xd0] sm:$0xff]
    %v959 = vld [vmem:[#allocation7 + $0xd8] sm:$0xff]
    %v960 = vld [vmem:[#allocation7 + $0xe0] sm:$0xff]
    %v961 = vld [vmem:[#allocation7 + $0xe8] sm:$0xff]
    %v962 = vld [vmem:[#allocation7 + $0xf0] sm:$0xff]
    %v963 = vld [vmem:[#allocation7 + $0xf8] sm:$0xff]
    %v964 = vld [vmem:[#allocation7 + $0x100] sm:$0xff]
    %v965 = vld [vmem:[#allocation7 + $0x108] sm:$0xff]
    %v966 = vld [vmem:[#allocation7 + $0x110] sm:$0xff]
    %v967 = vld [vmem:[#allocation7 + $0x118] sm:$0xff]
    %v968 = vld [vmem:[#allocation7 + $0x120] sm:$0xff]
    %v969 = vld [vmem:[#allocation7 + $0x128] sm:$0xff]
    %v970 = vld [vmem:[#allocation7 + $0x130] sm:$0xff]
    %v971 = vld [vmem:[#allocation7 + $0x138] sm:$0xff]
    %v972 = vld [vmem:[#allocation7 + $0x140] sm:$0xff]
    %v973 = vld [vmem:[#allocation7 + $0x148] sm:$0xff]
    %v974 = vld [vmem:[#allocation7 + $0x150] sm:$0xff]
    %v975 = vld [vmem:[#allocation7 + $0x158] sm:$0xff]
    %v976 = vld [vmem:[#allocation7 + $0x160] sm:$0xff]
    %v977 = vld [vmem:[#allocation7 + $0x168] sm:$0xff]
    %v978 = vld [vmem:[#allocation7 + $0x170] sm:$0xff]
    %v979 = vld [vmem:[#allocation7 + $0x178] sm:$0xff]
    %v980 = vld [vmem:[#allocation7 + $0x180] sm:$0xff]
    %v981 = vld [vmem:[#allocation7 + $0x188] sm:$0xff]
    %v982 = vld [vmem:[#allocation7 + $0x190] sm:$0xff]
    %v983 = vld [vmem:[#allocation7 + $0x198] sm:$0xff]
    %v984 = vld [vmem:[#allocation7 + $0x1a0] sm:$0xff]
    %v985 = vld [vmem:[#allocation7 + $0x1a8] sm:$0xff]
    %v986 = vld [vmem:[#allocation7 + $0x1b0] sm:$0xff]
    %v987 = vld [vmem:[#allocation7 + $0x1b8] sm:$0xff]
    %v988 = vld [vmem:[#allocation7 + $0x1c0] sm:$0xff]
    %v989 = vld [vmem:[#allocation7 + $0x1c8] sm:$0xff]
    %v990 = vld [vmem:[#allocation7 + $0x1d0] sm:$0xff]
    %v991 = vld [vmem:[#allocation7 + $0x1d8] sm:$0xff]
    %v992 = vld [vmem:[#allocation7 + $0x1e0] sm:$0xff]
    %v993 = vld [vmem:[#allocation7 + $0x1e8] sm:$0xff]
    %v994 = vld [vmem:[#allocation7 + $0x1f0] sm:$0xff]
    %v995 = vld [vmem:[#allocation7 + $0x1f8] sm:$0xff]
    %v996 = vld [vmem:[#allocation7 + $0x200] sm:$0xff]
    %v997 = vld [vmem:[#allocation7 + $0x208] sm:$0xff]
    %v998 = vld [vmem:[#allocation7 + $0x210] sm:$0xff]
    %v999 = vld [vmem:[#allocation7 + $0x218] sm:$0xff]
    %v1000 = vld [vmem:[#allocation7 + $0x220] sm:$0xff]
    %v1001 = vld [vmem:[#allocation7 + $0x228] sm:$0xff]
    %v1002 = vld [vmem:[#allocation7 + $0x230] sm:$0xff]
    %v1003 = vld [vmem:[#allocation7 + $0x238] sm:$0xff]
    %v1004 = vld [vmem:[#allocation7 + $0x240] sm:$0xff]
    %v1005 = vld [vmem:[#allocation7 + $0x248] sm:$0xff]
    %v1006 = vld [vmem:[#allocation7 + $0x250] sm:$0xff]
    %v1007 = vld [vmem:[#allocation7 + $0x258] sm:$0xff]
    %v1008 = vld [vmem:[#allocation7 + $0x260] sm:$0xff]
    %v1009 = vld [vmem:[#allocation7 + $0x268] sm:$0xff]
    %v1010 = vld [vmem:[#allocation7 + $0x270] sm:$0xff]
    %v1011 = vld [vmem:[#allocation7 + $0x278] sm:$0xff]
    %v1012 = vld [vmem:[#allocation7 + $0x280] sm:$0xff]
    %v1013 = vld [vmem:[#allocation7 + $0x288] sm:$0xff]
    %v1014 = vld [vmem:[#allocation7 + $0x290] sm:$0xff]
    %v1015 = vld [vmem:[#allocation7 + $0x298] sm:$0xff]
    %v1016 = vld [vmem:[#allocation7 + $0x2a0] sm:$0xff]
    %v1017 = vld [vmem:[#allocation7 + $0x2a8] sm:$0xff]
    %v1018 = vld [vmem:[#allocation7 + $0x2b0] sm:$0xff]
    %v1019 = vld [vmem:[#allocation7 + $0x2b8] sm:$0xff]
    %v1020 = vld [vmem:[#allocation7 + $0x2c0] sm:$0xff]
    %v1021 = vld [vmem:[#allocation7 + $0x2c8] sm:$0xff]
    %v1022 = vld [vmem:[#allocation7 + $0x2d0] sm:$0xff]
    %v1023 = vld [vmem:[#allocation7 + $0x2d8] sm:$0xff]
    %v1024 = vld [vmem:[#allocation7 + $0x2e0] sm:$0xff]
    %v1025 = vld [vmem:[#allocation7 + $0x2e8] sm:$0xff]
    %v1026 = vld [vmem:[#allocation7 + $0x2f0] sm:$0xff]
    %v1027 = vld [vmem:[#allocation7 + $0x2f8] sm:$0xff]
    %v1028 = vld [vmem:[#allocation7 + $0x300] sm:$0xff]
    %v1029 = vld [vmem:[#allocation7 + $0x308] sm:$0xff]
    %v1030 = vld [vmem:[#allocation7 + $0x310] sm:$0xff]
    %v1031 = vld [vmem:[#allocation7 + $0x318] sm:$0xff]
    %v1032 = vld [vmem:[#allocation7 + $0x320] sm:$0xff]
    %v1033 = vld [vmem:[#allocation7 + $0x328] sm:$0xff]
    %v1034 = vld [vmem:[#allocation7 + $0x330] sm:$0xff]
    %v1035 = vld [vmem:[#allocation7 + $0x338] sm:$0xff]
    %v1036 = vld [vmem:[#allocation7 + $0x340] sm:$0xff]
    %v1037 = vld [vmem:[#allocation7 + $0x348] sm:$0xff]
    %v1038 = vld [vmem:[#allocation7 + $0x350] sm:$0xff]
    %v1039 = vld [vmem:[#allocation7 + $0x358] sm:$0xff]
    %v1040 = vld [vmem:[#allocation7 + $0x360] sm:$0xff]
    %v1041 = vld [vmem:[#allocation7 + $0x368] sm:$0xff]
    %v1042 = vld [vmem:[#allocation7 + $0x370] sm:$0xff]
    %v1043 = vld [vmem:[#allocation7 + $0x378] sm:$0xff]
    %v1044 = vld [vmem:[#allocation7 + $0x380] sm:$0xff]
    %v1045 = vld [vmem:[#allocation7 + $0x388] sm:$0xff]
    %v1046 = vld [vmem:[#allocation7 + $0x390] sm:$0xff]
    %v1047 = vld [vmem:[#allocation7 + $0x398] sm:$0xff]
    %v1048 = vld [vmem:[#allocation7 + $0x3a0] sm:$0xff]
    %v1049 = vld [vmem:[#allocation7 + $0x3a8] sm:$0xff]
    %v1050 = vld [vmem:[#allocation7 + $0x3b0] sm:$0xff]
    %v1051 = vld [vmem:[#allocation7 + $0x3b8] sm:$0xff]
    %v1052 = vld [vmem:[#allocation7 + $0x3c0] sm:$0xff]
    %v1053 = vld [vmem:[#allocation7 + $0x3c8] sm:$0xff]
    %v1054 = vld [vmem:[#allocation7 + $0x3d0] sm:$0xff]
    %v1055 = vld [vmem:[#allocation7 + $0x3d8] sm:$0xff]
    %v1056 = vld [vmem:[#allocation7 + $0x3e0] sm:$0xff]
    %v1057 = vld [vmem:[#allocation7 + $0x3e8] sm:$0xff]
    %v1058 = vld [vmem:[#allocation7 + $0x3f0] sm:$0xff]
    %v1059 = vld [vmem:[#allocation7 + $0x3f8] sm:$0xff]
    %v1060 = vld [vmem:[#allocation9] sm:$0xf]
    %v1062 = vlaneseq
    %v1063 = vshrl.u32 %v1062, 7
    %v1064 = vsub.s32 0, %v1063
    %v1065 = vrot.slane %v1060, %v1064
    %v1066 = vlaneseq
    %v1067 = vshrl.u32 %v1066, 7
    %v1068 = vsub.s32 1, %v1067
    %v1069 = vrot.slane %v1060, %v1068
    %v1070 = vlaneseq
    %v1071 = vshrl.u32 %v1070, 7
    %v1072 = vsub.s32 2, %v1071
    %v1073 = vrot.slane %v1060, %v1072
    %v1074 = vlaneseq
    %v1075 = vshrl.u32 %v1074, 7
    %v1076 = vsub.s32 3, %v1075
    %v1077 = vrot.slane %v1060, %v1076
    %1082 = vmatprep.subr.mxu0 %v933
    %1083 = vmatpush1.msra.mxu0 %v932
    %1084 = vmatprep.subr.mxu0 %v937
    %1085 = vmatpush1.msra.mxu0 %v936
    %1086 = vmatprep.subr.mxu0 %v941
    %1087 = vmatpush1.msra.mxu0 %v940
    %1088 = vmatprep.subr.mxu0 %v945
    %1089 = vmatpush1.msra.mxu0 %v944
    %1090 = vmatprep.subr.mxu0 %v949
    %1091 = vmatpush1.msra.mxu0 %v948
    %1092 = vmatprep.subr.mxu0 %v953
    %1093 = vmatpush1.msra.mxu0 %v952
    %1094 = vmatprep.subr.mxu0 %v957
    %1095 = vmatpush1.msra.mxu0 %v956
    %1096 = vmatprep.subr.mxu0 %v961
    %1097 = vmatpush1.msra.mxu0 %v960
    %1098 = vmatprep.subr.mxu0 %v965
    %1099 = vmatpush1.msra.mxu0 %v964
    %1100 = vmatprep.subr.mxu0 %v969
    %1101 = vmatpush1.msra.mxu0 %v968
    %1102 = vmatprep.subr.mxu0 %v973
    %1103 = vmatpush1.msra.mxu0 %v972
    %1104 = vmatprep.subr.mxu0 %v977
    %1105 = vmatpush1.msra.mxu0 %v976
    %1106 = vmatprep.subr.mxu0 %v981
    %1107 = vmatpush1.msra.mxu0 %v980
    %1108 = vmatprep.subr.mxu0 %v985
    %1109 = vmatpush1.msra.mxu0 %v984
    %1110 = vmatprep.subr.mxu0 %v989
    %1111 = vmatpush1.msra.mxu0 %v988
    %1112 = vmatprep.subr.mxu0 %v993
    %1113 = vmatpush1.msra.mxu0 %v992
    %1114 = vmatprep.subr.mxu0 %v997
    %1115 = vmatpush1.msra.mxu0 %v996
    %1116 = vmatprep.subr.mxu0 %v1001
    %1117 = vmatpush1.msra.mxu0 %v1000
    %1118 = vmatprep.subr.mxu0 %v1005
    %1119 = vmatpush1.msra.mxu0 %v1004
    %1120 = vmatprep.subr.mxu0 %v1009
    %1121 = vmatpush1.msra.mxu0 %v1008
    %1122 = vmatprep.subr.mxu0 %v1013
    %1123 = vmatpush1.msra.mxu0 %v1012
    %1124 = vmatprep.subr.mxu0 %v1017
    %1125 = vmatpush1.msra.mxu0 %v1016
    %1126 = vmatprep.subr.mxu0 %v1021
    %1127 = vmatpush1.msra.mxu0 %v1020
    %1128 = vmatprep.subr.mxu0 %v1025
    %1129 = vmatpush1.msra.mxu0 %v1024
    %1130 = vmatprep.subr.mxu0 %v1029
    %1131 = vmatpush1.msra.mxu0 %v1028
    %1132 = vmatprep.subr.mxu0 %v1033
    %1133 = vmatpush1.msra.mxu0 %v1032
    %1134 = vmatprep.subr.mxu0 %v1037
    %1135 = vmatpush1.msra.mxu0 %v1036
    %1136 = vmatprep.subr.mxu0 %v1041
    %1137 = vmatpush1.msra.mxu0 %v1040
    %1138 = vmatprep.subr.mxu0 %v1045
    %1139 = vmatpush1.msra.mxu0 %v1044
    %1140 = vmatprep.subr.mxu0 %v1049
    %1141 = vmatpush1.msra.mxu0 %v1048
    %1142 = vmatprep.subr.mxu0 %v1053
    %1143 = vmatpush1.msra.mxu0 %v1052
    %1144 = vmatprep.subr.mxu0 %v1057
    %1145 = vmatpush1.msra.mxu0 %v1056
    %1146 = vmatprep.mubr.f32.mxu0 %v193
    %1147 = vmatmul.mubr.f32.gmra.mrb[0].mxu0 %v931
    %v1148 = vpop.f32.mrb[0].mxu0
    %v1149 = vadd.f32 %v1065, %v1148
    %v1150 = vpop.f32.mrb[0].mxu0
    %v1151 = vadd.f32 %v1069, %v1150
    %1152 = vdwg.mxu0
    %1153 = vmatprep.subr.mxu0 %v935
    %1154 = vmatpush1.msra.mxu0 %v934
    %1155 = vmatprep.subr.mxu0 %v939
    %1156 = vmatpush1.msra.mxu0 %v938
    %1157 = vmatprep.subr.mxu0 %v943
    %1158 = vmatpush1.msra.mxu0 %v942
    %1159 = vmatprep.subr.mxu0 %v947
    %1160 = vmatpush1.msra.mxu0 %v946
    %1161 = vmatprep.subr.mxu0 %v951
    %1162 = vmatpush1.msra.mxu0 %v950
    %1163 = vmatprep.subr.mxu0 %v955
    %1164 = vmatpush1.msra.mxu0 %v954
    %1165 = vmatprep.subr.mxu0 %v959
    %1166 = vmatpush1.msra.mxu0 %v958
    %1167 = vmatprep.subr.mxu0 %v963
    %1168 = vmatpush1.msra.mxu0 %v962
    %1169 = vmatprep.subr.mxu0 %v967
    %1170 = vmatpush1.msra.mxu0 %v966
    %1171 = vmatprep.subr.mxu0 %v971
    %1172 = vmatpush1.msra.mxu0 %v970
    %1173 = vmatprep.subr.mxu0 %v975
    %1174 = vmatpush1.msra.mxu0 %v974
    %1175 = vmatprep.subr.mxu0 %v979
    %1176 = vmatpush1.msra.mxu0 %v978
    %1177 = vmatprep.subr.mxu0 %v983
    %1178 = vmatpush1.msra.mxu0 %v982
    %1179 = vmatprep.subr.mxu0 %v987
    %1180 = vmatpush1.msra.mxu0 %v986
    %1181 = vmatprep.subr.mxu0 %v991
    %1182 = vmatpush1.msra.mxu0 %v990
    %1183 = vmatprep.subr.mxu0 %v995
    %1184 = vmatpush1.msra.mxu0 %v994
    %1185 = vmatprep.subr.mxu0 %v999
    %1186 = vmatpush1.msra.mxu0 %v998
    %1187 = vmatprep.subr.mxu0 %v1003
    %1188 = vmatpush1.msra.mxu0 %v1002
    %1189 = vmatprep.subr.mxu0 %v1007
    %1190 = vmatpush1.msra.mxu0 %v1006
    %1191 = vmatprep.subr.mxu0 %v1011
    %1192 = vmatpush1.msra.mxu0 %v1010
    %1193 = vmatprep.subr.mxu0 %v1015
    %1194 = vmatpush1.msra.mxu0 %v1014
    %1195 = vmatprep.subr.mxu0 %v1019
    %1196 = vmatpush1.msra.mxu0 %v1018
    %1197 = vmatprep.subr.mxu0 %v1023
    %1198 = vmatpush1.msra.mxu0 %v1022
    %1199 = vmatprep.subr.mxu0 %v1027
    %1200 = vmatpush1.msra.mxu0 %v1026
    %1201 = vmatprep.subr.mxu0 %v1031
    %1202 = vmatpush1.msra.mxu0 %v1030
    %1203 = vmatprep.subr.mxu0 %v1035
    %1204 = vmatpush1.msra.mxu0 %v1034
    %1205 = vmatprep.subr.mxu0 %v1039
    %1206 = vmatpush1.msra.mxu0 %v1038
    %1207 = vmatprep.subr.mxu0 %v1043
    %1208 = vmatpush1.msra.mxu0 %v1042
    %1209 = vmatprep.subr.mxu0 %v1047
    %1210 = vmatpush1.msra.mxu0 %v1046
    %1211 = vmatprep.subr.mxu0 %v1051
    %1212 = vmatpush1.msra.mxu0 %v1050
    %1213 = vmatprep.subr.mxu0 %v1055
    %1214 = vmatpush1.msra.mxu0 %v1054
    %1215 = vmatprep.subr.mxu0 %v1059
    %1216 = vmatpush1.msra.mxu0 %v1058
    %1217 = vmatprep.mubr.f32.mxu0 %v193
    %1218 = vmatmul.mubr.f32.gmra.mrb[0].mxu0 %v931
    %v1219 = vpop.f32.mrb[0].mxu0
    %v1220 = vadd.f32 %v1073, %v1219
    %v1221 = vpop.f32.mrb[0].mxu0
    %v1222 = vadd.f32 %v1077, %v1221
    %1223 = vdwg.mxu0
    %v1224 = vxor.u32 %v1149, 2147483648
    %v1225 = vmul.f32 %v1224, 1.442695
    %v1226 = vpow.pop %v1225
    %v1227 = vadd.f32 %v1226, 1.0
    %v1228 = vrcp.pop %v1227
    %v1229 = vmul.f32 1.0, %v1228
    %v1230 = vxor.u32 %v1151, 2147483648
    %v1231 = vmul.f32 %v1230, 1.442695
    %v1232 = vpow.pop %v1231
    %v1233 = vadd.f32 %v1232, 1.0
    %v1234 = vrcp.pop %v1233
    %v1235 = vmul.f32 1.0, %v1234
    %v1236 = vmul.f32 %v1229, %v1222
    %v1237 = vadd.f32 %v1220, %v1236
    %v1238 = vtanh.pop %v1237
    %v1239 = vsub.f32 1.0, %v1235
    %v1240 = vmul.f32 %v1239, %v1238
    %v1241 = vmul.f32 %v1235, %v193
    %v1242 = vadd.f32 %v1240, %v1241
    %v1243 = vld [vmem:[%s11] sm:$0xff]
    %v1244 = vld [vmem:[%s11 + $0x8] sm:$0xff]
    %v1245 = vld [vmem:[%s11 + $0x10] sm:$0xff]
    %v1246 = vld [vmem:[%s11 + $0x18] sm:$0xff]
    %v1247 = vld [vmem:[%s11 + $0x20] sm:$0xff]
    %v1248 = vld [vmem:[%s11 + $0x28] sm:$0xff]
    %v1249 = vld [vmem:[%s11 + $0x30] sm:$0xff]
    %v1250 = vld [vmem:[%s11 + $0x38] sm:$0xff]
    %v1251 = vld [vmem:[%s11 + $0x40] sm:$0xff]
    %v1252 = vld [vmem:[%s11 + $0x48] sm:$0xff]
    %v1253 = vld [vmem:[%s11 + $0x50] sm:$0xff]
    %v1254 = vld [vmem:[%s11 + $0x58] sm:$0xff]
    %v1255 = vld [vmem:[%s11 + $0x60] sm:$0xff]
    %v1256 = vld [vmem:[%s11 + $0x68] sm:$0xff]
    %v1257 = vld [vmem:[%s11 + $0x70] sm:$0xff]
    %v1258 = vld [vmem:[%s11 + $0x78] sm:$0xff]
    %vm1259 = vcmask 64512
    %v1261 = vsel %vm1259, %v1243, 0
    %v1264 = vsel %vm1259, %v1244, 0
    %v1267 = vsel %vm1259, %v1245, 0
    %v1270 = vsel %vm1259, %v1246, 0
    %v1273 = vsel %vm1259, %v1247, 0
    %v1276 = vsel %vm1259, %v1248, 0
    %v1279 = vsel %vm1259, %v1249, 0
    %v1282 = vsel %vm1259, %v1250, 0
    %v1285 = vsel %vm1259, %v1251, 0
    %v1288 = vsel %vm1259, %v1252, 0
    %v1291 = vsel %vm1259, %v1253, 0
    %v1294 = vsel %vm1259, %v1254, 0
    %v1297 = vsel %vm1259, %v1255, 0
    %v1300 = vsel %vm1259, %v1256, 0
    %v1303 = vsel %vm1259, %v1257, 0
    %v1306 = vsel %vm1259, %v1258, 0
    %1308 = vmatprep.subr.mxu0 0.0
    %1309 = vmatpush1.msra.mxu0 %v1242
    %1310 = vmatprep.subr.mxu0 0.0
    %1311 = vmatpush1.msra.mxu0 0.0
    %1312 = vmatprep.subr.mxu0 0.0
    %1313 = vmatpush1.msra.mxu0 0.0
    %1314 = vmatprep.subr.mxu0 0.0
    %1315 = vmatpush1.msra.mxu0 0.0
    %1316 = vmatprep.subr.mxu0 0.0
    %1317 = vmatpush1.msra.mxu0 0.0
    %1318 = vmatprep.subr.mxu0 0.0
    %1319 = vmatpush1.msra.mxu0 0.0
    %1320 = vmatprep.subr.mxu0 0.0
    %1321 = vmatpush1.msra.mxu0 0.0
    %1322 = vmatprep.subr.mxu0 0.0
    %1323 = vmatpush1.msra.mxu0 0.0
    %1324 = vmatprep.subr.mxu0 0.0
    %1325 = vmatpush1.msra.mxu0 0.0
    %1326 = vmatprep.subr.mxu0 0.0
    %1327 = vmatpush1.msra.mxu0 0.0
    %1328 = vmatprep.subr.mxu0 0.0
    %1329 = vmatpush1.msra.mxu0 0.0
    %1330 = vmatprep.subr.mxu0 0.0
    %1331 = vmatpush1.msra.mxu0 0.0
    %1332 = vmatprep.subr.mxu0 0.0
    %1333 = vmatpush1.msra.mxu0 0.0
    %1334 = vmatprep.subr.mxu0 0.0
    %1335 = vmatpush1.msra.mxu0 0.0
    %1336 = vmatprep.subr.mxu0 0.0
    %1337 = vmatpush1.msra.mxu0 0.0
    %1338 = vmatprep.subr.mxu0 0.0
    %1339 = vmatpush1.msra.mxu0 0.0
    %1340 = vmatprep.subr.mxu0 0.0
    %1341 = vmatpush1.msra.mxu0 0.0
    %1342 = vmatprep.subr.mxu0 0.0
    %1343 = vmatpush1.msra.mxu0 0.0
    %1344 = vmatprep.subr.mxu0 0.0
    %1345 = vmatpush1.msra.mxu0 0.0
    %1346 = vmatprep.subr.mxu0 0.0
    %1347 = vmatpush1.msra.mxu0 0.0
    %1348 = vmatprep.subr.mxu0 0.0
    %1349 = vmatpush1.msra.mxu0 0.0
    %1350 = vmatprep.subr.mxu0 0.0
    %1351 = vmatpush1.msra.mxu0 0.0
    %1352 = vmatprep.subr.mxu0 0.0
    %1353 = vmatpush1.msra.mxu0 0.0
    %1354 = vmatprep.subr.mxu0 0.0
    %1355 = vmatpush1.msra.mxu0 0.0
    %1356 = vmatprep.subr.mxu0 0.0
    %1357 = vmatpush1.msra.mxu0 0.0
    %1358 = vmatprep.subr.mxu0 0.0
    %1359 = vmatpush1.msra.mxu0 0.0
    %1360 = vmatprep.subr.mxu0 0.0
    %1361 = vmatpush1.msra.mxu0 0.0
    %1362 = vmatprep.subr.mxu0 0.0
    %1363 = vmatpush1.msra.mxu0 0.0
    %1364 = vmatprep.subr.mxu0 0.0
    %1365 = vmatpush1.msra.mxu0 0.0
    %1366 = vmatprep.subr.mxu0 0.0
    %1367 = vmatpush1.msra.mxu0 0.0
    %1368 = vmatprep.subr.mxu0 0.0
    %1369 = vmatpush1.msra.mxu0 0.0
    %1370 = vmatprep.subr.mxu0 0.0
    %1371 = vmatpush1.msra.mxu0 0.0
    %1372 = vmatprep.mubr.f32.mxu0 0.0
    %1373 = vmatmul.mubr.f32.gmra.mrb[0].mxu0 %v1261
    %v1374 = vpop.f32.mrb[0].mxu0
    %v1375 = vadd.f32 0.0, %v1374
    %v1376 = vpop.f32.mrb[0].mxu0
    %1377 = vmatprep.mubr.f32.mxu0 0.0
    %1378 = vmatmul.mubr.f32.gmra.mrb[0].mxu0 %v1264
    %v1379 = vpop.f32.mrb[0].mxu0
    %v1380 = vadd.f32 0.0, %v1379
    %v1381 = vpop.f32.mrb[0].mxu0
    %1382 = vmatprep.mubr.f32.mxu0 0.0
    %1383 = vmatmul.mubr.f32.gmra.mrb[0].mxu0 %v1267
    %v1384 = vpop.f32.mrb[0].mxu0
    %v1385 = vadd.f32 0.0, %v1384
    %v1386 = vpop.f32.mrb[0].mxu0
    %1387 = vmatprep.mubr.f32.mxu0 0.0
    %1388 = vmatmul.mubr.f32.gmra.mrb[0].mxu0 %v1270
    %v1389 = vpop.f32.mrb[0].mxu0
    %v1390 = vadd.f32 0.0, %v1389
    %v1391 = vpop.f32.mrb[0].mxu0
    %1392 = vmatprep.mubr.f32.mxu0 0.0
    %1393 = vmatmul.mubr.f32.gmra.mrb[0].mxu0 %v1273
    %v1394 = vpop.f32.mrb[0].mxu0
    %v1395 = vadd.f32 0.0, %v1394
    %v1396 = vpop.f32.mrb[0].mxu0
    %1397 = vmatprep.mubr.f32.mxu0 0.0
    %1398 = vmatmul.mubr.f32.gmra.mrb[0].mxu0 %v1276
    %v1399 = vpop.f32.mrb[0].mxu0
    %v1400 = vadd.f32 0.0, %v1399
    %v1401 = vpop.f32.mrb[0].mxu0
    %1402 = vmatprep.mubr.f32.mxu0 0.0
    %1403 = vmatmul.mubr.f32.gmra.mrb[0].mxu0 %v1279
    %v1404 = vpop.f32.mrb[0].mxu0
    %v1405 = vadd.f32 0.0, %v1404
    %v1406 = vpop.f32.mrb[0].mxu0
    %1407 = vmatprep.mubr.f32.mxu0 0.0
    %1408 = vmatmul.mubr.f32.gmra.mrb[0].mxu0 %v1282
    %v1409 = vpop.f32.mrb[0].mxu0
    %v1410 = vadd.f32 0.0, %v1409
    %v1411 = vpop.f32.mrb[0].mxu0
    %1412 = vmatprep.mubr.f32.mxu0 0.0
    %1413 = vmatmul.mubr.f32.gmra.mrb[0].mxu0 %v1285
    %v1414 = vpop.f32.mrb[0].mxu0
    %v1415 = vadd.f32 0.0, %v1414
    %v1416 = vpop.f32.mrb[0].mxu0
    %1417 = vmatprep.mubr.f32.mxu0 0.0
    %1418 = vmatmul.mubr.f32.gmra.mrb[0].mxu0 %v1288
    %v1419 = vpop.f32.mrb[0].mxu0
    %v1420 = vadd.f32 0.0, %v1419
    %v1421 = vpop.f32.mrb[0].mxu0
    %1422 = vmatprep.mubr.f32.mxu0 0.0
    %1423 = vmatmul.mubr.f32.gmra.mrb[0].mxu0 %v1291
    %v1424 = vpop.f32.mrb[0].mxu0
    %v1425 = vadd.f32 0.0, %v1424
    %v1426 = vpop.f32.mrb[0].mxu0
    %1427 = vmatprep.mubr.f32.mxu0 0.0
    %1428 = vmatmul.mubr.f32.gmra.mrb[0].mxu0 %v1294
    %v1429 = vpop.f32.mrb[0].mxu0
    %v1430 = vadd.f32 0.0, %v1429
    %v1431 = vpop.f32.mrb[0].mxu0
    %1432 = vmatprep.mubr.f32.mxu0 0.0
    %1433 = vmatmul.mubr.f32.gmra.mrb[0].mxu0 %v1297
    %v1434 = vpop.f32.mrb[0].mxu0
    %v1435 = vadd.f32 0.0, %v1434
    %v1436 = vpop.f32.mrb[0].mxu0
    %1437 = vmatprep.mubr.f32.mxu0 0.0
    %1438 = vmatmul.mubr.f32.gmra.mrb[0].mxu0 %v1300
    %v1439 = vpop.f32.mrb[0].mxu0
    %v1440 = vadd.f32 0.0, %v1439
    %v1441 = vpop.f32.mrb[0].mxu0
    %1442 = vmatprep.mubr.f32.mxu0 0.0
    %1443 = vmatmul.mubr.f32.gmra.mrb[0].mxu0 %v1303
    %v1444 = vpop.f32.mrb[0].mxu0
    %v1445 = vadd.f32 0.0, %v1444
    %v1446 = vpop.f32.mrb[0].mxu0
    %1447 = vmatprep.mubr.f32.mxu0 0.0
    %1448 = vmatmul.mubr.f32.gmra.mrb[0].mxu0 %v1306
    %v1449 = vpop.f32.mrb[0].mxu0
    %v1450 = vadd.f32 0.0, %v1449
    %v1451 = vpop.f32.mrb[0].mxu0
    %1452 = vdwg.mxu0
    %v1453 = vld [vmem:[#allocation10] sm:$0xff]
    %v1454 = vld [vmem:[#allocation10 + $0x8] sm:$0xff]
    %v1455 = vld [vmem:[#allocation10 + $0x10] sm:$0xff]
    %v1456 = vld [vmem:[#allocation10 + $0x18] sm:$0xff]
    %v1457 = vld [vmem:[#allocation10 + $0x20] sm:$0xff]
    %v1458 = vld [vmem:[#allocation10 + $0x28] sm:$0xff]
    %v1459 = vld [vmem:[#allocation10 + $0x30] sm:$0xff]
    %v1460 = vld [vmem:[#allocation10 + $0x38] sm:$0xff]
    %v1461 = vld [vmem:[#allocation10 + $0x40] sm:$0xff]
    %v1462 = vld [vmem:[#allocation10 + $0x48] sm:$0xff]
    %v1463 = vld [vmem:[#allocation10 + $0x50] sm:$0xff]
    %v1464 = vld [vmem:[#allocation10 + $0x58] sm:$0xff]
    %v1465 = vld [vmem:[#allocation10 + $0x60] sm:$0xff]
    %v1466 = vld [vmem:[#allocation10 + $0x68] sm:$0xff]
    %v1467 = vld [vmem:[#allocation10 + $0x70] sm:$0xff]
    %v1468 = vld [vmem:[#allocation10 + $0x78] sm:$0xff]
    %v1469 = vmul.f32 %v1375, %v1453
    %v1470 = vmul.f32 %v1380, %v1454
    %v1471 = vmul.f32 %v1385, %v1455
    %v1472 = vmul.f32 %v1390, %v1456
    %v1473 = vmul.f32 %v1395, %v1457
    %v1474 = vmul.f32 %v1400, %v1458
    %v1475 = vmul.f32 %v1405, %v1459
    %v1476 = vmul.f32 %v1410, %v1460
    %v1477 = vmul.f32 %v1415, %v1461
    %v1478 = vmul.f32 %v1420, %v1462
    %v1479 = vmul.f32 %v1425, %v1463
    %v1480 = vmul.f32 %v1430, %v1464
    %v1481 = vmul.f32 %v1435, %v1465
    %v1482 = vmul.f32 %v1440, %v1466
    %v1483 = vmul.f32 %v1445, %v1467
    %v1484 = vmul.f32 %v1450, %v1468
    %v1485 = vld [vmem:[%s14] sm:$0xff]
    %v1486 = vld [vmem:[%s14 + $0x8] sm:$0xff]
    %v1487 = vld [vmem:[%s14 + $0x10] sm:$0xff]
    %v1488 = vld [vmem:[%s14 + $0x18] sm:$0xff]
    %v1489 = vld [vmem:[%s14 + $0x20] sm:$0xff]
    %v1490 = vld [vmem:[%s14 + $0x28] sm:$0xff]
    %v1491 = vld [vmem:[%s14 + $0x30] sm:$0xff]
    %v1492 = vld [vmem:[%s14 + $0x38] sm:$0xff]
    %v1493 = vld [vmem:[%s14 + $0x40] sm:$0xff]
    %v1494 = vld [vmem:[%s14 + $0x48] sm:$0xff]
    %v1495 = vld [vmem:[%s14 + $0x50] sm:$0xff]
    %v1496 = vld [vmem:[%s14 + $0x58] sm:$0xff]
    %v1497 = vld [vmem:[%s14 + $0x60] sm:$0xff]
    %v1498 = vld [vmem:[%s14 + $0x68] sm:$0xff]
    %v1499 = vld [vmem:[%s14 + $0x70] sm:$0xff]
    %v1500 = vld [vmem:[%s14 + $0x78] sm:$0xff]
    %v1501 = vld [vmem:[%s14 + $0x80] sm:$0xff]
    %v1502 = vld [vmem:[%s14 + $0x88] sm:$0xff]
    %v1503 = vld [vmem:[%s14 + $0x90] sm:$0xff]
    %v1504 = vld [vmem:[%s14 + $0x98] sm:$0xff]
    %v1505 = vld [vmem:[%s14 + $0xa0] sm:$0xff]
    %v1506 = vld [vmem:[%s14 + $0xa8] sm:$0xff]
    %v1507 = vld [vmem:[%s14 + $0xb0] sm:$0xff]
    %v1508 = vld [vmem:[%s14 + $0xb8] sm:$0xff]
    %v1509 = vld [vmem:[%s14 + $0xc0] sm:$0xff]
    %v1510 = vld [vmem:[%s14 + $0xc8] sm:$0xff]
    %v1511 = vld [vmem:[%s14 + $0xd0] sm:$0xff]
    %v1512 = vld [vmem:[%s14 + $0xd8] sm:$0xff]
    %v1513 = vld [vmem:[%s14 + $0xe0] sm:$0xff]
    %v1514 = vld [vmem:[%s14 + $0xe8] sm:$0xff]
    %v1515 = vld [vmem:[%s14 + $0xf0] sm:$0xff]
    %v1516 = vld [vmem:[%s14 + $0xf8] sm:$0xff]
    %v1517 = vld [vmem:[%s14 + $0x100] sm:$0xff]
    %v1518 = vld [vmem:[%s14 + $0x108] sm:$0xff]
    %v1519 = vld [vmem:[%s14 + $0x110] sm:$0xff]
    %v1520 = vld [vmem:[%s14 + $0x118] sm:$0xff]
    %v1521 = vld [vmem:[%s14 + $0x120] sm:$0xff]
    %v1522 = vld [vmem:[%s14 + $0x128] sm:$0xff]
    %v1523 = vld [vmem:[%s14 + $0x130] sm:$0xff]
    %v1524 = vld [vmem:[%s14 + $0x138] sm:$0xff]
    %v1525 = vld [vmem:[%s14 + $0x140] sm:$0xff]
    %v1526 = vld [vmem:[%s14 + $0x148] sm:$0xff]
    %v1527 = vld [vmem:[%s14 + $0x150] sm:$0xff]
    %v1528 = vld [vmem:[%s14 + $0x158] sm:$0xff]
    %v1529 = vld [vmem:[%s14 + $0x160] sm:$0xff]
    %v1530 = vld [vmem:[%s14 + $0x168] sm:$0xff]
    %v1531 = vld [vmem:[%s14 + $0x170] sm:$0xff]
    %v1532 = vld [vmem:[%s14 + $0x178] sm:$0xff]
    %1533 = vmatprep.subr.mxu0 %v1486
    %1534 = vmatpush1.msra.mxu0 %v1485
    %1535 = vmatprep.subr.mxu0 %v1489
    %1536 = vmatpush1.msra.mxu0 %v1488
    %1537 = vmatprep.subr.mxu0 %v1492
    %1538 = vmatpush1.msra.mxu0 %v1491
    %1539 = vmatprep.subr.mxu0 %v1495
    %1540 = vmatpush1.msra.mxu0 %v1494
    %1541 = vmatprep.subr.mxu0 %v1498
    %1542 = vmatpush1.msra.mxu0 %v1497
    %1543 = vmatprep.subr.mxu0 %v1501
    %1544 = vmatpush1.msra.mxu0 %v1500
    %1545 = vmatprep.subr.mxu0 %v1504
    %1546 = vmatpush1.msra.mxu0 %v1503
    %1547 = vmatprep.subr.mxu0 %v1507
    %1548 = vmatpush1.msra.mxu0 %v1506
    %1549 = vmatprep.subr.mxu0 %v1510
    %1550 = vmatpush1.msra.mxu0 %v1509
    %1551 = vmatprep.subr.mxu0 %v1513
    %1552 = vmatpush1.msra.mxu0 %v1512
    %1553 = vmatprep.subr.mxu0 %v1516
    %1554 = vmatpush1.msra.mxu0 %v1515
    %1555 = vmatprep.subr.mxu0 %v1519
    %1556 = vmatpush1.msra.mxu0 %v1518
    %1557 = vmatprep.subr.mxu0 %v1522
    %1558 = vmatpush1.msra.mxu0 %v1521
    %1559 = vmatprep.subr.mxu0 %v1525
    %1560 = vmatpush1.msra.mxu0 %v1524
    %1561 = vmatprep.subr.mxu0 %v1528
    %1562 = vmatpush1.msra.mxu0 %v1527
    %1563 = vmatprep.subr.mxu0 %v1531
    %1564 = vmatpush1.msra.mxu0 %v1530
    %1565 = vmatprep.subr.mxu0 0.0
    %1566 = vmatpush1.msra.mxu0 0.0
    %1567 = vmatprep.subr.mxu0 0.0
    %1568 = vmatpush1.msra.mxu0 0.0
    %1569 = vmatprep.subr.mxu0 0.0
    %1570 = vmatpush1.msra.mxu0 0.0
    %1571 = vmatprep.subr.mxu0 0.0
    %1572 = vmatpush1.msra.mxu0 0.0
    %1573 = vmatprep.subr.mxu0 0.0
    %1574 = vmatpush1.msra.mxu0 0.0
    %1575 = vmatprep.subr.mxu0 0.0
    %1576 = vmatpush1.msra.mxu0 0.0
    %1577 = vmatprep.subr.mxu0 0.0
    %1578 = vmatpush1.msra.mxu0 0.0
    %1579 = vmatprep.subr.mxu0 0.0
    %1580 = vmatpush1.msra.mxu0 0.0
    %1581 = vmatprep.subr.mxu0 0.0
    %1582 = vmatpush1.msra.mxu0 0.0
    %1583 = vmatprep.subr.mxu0 0.0
    %1584 = vmatpush1.msra.mxu0 0.0
    %1585 = vmatprep.subr.mxu0 0.0
    %1586 = vmatpush1.msra.mxu0 0.0
    %1587 = vmatprep.subr.mxu0 0.0
    %1588 = vmatpush1.msra.mxu0 0.0
    %1589 = vmatprep.subr.mxu0 0.0
    %1590 = vmatpush1.msra.mxu0 0.0
    %1591 = vmatprep.subr.mxu0 0.0
    %1592 = vmatpush1.msra.mxu0 0.0
    %1593 = vmatprep.subr.mxu0 0.0
    %1594 = vmatpush1.msra.mxu0 0.0
    %1595 = vmatprep.subr.mxu0 0.0
    %1596 = vmatpush1.msra.mxu0 0.0
    %1597 = vmatprep.mubr.f32.mxu0 0.0
    %1598 = vmatmul.mubr.f32.gmra.mrb[0].mxu0 %v1469
    %v1599 = vpop.f32.mrb[0].mxu0
    %v1600 = vadd.f32 0.0, %v1599
    %v1601 = vpop.f32.mrb[0].mxu0
    %v1602 = vadd.f32 0.0, %v1601
    %1603 = vmatprep.mubr.f32.mxu0 0.0
    %1604 = vmatmul.mubr.f32.gmra.mrb[0].mxu0 %v1470
    %v1605 = vpop.f32.mrb[0].mxu0
    %v1606 = vadd.f32 0.0, %v1605
    %v1607 = vpop.f32.mrb[0].mxu0
    %v1608 = vadd.f32 0.0, %v1607
    %1609 = vmatprep.mubr.f32.mxu0 0.0
    %1610 = vmatmul.mubr.f32.gmra.mrb[0].mxu0 %v1471
    %v1611 = vpop.f32.mrb[0].mxu0
    %v1612 = vadd.f32 0.0, %v1611
    %v1613 = vpop.f32.mrb[0].mxu0
    %v1614 = vadd.f32 0.0, %v1613
    %1615 = vmatprep.mubr.f32.mxu0 0.0
    %1616 = vmatmul.mubr.f32.gmra.mrb[0].mxu0 %v1472
    %v1617 = vpop.f32.mrb[0].mxu0
    %v1618 = vadd.f32 0.0, %v1617
    %v1619 = vpop.f32.mrb[0].mxu0
    %v1620 = vadd.f32 0.0, %v1619
    %1621 = vmatprep.mubr.f32.mxu0 0.0
    %1622 = vmatmul.mubr.f32.gmra.mrb[0].mxu0 %v1473
    %v1623 = vpop.f32.mrb[0].mxu0
    %v1624 = vadd.f32 0.0, %v1623
    %v1625 = vpop.f32.mrb[0].mxu0
    %v1626 = vadd.f32 0.0, %v1625
    %1627 = vmatprep.mubr.f32.mxu0 0.0
    %1628 = vmatmul.mubr.f32.gmra.mrb[0].mxu0 %v1474
    %v1629 = vpop.f32.mrb[0].mxu0
    %v1630 = vadd.f32 0.0, %v1629
    %v1631 = vpop.f32.mrb[0].mxu0
    %v1632 = vadd.f32 0.0, %v1631
    %1633 = vmatprep.mubr.f32.mxu0 0.0
    %1634 = vmatmul.mubr.f32.gmra.mrb[0].mxu0 %v1475
    %v1635 = vpop.f32.mrb[0].mxu0
    %v1636 = vadd.f32 0.0, %v1635
    %v1637 = vpop.f32.mrb[0].mxu0
    %v1638 = vadd.f32 0.0, %v1637
    %1639 = vmatprep.mubr.f32.mxu0 0.0
    %1640 = vmatmul.mubr.f32.gmra.mrb[0].mxu0 %v1476
    %v1641 = vpop.f32.mrb[0].mxu0
    %v1642 = vadd.f32 0.0, %v1641
    %v1643 = vpop.f32.mrb[0].mxu0
    %v1644 = vadd.f32 0.0, %v1643
    %1645 = vmatprep.mubr.f32.mxu0 0.0
    %1646 = vmatmul.mubr.f32.gmra.mrb[0].mxu0 %v1477
    %v1647 = vpop.f32.mrb[0].mxu0
    %v1648 = vadd.f32 0.0, %v1647
    %v1649 = vpop.f32.mrb[0].mxu0
    %v1650 = vadd.f32 0.0, %v1649
    %1651 = vmatprep.mubr.f32.mxu0 0.0
    %1652 = vmatmul.mubr.f32.gmra.mrb[0].mxu0 %v1478
    %v1653 = vpop.f32.mrb[0].mxu0
    %v1654 = vadd.f32 0.0, %v1653
    %v1655 = vpop.f32.mrb[0].mxu0
    %v1656 = vadd.f32 0.0, %v1655
    %1657 = vmatprep.mubr.f32.mxu0 0.0
    %1658 = vmatmul.mubr.f32.gmra.mrb[0].mxu0 %v1479
    %v1659 = vpop.f32.mrb[0].mxu0
    %v1660 = vadd.f32 0.0, %v1659
    %v1661 = vpop.f32.mrb[0].mxu0
    %v1662 = vadd.f32 0.0, %v1661
    %1663 = vmatprep.mubr.f32.mxu0 0.0
    %1664 = vmatmul.mubr.f32.gmra.mrb[0].mxu0 %v1480
    %v1665 = vpop.f32.mrb[0].mxu0
    %v1666 = vadd.f32 0.0, %v1665
    %v1667 = vpop.f32.mrb[0].mxu0
    %v1668 = vadd.f32 0.0, %v1667
    %1669 = vmatprep.mubr.f32.mxu0 0.0
    %1670 = vmatmul.mubr.f32.gmra.mrb[0].mxu0 %v1481
    %v1671 = vpop.f32.mrb[0].mxu0
    %v1672 = vadd.f32 0.0, %v1671
    %v1673 = vpop.f32.mrb[0].mxu0
    %v1674 = vadd.f32 0.0, %v1673
    %1675 = vmatprep.mubr.f32.mxu0 0.0
    %1676 = vmatmul.mubr.f32.gmra.mrb[0].mxu0 %v1482
    %v1677 = vpop.f32.mrb[0].mxu0
    %v1678 = vadd.f32 0.0, %v1677
    %v1679 = vpop.f32.mrb[0].mxu0
    %v1680 = vadd.f32 0.0, %v1679
    %1681 = vmatprep.mubr.f32.mxu0 0.0
    %1682 = vmatmul.mubr.f32.gmra.mrb[0].mxu0 %v1483
    %v1683 = vpop.f32.mrb[0].mxu0
    %v1684 = vadd.f32 0.0, %v1683
    %v1685 = vpop.f32.mrb[0].mxu0
    %v1686 = vadd.f32 0.0, %v1685
    %1687 = vmatprep.mubr.f32.mxu0 0.0
    %1688 = vmatmul.mubr.f32.gmra.mrb[0].mxu0 %v1484
    %v1689 = vpop.f32.mrb[0].mxu0
    %v1690 = vadd.f32 0.0, %v1689
    %v1691 = vpop.f32.mrb[0].mxu0
    %v1692 = vadd.f32 0.0, %v1691
    %1693 = vdwg.mxu0
    %1694 = vmatprep.subr.mxu0 0.0
    %1695 = vmatpush1.msra.mxu0 %v1487
    %1696 = vmatprep.subr.mxu0 0.0
    %1697 = vmatpush1.msra.mxu0 %v1490
    %1698 = vmatprep.subr.mxu0 0.0
    %1699 = vmatpush1.msra.mxu0 %v1493
    %1700 = vmatprep.subr.mxu0 0.0
    %1701 = vmatpush1.msra.mxu0 %v1496
    %1702 = vmatprep.subr.mxu0 0.0
    %1703 = vmatpush1.msra.mxu0 %v1499
    %1704 = vmatprep.subr.mxu0 0.0
    %1705 = vmatpush1.msra.mxu0 %v1502
    %1706 = vmatprep.subr.mxu0 0.0
    %1707 = vmatpush1.msra.mxu0 %v1505
    %1708 = vmatprep.subr.mxu0 0.0
    %1709 = vmatpush1.msra.mxu0 %v1508
    %1710 = vmatprep.subr.mxu0 0.0
    %1711 = vmatpush1.msra.mxu0 %v1511
    %1712 = vmatprep.subr.mxu0 0.0
    %1713 = vmatpush1.msra.mxu0 %v1514
    %1714 = vmatprep.subr.mxu0 0.0
    %1715 = vmatpush1.msra.mxu0 %v1517
    %1716 = vmatprep.subr.mxu0 0.0
    %1717 = vmatpush1.msra.mxu0 %v1520
    %1718 = vmatprep.subr.mxu0 0.0
    %1719 = vmatpush1.msra.mxu0 %v1523
    %1720 = vmatprep.subr.mxu0 0.0
    %1721 = vmatpush1.msra.mxu0 %v1526
    %1722 = vmatprep.subr.mxu0 0.0
    %1723 = vmatpush1.msra.mxu0 %v1529
    %1724 = vmatprep.subr.mxu0 0.0
    %1725 = vmatpush1.msra.mxu0 %v1532
    %1726 = vmatprep.subr.mxu0 0.0
    %1727 = vmatpush1.msra.mxu0 0.0
    %1728 = vmatprep.subr.mxu0 0.0
    %1729 = vmatpush1.msra.mxu0 0.0
    %1730 = vmatprep.subr.mxu0 0.0
    %1731 = vmatpush1.msra.mxu0 0.0
    %1732 = vmatprep.subr.mxu0 0.0
    %1733 = vmatpush1.msra.mxu0 0.0
    %1734 = vmatprep.subr.mxu0 0.0
    %1735 = vmatpush1.msra.mxu0 0.0
    %1736 = vmatprep.subr.mxu0 0.0
    %1737 = vmatpush1.msra.mxu0 0.0
    %1738 = vmatprep.subr.mxu0 0.0
    %1739 = vmatpush1.msra.mxu0 0.0
    %1740 = vmatprep.subr.mxu0 0.0
    %1741 = vmatpush1.msra.mxu0 0.0
    %1742 = vmatprep.subr.mxu0 0.0
    %1743 = vmatpush1.msra.mxu0 0.0
    %1744 = vmatprep.subr.mxu0 0.0
    %1745 = vmatpush1.msra.mxu0 0.0
    %1746 = vmatprep.subr.mxu0 0.0
    %1747 = vmatpush1.msra.mxu0 0.0
    %1748 = vmatprep.subr.mxu0 0.0
    %1749 = vmatpush1.msra.mxu0 0.0
    %1750 = vmatprep.subr.mxu0 0.0
    %1751 = vmatpush1.msra.mxu0 0.0
    %1752 = vmatprep.subr.mxu0 0.0
    %1753 = vmatpush1.msra.mxu0 0.0
    %1754 = vmatprep.subr.mxu0 0.0
    %1755 = vmatpush1.msra.mxu0 0.0
    %1756 = vmatprep.subr.mxu0 0.0
    %1757 = vmatpush1.msra.mxu0 0.0
    %1758 = vmatprep.mubr.f32.mxu0 0.0
    %1759 = vmatmul.mubr.f32.gmra.mrb[0].mxu0 %v1469
    %v1760 = vpop.f32.mrb[0].mxu0
    %v1761 = vadd.f32 0.0, %v1760
    %v1762 = vpop.f32.mrb[0].mxu0
    %1763 = vmatprep.mubr.f32.mxu0 0.0
    %1764 = vmatmul.mubr.f32.gmra.mrb[0].mxu0 %v1470
    %v1765 = vpop.f32.mrb[0].mxu0
    %v1766 = vadd.f32 0.0, %v1765
    %v1767 = vpop.f32.mrb[0].mxu0
    %1768 = vmatprep.mubr.f32.mxu0 0.0
    %1769 = vmatmul.mubr.f32.gmra.mrb[0].mxu0 %v1471
    %v1770 = vpop.f32.mrb[0].mxu0
    %v1771 = vadd.f32 0.0, %v1770
    %v1772 = vpop.f32.mrb[0].mxu0
    %1773 = vmatprep.mubr.f32.mxu0 0.0
    %1774 = vmatmul.mubr.f32.gmra.mrb[0].mxu0 %v1472
    %v1775 = vpop.f32.mrb[0].mxu0
    %v1776 = vadd.f32 0.0, %v1775
    %v1777 = vpop.f32.mrb[0].mxu0
    %1778 = vmatprep.mubr.f32.mxu0 0.0
    %1779 = vmatmul.mubr.f32.gmra.mrb[0].mxu0 %v1473
    %v1780 = vpop.f32.mrb[0].mxu0
    %v1781 = vadd.f32 0.0, %v1780
    %v1782 = vpop.f32.mrb[0].mxu0
    %1783 = vmatprep.mubr.f32.mxu0 0.0
    %1784 = vmatmul.mubr.f32.gmra.mrb[0].mxu0 %v1474
    %v1785 = vpop.f32.mrb[0].mxu0
    %v1786 = vadd.f32 0.0, %v1785
    %v1787 = vpop.f32.mrb[0].mxu0
    %1788 = vmatprep.mubr.f32.mxu0 0.0
    %1789 = vmatmul.mubr.f32.gmra.mrb[0].mxu0 %v1475
    %v1790 = vpop.f32.mrb[0].mxu0
    %v1791 = vadd.f32 0.0, %v1790
    %v1792 = vpop.f32.mrb[0].mxu0
    %1793 = vmatprep.mubr.f32.mxu0 0.0
    %1794 = vmatmul.mubr.f32.gmra.mrb[0].mxu0 %v1476
    %v1795 = vpop.f32.mrb[0].mxu0
    %v1796 = vadd.f32 0.0, %v1795
    %v1797 = vpop.f32.mrb[0].mxu0
    %1798 = vmatprep.mubr.f32.mxu0 0.0
    %1799 = vmatmul.mubr.f32.gmra.mrb[0].mxu0 %v1477
    %v1800 = vpop.f32.mrb[0].mxu0
    %v1801 = vadd.f32 0.0, %v1800
    %v1802 = vpop.f32.mrb[0].mxu0
    %1803 = vmatprep.mubr.f32.mxu0 0.0
    %1804 = vmatmul.mubr.f32.gmra.mrb[0].mxu0 %v1478
    %v1805 = vpop.f32.mrb[0].mxu0
    %v1806 = vadd.f32 0.0, %v1805
    %v1807 = vpop.f32.mrb[0].mxu0
    %1808 = vmatprep.mubr.f32.mxu0 0.0
    %1809 = vmatmul.mubr.f32.gmra.mrb[0].mxu0 %v1479
    %v1810 = vpop.f32.mrb[0].mxu0
    %v1811 = vadd.f32 0.0, %v1810
    %v1812 = vpop.f32.mrb[0].mxu0
    %1813 = vmatprep.mubr.f32.mxu0 0.0
    %1814 = vmatmul.mubr.f32.gmra.mrb[0].mxu0 %v1480
    %v1815 = vpop.f32.mrb[0].mxu0
    %v1816 = vadd.f32 0.0, %v1815
    %v1817 = vpop.f32.mrb[0].mxu0
    %1818 = vmatprep.mubr.f32.mxu0 0.0
    %1819 = vmatmul.mubr.f32.gmra.mrb[0].mxu0 %v1481
    %v1820 = vpop.f32.mrb[0].mxu0
    %v1821 = vadd.f32 0.0, %v1820
    %v1822 = vpop.f32.mrb[0].mxu0
    %1823 = vmatprep.mubr.f32.mxu0 0.0
    %1824 = vmatmul.mubr.f32.gmra.mrb[0].mxu0 %v1482
    %v1825 = vpop.f32.mrb[0].mxu0
    %v1826 = vadd.f32 0.0, %v1825
    %v1827 = vpop.f32.mrb[0].mxu0
    %1828 = vmatprep.mubr.f32.mxu0 0.0
    %1829 = vmatmul.mubr.f32.gmra.mrb[0].mxu0 %v1483
    %v1830 = vpop.f32.mrb[0].mxu0
    %v1831 = vadd.f32 0.0, %v1830
    %v1832 = vpop.f32.mrb[0].mxu0
    %1833 = vmatprep.mubr.f32.mxu0 0.0
    %1834 = vmatmul.mubr.f32.gmra.mrb[0].mxu0 %v1484
    %v1835 = vpop.f32.mrb[0].mxu0
    %v1836 = vadd.f32 0.0, %v1835
    %v1837 = vpop.f32.mrb[0].mxu0
    %1838 = vdwg.mxu0
    %v1839 = vld [vmem:[#allocation12] sm:$0xff]
    %v1840 = vld [vmem:[#allocation12 + $0x8] sm:$0xff]
    %v1841 = vld [vmem:[#allocation12 + $0x10] sm:$0xff]
    %v1842 = vld [vmem:[#allocation12 + $0x18] sm:$0xff]
    %v1843 = vld [vmem:[#allocation12 + $0x20] sm:$0xff]
    %v1844 = vld [vmem:[#allocation12 + $0x28] sm:$0xff]
    %v1845 = vld [vmem:[#allocation12 + $0x30] sm:$0xff]
    %v1846 = vld [vmem:[#allocation12 + $0x38] sm:$0xff]
    %v1847 = vld [vmem:[#allocation12 + $0x40] sm:$0xff]
    %v1848 = vld [vmem:[#allocation12 + $0x48] sm:$0xff]
    %v1849 = vld [vmem:[#allocation12 + $0x50] sm:$0xff]
    %v1850 = vld [vmem:[#allocation12 + $0x58] sm:$0xff]
    %v1851 = vld [vmem:[#allocation12 + $0x60] sm:$0xff]
    %v1852 = vld [vmem:[#allocation12 + $0x68] sm:$0xff]
    %v1853 = vld [vmem:[#allocation12 + $0x70] sm:$0xff]
    %v1854 = vld [vmem:[#allocation12 + $0x78] sm:$0xff]
    %v1855 = vmul.f32 %v1600, %v1839
    %v1856 = vmul.f32 %v1606, %v1840
    %v1857 = vmul.f32 %v1612, %v1841
    %v1858 = vmul.f32 %v1618, %v1842
    %v1859 = vmul.f32 %v1624, %v1843
    %v1860 = vmul.f32 %v1630, %v1844
    %v1861 = vmul.f32 %v1636, %v1845
    %v1862 = vmul.f32 %v1642, %v1846
    %v1863 = vmul.f32 %v1648, %v1847
    %v1864 = vmul.f32 %v1654, %v1848
    %v1865 = vmul.f32 %v1660, %v1849
    %v1866 = vmul.f32 %v1666, %v1850
    %v1867 = vmul.f32 %v1672, %v1851
    %v1868 = vmul.f32 %v1678, %v1852
    %v1869 = vmul.f32 %v1684, %v1853
    %v1870 = vmul.f32 %v1690, %v1854
    %v1871 = vld [vmem:[#allocation13] sm:$0xff]
    %v1872 = vld [vmem:[#allocation13 + $0x8] sm:$0xff]
    %v1873 = vld [vmem:[#allocation13 + $0x10] sm:$0xff]
    %v1874 = vld [vmem:[#allocation13 + $0x18] sm:$0xff]
    %v1875 = vld [vmem:[#allocation13 + $0x20] sm:$0xff]
    %v1876 = vld [vmem:[#allocation13 + $0x28] sm:$0xff]
    %v1877 = vld [vmem:[#allocation13 + $0x30] sm:$0xff]
    %v1878 = vld [vmem:[#allocation13 + $0x38] sm:$0xff]
    %v1879 = vld [vmem:[#allocation13 + $0x40] sm:$0xff]
    %v1880 = vld [vmem:[#allocation13 + $0x48] sm:$0xff]
    %v1881 = vld [vmem:[#allocation13 + $0x50] sm:$0xff]
    %v1882 = vld [vmem:[#allocation13 + $0x58] sm:$0xff]
    %v1883 = vld [vmem:[#allocation13 + $0x60] sm:$0xff]
    %v1884 = vld [vmem:[#allocation13 + $0x68] sm:$0xff]
    %v1885 = vld [vmem:[#allocation13 + $0x70] sm:$0xff]
    %v1886 = vld [vmem:[#allocation13 + $0x78] sm:$0xff]
    %1887 = vmatprep.subr.mxu0 0.0
    %1888 = vmatpush1.xpose.msra.mxu0 %v1602
    %1889 = vmatprep.subr.mxu0 0.0
    %1890 = vmatpush1.xpose.msra.mxu0 %v1608
    %1891 = vmatprep.subr.mxu0 0.0
    %1892 = vmatpush1.xpose.msra.mxu0 %v1614
    %1893 = vmatprep.subr.mxu0 0.0
    %1894 = vmatpush1.xpose.msra.mxu0 %v1620
    %1895 = vmatprep.subr.mxu0 0.0
    %1896 = vmatpush1.xpose.msra.mxu0 %v1626
    %1897 = vmatprep.subr.mxu0 0.0
    %1898 = vmatpush1.xpose.msra.mxu0 %v1632
    %1899 = vmatprep.subr.mxu0 0.0
    %1900 = vmatpush1.xpose.msra.mxu0 %v1638
    %1901 = vmatprep.subr.mxu0 0.0
    %1902 = vmatpush1.xpose.msra.mxu0 %v1644
    %1903 = vmatprep.subr.mxu0 0.0
    %1904 = vmatpush1.xpose.msra.mxu0 %v1650
    %1905 = vmatprep.subr.mxu0 0.0
    %1906 = vmatpush1.xpose.msra.mxu0 %v1656
    %1907 = vmatprep.subr.mxu0 0.0
    %1908 = vmatpush1.xpose.msra.mxu0 %v1662
    %1909 = vmatprep.subr.mxu0 0.0
    %1910 = vmatpush1.xpose.msra.mxu0 %v1668
    %1911 = vmatprep.subr.mxu0 0.0
    %1912 = vmatpush1.xpose.msra.mxu0 %v1674
    %1913 = vmatprep.subr.mxu0 0.0
    %1914 = vmatpush1.xpose.msra.mxu0 %v1680
    %1915 = vmatprep.subr.mxu0 0.0
    %1916 = vmatpush1.xpose.msra.mxu0 %v1686
    %1917 = vmatprep.subr.mxu0 0.0
    %1918 = vmatpush1.xpose.msra.mxu0 %v1692
    %1919 = vmatprep.subr.mxu0 0.0
    %1920 = vmatpush1.xpose.msra.mxu0 0.0
    %1921 = vmatprep.subr.mxu0 0.0
    %1922 = vmatpush1.xpose.msra.mxu0 0.0
    %1923 = vmatprep.subr.mxu0 0.0
    %1924 = vmatpush1.xpose.msra.mxu0 0.0
    %1925 = vmatprep.subr.mxu0 0.0
    %1926 = vmatpush1.xpose.msra.mxu0 0.0
    %1927 = vmatprep.subr.mxu0 0.0
    %1928 = vmatpush1.xpose.msra.mxu0 0.0
    %1929 = vmatprep.subr.mxu0 0.0
    %1930 = vmatpush1.xpose.msra.mxu0 0.0
    %1931 = vmatprep.subr.mxu0 0.0
    %1932 = vmatpush1.xpose.msra.mxu0 0.0
    %1933 = vmatprep.subr.mxu0 0.0
    %1934 = vmatpush1.xpose.msra.mxu0 0.0
    %1935 = vmatprep.subr.mxu0 0.0
    %1936 = vmatpush1.xpose.msra.mxu0 0.0
    %1937 = vmatprep.subr.mxu0 0.0
    %1938 = vmatpush1.xpose.msra.mxu0 0.0
    %1939 = vmatprep.subr.mxu0 0.0
    %1940 = vmatpush1.xpose.msra.mxu0 0.0
    %1941 = vmatprep.subr.mxu0 0.0
    %1942 = vmatpush1.xpose.msra.mxu0 0.0
    %1943 = vmatprep.subr.mxu0 0.0
    %1944 = vmatpush1.xpose.msra.mxu0 0.0
    %1945 = vmatprep.subr.mxu0 0.0
    %1946 = vmatpush1.xpose.msra.mxu0 0.0
    %1947 = vmatprep.subr.mxu0 0.0
    %1948 = vmatpush1.xpose.msra.mxu0 0.0
    %1949 = vmatprep.subr.mxu0 0.0
    %1950 = vmatpush1.xpose.msra.mxu0 0.0
    %1951 = vmatprep.mubr.f32.mxu0 0.0
    %1952 = vmatmul.mubr.f32.gmra.mrb[0].mxu0 %v1855
    %v1953 = vpop.f32.mrb[0].mxu0
    %v1954 = vadd.f32 %v1871, %v1953
    %v1955 = vpop.f32.mrb[0].mxu0
    %1956 = vmatprep.mubr.f32.mxu0 0.0
    %1957 = vmatmul.mubr.f32.gmra.mrb[0].mxu0 %v1856
    %v1958 = vpop.f32.mrb[0].mxu0
    %v1959 = vadd.f32 %v1872, %v1958
    %v1960 = vpop.f32.mrb[0].mxu0
    %1961 = vmatprep.mubr.f32.mxu0 0.0
    %1962 = vmatmul.mubr.f32.gmra.mrb[0].mxu0 %v1857
    %v1963 = vpop.f32.mrb[0].mxu0
    %v1964 = vadd.f32 %v1873, %v1963
    %v1965 = vpop.f32.mrb[0].mxu0
    %1966 = vmatprep.mubr.f32.mxu0 0.0
    %1967 = vmatmul.mubr.f32.gmra.mrb[0].mxu0 %v1858
    %v1968 = vpop.f32.mrb[0].mxu0
    %v1969 = vadd.f32 %v1874, %v1968
    %v1970 = vpop.f32.mrb[0].mxu0
    %1971 = vmatprep.mubr.f32.mxu0 0.0
    %1972 = vmatmul.mubr.f32.gmra.mrb[0].mxu0 %v1859
    %v1973 = vpop.f32.mrb[0].mxu0
    %v1974 = vadd.f32 %v1875, %v1973
    %v1975 = vpop.f32.mrb[0].mxu0
    %1976 = vmatprep.mubr.f32.mxu0 0.0
    %1977 = vmatmul.mubr.f32.gmra.mrb[0].mxu0 %v1860
    %v1978 = vpop.f32.mrb[0].mxu0
    %v1979 = vadd.f32 %v1876, %v1978
    %v1980 = vpop.f32.mrb[0].mxu0
    %1981 = vmatprep.mubr.f32.mxu0 0.0
    %1982 = vmatmul.mubr.f32.gmra.mrb[0].mxu0 %v1861
    %v1983 = vpop.f32.mrb[0].mxu0
    %v1984 = vadd.f32 %v1877, %v1983
    %v1985 = vpop.f32.mrb[0].mxu0
    %1986 = vmatprep.mubr.f32.mxu0 0.0
    %1987 = vmatmul.mubr.f32.gmra.mrb[0].mxu0 %v1862
    %v1988 = vpop.f32.mrb[0].mxu0
    %v1989 = vadd.f32 %v1878, %v1988
    %v1990 = vpop.f32.mrb[0].mxu0
    %1991 = vmatprep.mubr.f32.mxu0 0.0
    %1992 = vmatmul.mubr.f32.gmra.mrb[0].mxu0 %v1863
    %v1993 = vpop.f32.mrb[0].mxu0
    %v1994 = vadd.f32 %v1879, %v1993
    %v1995 = vpop.f32.mrb[0].mxu0
    %1996 = vmatprep.mubr.f32.mxu0 0.0
    %1997 = vmatmul.mubr.f32.gmra.mrb[0].mxu0 %v1864
    %v1998 = vpop.f32.mrb[0].mxu0
    %v1999 = vadd.f32 %v1880, %v1998
    %v2000 = vpop.f32.mrb[0].mxu0
    %2001 = vmatprep.mubr.f32.mxu0 0.0
    %2002 = vmatmul.mubr.f32.gmra.mrb[0].mxu0 %v1865
    %v2003 = vpop.f32.mrb[0].mxu0
    %v2004 = vadd.f32 %v1881, %v2003
    %v2005 = vpop.f32.mrb[0].mxu0
    %2006 = vmatprep.mubr.f32.mxu0 0.0
    %2007 = vmatmul.mubr.f32.gmra.mrb[0].mxu0 %v1866
    %v2008 = vpop.f32.mrb[0].mxu0
    %v2009 = vadd.f32 %v1882, %v2008
    %v2010 = vpop.f32.mrb[0].mxu0
    %2011 = vmatprep.mubr.f32.mxu0 0.0
    %2012 = vmatmul.mubr.f32.gmra.mrb[0].mxu0 %v1867
    %v2013 = vpop.f32.mrb[0].mxu0
    %v2014 = vadd.f32 %v1883, %v2013
    %v2015 = vpop.f32.mrb[0].mxu0
    %2016 = vmatprep.mubr.f32.mxu0 0.0
    %2017 = vmatmul.mubr.f32.gmra.mrb[0].mxu0 %v1868
    %v2018 = vpop.f32.mrb[0].mxu0
    %v2019 = vadd.f32 %v1884, %v2018
    %v2020 = vpop.f32.mrb[0].mxu0
    %2021 = vmatprep.mubr.f32.mxu0 0.0
    %2022 = vmatmul.mubr.f32.gmra.mrb[0].mxu0 %v1869
    %v2023 = vpop.f32.mrb[0].mxu0
    %v2024 = vadd.f32 %v1885, %v2023
    %v2025 = vpop.f32.mrb[0].mxu0
    %2026 = vmatprep.mubr.f32.mxu0 0.0
    %2027 = vmatmul.mubr.f32.gmra.mrb[0].mxu0 %v1870
    %v2028 = vpop.f32.mrb[0].mxu0
    %v2029 = vadd.f32 %v1886, %v2028
    %v2030 = vpop.f32.mrb[0].mxu0
    %2031 = vdwg.mxu0
    %2032 = vmax.xlane.f32.xlu0 %v1954
    %v2033 = vpop.xlane.xlu0 %2032
    %2034 = vmax.xlane.f32.xlu0 %v1959
    %v2035 = vpop.xlane.xlu0 %2034
    %2036 = vmax.xlane.f32.xlu0 %v1964
    %v2037 = vpop.xlane.xlu0 %2036
    %2038 = vmax.xlane.f32.xlu0 %v1969
    %v2039 = vpop.xlane.xlu0 %2038
    %2040 = vmax.xlane.f32.xlu0 %v1974
    %v2041 = vpop.xlane.xlu0 %2040
    %2042 = vmax.xlane.f32.xlu0 %v1979
    %v2043 = vpop.xlane.xlu0 %2042
    %2044 = vmax.xlane.f32.xlu0 %v1984
    %v2045 = vpop.xlane.xlu0 %2044
    %2046 = vmax.xlane.f32.xlu0 %v1989
    %v2047 = vpop.xlane.xlu0 %2046
    %2048 = vmax.xlane.f32.xlu0 %v1994
    %v2049 = vpop.xlane.xlu0 %2048
    %2050 = vmax.xlane.f32.xlu0 %v1999
    %v2051 = vpop.xlane.xlu0 %2050
    %2052 = vmax.xlane.f32.xlu0 %v2004
    %v2053 = vpop.xlane.xlu0 %2052
    %2054 = vmax.xlane.f32.xlu0 %v2009
    %v2055 = vpop.xlane.xlu0 %2054
    %2056 = vmax.xlane.f32.xlu0 %v2014
    %v2057 = vpop.xlane.xlu0 %2056
    %2058 = vmax.xlane.f32.xlu0 %v2019
    %v2059 = vpop.xlane.xlu0 %2058
    %2060 = vmax.xlane.f32.xlu0 %v2024
    %v2061 = vpop.xlane.xlu0 %2060
    %2062 = vmax.xlane.f32.xlu0 %v2029
    %v2063 = vpop.xlane.xlu0 %2062
    %v2064 = vsub.f32 %v1954, %v2033
    %v2065 = vsub.f32 %v1959, %v2035
    %v2066 = vsub.f32 %v1964, %v2037
    %v2067 = vsub.f32 %v1969, %v2039
    %v2068 = vsub.f32 %v1974, %v2041
    %v2069 = vsub.f32 %v1979, %v2043
    %v2070 = vsub.f32 %v1984, %v2045
    %v2071 = vsub.f32 %v1989, %v2047
    %v2072 = vsub.f32 %v1994, %v2049
    %v2073 = vsub.f32 %v1999, %v2051
    %v2074 = vsub.f32 %v2004, %v2053
    %v2075 = vsub.f32 %v2009, %v2055
    %v2076 = vsub.f32 %v2014, %v2057
    %v2077 = vsub.f32 %v2019, %v2059
    %v2078 = vsub.f32 %v2024, %v2061
    %v2079 = vsub.f32 %v2029, %v2063
    %v2080 = vmul.f32 %v2064, 1.442695
    %v2081 = vpow.pop %v2080
    %v2082 = vmul.f32 %v2065, 1.442695
    %v2083 = vpow.pop %v2082
    %v2084 = vmul.f32 %v2066, 1.442695
    %v2085 = vpow.pop %v2084
    %v2086 = vmul.f32 %v2067, 1.442695
    %v2087 = vpow.pop %v2086
    %v2088 = vmul.f32 %v2068, 1.442695
    %v2089 = vpow.pop %v2088
    %v2090 = vmul.f32 %v2069, 1.442695
    %v2091 = vpow.pop %v2090
    %v2092 = vmul.f32 %v2070, 1.442695
    %v2093 = vpow.pop %v2092
    %v2094 = vmul.f32 %v2071, 1.442695
    %v2095 = vpow.pop %v2094
    %v2096 = vmul.f32 %v2072, 1.442695
    %v2097 = vpow.pop %v2096
    %v2098 = vmul.f32 %v2073, 1.442695
    %v2099 = vpow.pop %v2098
    %v2100 = vmul.f32 %v2074, 1.442695
    %v2101 = vpow.pop %v2100
    %v2102 = vmul.f32 %v2075, 1.442695
    %v2103 = vpow.pop %v2102
    %v2104 = vmul.f32 %v2076, 1.442695
    %v2105 = vpow.pop %v2104
    %v2106 = vmul.f32 %v2077, 1.442695
    %v2107 = vpow.pop %v2106
    %v2108 = vmul.f32 %v2078, 1.442695
    %v2109 = vpow.pop %v2108
    %v2110 = vmul.f32 %v2079, 1.442695
    %v2111 = vpow.pop %v2110
    %2112 = vadd.xlane.f32.xlu0 %v2081
    %v2113 = vpop.xlane.xlu0 %2112
    %2114 = vadd.xlane.f32.xlu0 %v2083
    %v2115 = vpop.xlane.xlu0 %2114
    %2116 = vadd.xlane.f32.xlu0 %v2085
    %v2117 = vpop.xlane.xlu0 %2116
    %2118 = vadd.xlane.f32.xlu0 %v2087
    %v2119 = vpop.xlane.xlu0 %2118
    %2120 = vadd.xlane.f32.xlu0 %v2089
    %v2121 = vpop.xlane.xlu0 %2120
    %2122 = vadd.xlane.f32.xlu0 %v2091
    %v2123 = vpop.xlane.xlu0 %2122
    %2124 = vadd.xlane.f32.xlu0 %v2093
    %v2125 = vpop.xlane.xlu0 %2124
    %2126 = vadd.xlane.f32.xlu0 %v2095
    %v2127 = vpop.xlane.xlu0 %2126
    %2128 = vadd.xlane.f32.xlu0 %v2097
    %v2129 = vpop.xlane.xlu0 %2128
    %2130 = vadd.xlane.f32.xlu0 %v2099
    %v2131 = vpop.xlane.xlu0 %2130
    %2132 = vadd.xlane.f32.xlu0 %v2101
    %v2133 = vpop.xlane.xlu0 %2132
    %2134 = vadd.xlane.f32.xlu0 %v2103
    %v2135 = vpop.xlane.xlu0 %2134
    %2136 = vadd.xlane.f32.xlu0 %v2105
    %v2137 = vpop.xlane.xlu0 %2136
    %2138 = vadd.xlane.f32.xlu0 %v2107
    %v2139 = vpop.xlane.xlu0 %2138
    %2140 = vadd.xlane.f32.xlu0 %v2109
    %v2141 = vpop.xlane.xlu0 %2140
    %2142 = vadd.xlane.f32.xlu0 %v2111
    %v2143 = vpop.xlane.xlu0 %2142
    %v2144 = vrcp.pop %v2113
    %v2145 = vrcp.pop %v2115
    %v2146 = vrcp.pop %v2117
    %v2147 = vrcp.pop %v2119
    %v2148 = vrcp.pop %v2121
    %v2149 = vrcp.pop %v2123
    %v2150 = vrcp.pop %v2125
    %v2151 = vrcp.pop %v2127
    %v2152 = vrcp.pop %v2129
    %v2153 = vrcp.pop %v2131
    %v2154 = vrcp.pop %v2133
    %v2155 = vrcp.pop %v2135
    %v2156 = vrcp.pop %v2137
    %v2157 = vrcp.pop %v2139
    %v2158 = vrcp.pop %v2141
    %v2159 = vrcp.pop %v2143
    %v2160 = vmul.f32 %v2081, %v2144
    %v2161 = vmul.f32 %v2083, %v2145
    %v2162 = vmul.f32 %v2085, %v2146
    %v2163 = vmul.f32 %v2087, %v2147
    %v2164 = vmul.f32 %v2089, %v2148
    %v2165 = vmul.f32 %v2091, %v2149
    %v2166 = vmul.f32 %v2093, %v2150
    %v2167 = vmul.f32 %v2095, %v2151
    %v2168 = vmul.f32 %v2097, %v2152
    %v2169 = vmul.f32 %v2099, %v2153
    %v2170 = vmul.f32 %v2101, %v2154
    %v2171 = vmul.f32 %v2103, %v2155
    %v2172 = vmul.f32 %v2105, %v2156
    %v2173 = vmul.f32 %v2107, %v2157
    %v2174 = vmul.f32 %v2109, %v2158
    %v2175 = vmul.f32 %v2111, %v2159
    %2176 = vmatprep.subr.mxu0 0.0
    %2177 = vmatpush1.msra.mxu0 %v1761
    %2178 = vmatprep.subr.mxu0 0.0
    %2179 = vmatpush1.msra.mxu0 %v1766
    %2180 = vmatprep.subr.mxu0 0.0
    %2181 = vmatpush1.msra.mxu0 %v1771
    %2182 = vmatprep.subr.mxu0 0.0
    %2183 = vmatpush1.msra.mxu0 %v1776
    %2184 = vmatprep.subr.mxu0 0.0
    %2185 = vmatpush1.msra.mxu0 %v1781
    %2186 = vmatprep.subr.mxu0 0.0
    %2187 = vmatpush1.msra.mxu0 %v1786
    %2188 = vmatprep.subr.mxu0 0.0
    %2189 = vmatpush1.msra.mxu0 %v1791
    %2190 = vmatprep.subr.mxu0 0.0
    %2191 = vmatpush1.msra.mxu0 %v1796
    %2192 = vmatprep.subr.mxu0 0.0
    %2193 = vmatpush1.msra.mxu0 %v1801
    %2194 = vmatprep.subr.mxu0 0.0
    %2195 = vmatpush1.msra.mxu0 %v1806
    %2196 = vmatprep.subr.mxu0 0.0
    %2197 = vmatpush1.msra.mxu0 %v1811
    %2198 = vmatprep.subr.mxu0 0.0
    %2199 = vmatpush1.msra.mxu0 %v1816
    %2200 = vmatprep.subr.mxu0 0.0
    %2201 = vmatpush1.msra.mxu0 %v1821
    %2202 = vmatprep.subr.mxu0 0.0
    %2203 = vmatpush1.msra.mxu0 %v1826
    %2204 = vmatprep.subr.mxu0 0.0
    %2205 = vmatpush1.msra.mxu0 %v1831
    %2206 = vmatprep.subr.mxu0 0.0
    %2207 = vmatpush1.msra.mxu0 %v1836
    %2208 = vmatprep.subr.mxu0 0.0
    %2209 = vmatpush1.msra.mxu0 0.0
    %2210 = vmatprep.subr.mxu0 0.0
    %2211 = vmatpush1.msra.mxu0 0.0
    %2212 = vmatprep.subr.mxu0 0.0
    %2213 = vmatpush1.msra.mxu0 0.0
    %2214 = vmatprep.subr.mxu0 0.0
    %2215 = vmatpush1.msra.mxu0 0.0
    %2216 = vmatprep.subr.mxu0 0.0
    %2217 = vmatpush1.msra.mxu0 0.0
    %2218 = vmatprep.subr.mxu0 0.0
    %2219 = vmatpush1.msra.mxu0 0.0
    %2220 = vmatprep.subr.mxu0 0.0
    %2221 = vmatpush1.msra.mxu0 0.0
    %2222 = vmatprep.subr.mxu0 0.0
    %2223 = vmatpush1.msra.mxu0 0.0
    %2224 = vmatprep.subr.mxu0 0.0
    %2225 = vmatpush1.msra.mxu0 0.0
    %2226 = vmatprep.subr.mxu0 0.0
    %2227 = vmatpush1.msra.mxu0 0.0
    %2228 = vmatprep.subr.mxu0 0.0
    %2229 = vmatpush1.msra.mxu0 0.0
    %2230 = vmatprep.subr.mxu0 0.0
    %2231 = vmatpush1.msra.mxu0 0.0
    %2232 = vmatprep.subr.mxu0 0.0
    %2233 = vmatpush1.msra.mxu0 0.0
    %2234 = vmatprep.subr.mxu0 0.0
    %2235 = vmatpush1.msra.mxu0 0.0
    %2236 = vmatprep.subr.mxu0 0.0
    %2237 = vmatpush1.msra.mxu0 0.0
    %2238 = vmatprep.subr.mxu0 0.0
    %2239 = vmatpush1.msra.mxu0 0.0
    %2240 = vmatprep.mubr.f32.mxu0 0.0
    %2241 = vmatmul.mubr.f32.gmra.mrb[0].mxu0 %v2160
    %v2242 = vpop.f32.mrb[0].mxu0
    %v2243 = vadd.f32 0.0, %v2242
    %v2244 = vpop.f32.mrb[0].mxu0
    %2245 = vmatprep.mubr.f32.mxu0 0.0
    %2246 = vmatmul.mubr.f32.gmra.mrb[0].mxu0 %v2161
    %v2247 = vpop.f32.mrb[0].mxu0
    %v2248 = vadd.f32 0.0, %v2247
    %v2249 = vpop.f32.mrb[0].mxu0
    %2250 = vmatprep.mubr.f32.mxu0 0.0
    %2251 = vmatmul.mubr.f32.gmra.mrb[0].mxu0 %v2162
    %v2252 = vpop.f32.mrb[0].mxu0
    %v2253 = vadd.f32 0.0, %v2252
    %v2254 = vpop.f32.mrb[0].mxu0
    %2255 = vmatprep.mubr.f32.mxu0 0.0
    %2256 = vmatmul.mubr.f32.gmra.mrb[0].mxu0 %v2163
    %v2257 = vpop.f32.mrb[0].mxu0
    %v2258 = vadd.f32 0.0, %v2257
    %v2259 = vpop.f32.mrb[0].mxu0
    %2260 = vmatprep.mubr.f32.mxu0 0.0
    %2261 = vmatmul.mubr.f32.gmra.mrb[0].mxu0 %v2164
    %v2262 = vpop.f32.mrb[0].mxu0
    %v2263 = vadd.f32 0.0, %v2262
    %v2264 = vpop.f32.mrb[0].mxu0
    %2265 = vmatprep.mubr.f32.mxu0 0.0
    %2266 = vmatmul.mubr.f32.gmra.mrb[0].mxu0 %v2165
    %v2267 = vpop.f32.mrb[0].mxu0
    %v2268 = vadd.f32 0.0, %v2267
    %v2269 = vpop.f32.mrb[0].mxu0
    %2270 = vmatprep.mubr.f32.mxu0 0.0
    %2271 = vmatmul.mubr.f32.gmra.mrb[0].mxu0 %v2166
    %v2272 = vpop.f32.mrb[0].mxu0
    %v2273 = vadd.f32 0.0, %v2272
    %v2274 = vpop.f32.mrb[0].mxu0
    %2275 = vmatprep.mubr.f32.mxu0 0.0
    %2276 = vmatmul.mubr.f32.gmra.mrb[0].mxu0 %v2167
    %v2277 = vpop.f32.mrb[0].mxu0
    %v2278 = vadd.f32 0.0, %v2277
    %v2279 = vpop.f32.mrb[0].mxu0
    %2280 = vmatprep.mubr.f32.mxu0 0.0
    %2281 = vmatmul.mubr.f32.gmra.mrb[0].mxu0 %v2168
    %v2282 = vpop.f32.mrb[0].mxu0
    %v2283 = vadd.f32 0.0, %v2282
    %v2284 = vpop.f32.mrb[0].mxu0
    %2285 = vmatprep.mubr.f32.mxu0 0.0
    %2286 = vmatmul.mubr.f32.gmra.mrb[0].mxu0 %v2169
    %v2287 = vpop.f32.mrb[0].mxu0
    %v2288 = vadd.f32 0.0, %v2287
    %v2289 = vpop.f32.mrb[0].mxu0
    %2290 = vmatprep.mubr.f32.mxu0 0.0
    %2291 = vmatmul.mubr.f32.gmra.mrb[0].mxu0 %v2170
    %v2292 = vpop.f32.mrb[0].mxu0
    %v2293 = vadd.f32 0.0, %v2292
    %v2294 = vpop.f32.mrb[0].mxu0
    %2295 = vmatprep.mubr.f32.mxu0 0.0
    %2296 = vmatmul.mubr.f32.gmra.mrb[0].mxu0 %v2171
    %v2297 = vpop.f32.mrb[0].mxu0
    %v2298 = vadd.f32 0.0, %v2297
    %v2299 = vpop.f32.mrb[0].mxu0
    %2300 = vmatprep.mubr.f32.mxu0 0.0
    %2301 = vmatmul.mubr.f32.gmra.mrb[0].mxu0 %v2172
    %v2302 = vpop.f32.mrb[0].mxu0
    %v2303 = vadd.f32 0.0, %v2302
    %v2304 = vpop.f32.mrb[0].mxu0
    %2305 = vmatprep.mubr.f32.mxu0 0.0
    %2306 = vmatmul.mubr.f32.gmra.mrb[0].mxu0 %v2173
    %v2307 = vpop.f32.mrb[0].mxu0
    %v2308 = vadd.f32 0.0, %v2307
    %v2309 = vpop.f32.mrb[0].mxu0
    %2310 = vmatprep.mubr.f32.mxu0 0.0
    %2311 = vmatmul.mubr.f32.gmra.mrb[0].mxu0 %v2174
    %v2312 = vpop.f32.mrb[0].mxu0
    %v2313 = vadd.f32 0.0, %v2312
    %v2314 = vpop.f32.mrb[0].mxu0
    %2315 = vmatprep.mubr.f32.mxu0 0.0
    %2316 = vmatmul.mubr.f32.gmra.mrb[0].mxu0 %v2175
    %v2317 = vpop.f32.mrb[0].mxu0
    %v2318 = vadd.f32 0.0, %v2317
    %v2319 = vpop.f32.mrb[0].mxu0
    %2320 = vdwg.mxu0
    %v2321 = vld [vmem:[#allocation15] sm:$0xff]
    %v2322 = vld [vmem:[#allocation15 + $0x8] sm:$0xff]
    %v2323 = vld [vmem:[#allocation15 + $0x10] sm:$0xff]
    %v2324 = vld [vmem:[#allocation15 + $0x18] sm:$0xff]
    %v2325 = vld [vmem:[#allocation15 + $0x20] sm:$0xff]
    %v2326 = vld [vmem:[#allocation15 + $0x28] sm:$0xff]
    %v2327 = vld [vmem:[#allocation15 + $0x30] sm:$0xff]
    %v2328 = vld [vmem:[#allocation15 + $0x38] sm:$0xff]
    %v2329 = vld [vmem:[#allocation15 + $0x40] sm:$0xff]
    %v2330 = vld [vmem:[#allocation15 + $0x48] sm:$0xff]
    %v2331 = vld [vmem:[#allocation15 + $0x50] sm:$0xff]
    %v2332 = vld [vmem:[#allocation15 + $0x58] sm:$0xff]
    %v2333 = vld [vmem:[#allocation15 + $0x60] sm:$0xff]
    %v2334 = vld [vmem:[#allocation15 + $0x68] sm:$0xff]
    %v2335 = vld [vmem:[#allocation15 + $0x70] sm:$0xff]
    %v2336 = vld [vmem:[#allocation15 + $0x78] sm:$0xff]
    %v2337 = vmul.f32 %v2243, %v2321
    %v2338 = vmul.f32 %v2248, %v2322
    %v2339 = vmul.f32 %v2253, %v2323
    %v2340 = vmul.f32 %v2258, %v2324
    %v2341 = vmul.f32 %v2263, %v2325
    %v2342 = vmul.f32 %v2268, %v2326
    %v2343 = vmul.f32 %v2273, %v2327
    %v2344 = vmul.f32 %v2278, %v2328
    %v2345 = vmul.f32 %v2283, %v2329
    %v2346 = vmul.f32 %v2288, %v2330
    %v2347 = vmul.f32 %v2293, %v2331
    %v2348 = vmul.f32 %v2298, %v2332
    %v2349 = vmul.f32 %v2303, %v2333
    %v2350 = vmul.f32 %v2308, %v2334
    %v2351 = vmul.f32 %v2313, %v2335
    %v2352 = vmul.f32 %v2318, %v2336
    %v2353 = vld [vmem:[#allocation16] sm:$0xff]
    %v2354 = vld [vmem:[#allocation16 + $0x8] sm:$0xff]
    %v2355 = vld [vmem:[#allocation16 + $0x10] sm:$0xff]
    %v2356 = vld [vmem:[#allocation16 + $0x18] sm:$0xff]
    %v2357 = vld [vmem:[#allocation16 + $0x20] sm:$0xff]
    %v2358 = vld [vmem:[#allocation16 + $0x28] sm:$0xff]
    %v2359 = vld [vmem:[#allocation16 + $0x30] sm:$0xff]
    %v2360 = vld [vmem:[#allocation16 + $0x38] sm:$0xff]
    %v2361 = vld [vmem:[#allocation16 + $0x40] sm:$0xff]
    %v2362 = vld [vmem:[#allocation16 + $0x48] sm:$0xff]
    %v2363 = vld [vmem:[#allocation16 + $0x50] sm:$0xff]
    %v2364 = vld [vmem:[#allocation16 + $0x58] sm:$0xff]
    %v2365 = vld [vmem:[#allocation16 + $0x60] sm:$0xff]
    %v2366 = vld [vmem:[#allocation16 + $0x68] sm:$0xff]
    %v2367 = vld [vmem:[#allocation16 + $0x70] sm:$0xff]
    %v2368 = vld [vmem:[#allocation16 + $0x78] sm:$0xff]
    %2369 = vmatprep.subr.mxu0 0.0
    %2370 = vmatpush1.msra.mxu0 %v2353
    %2371 = vmatprep.subr.mxu0 0.0
    %2372 = vmatpush1.msra.mxu0 %v2354
    %2373 = vmatprep.subr.mxu0 0.0
    %2374 = vmatpush1.msra.mxu0 %v2355
    %2375 = vmatprep.subr.mxu0 0.0
    %2376 = vmatpush1.msra.mxu0 %v2356
    %2377 = vmatprep.subr.mxu0 0.0
    %2378 = vmatpush1.msra.mxu0 %v2357
    %2379 = vmatprep.subr.mxu0 0.0
    %2380 = vmatpush1.msra.mxu0 %v2358
    %2381 = vmatprep.subr.mxu0 0.0
    %2382 = vmatpush1.msra.mxu0 %v2359
    %2383 = vmatprep.subr.mxu0 0.0
    %2384 = vmatpush1.msra.mxu0 %v2360
    %2385 = vmatprep.subr.mxu0 0.0
    %2386 = vmatpush1.msra.mxu0 %v2361
    %2387 = vmatprep.subr.mxu0 0.0
    %2388 = vmatpush1.msra.mxu0 %v2362
    %2389 = vmatprep.subr.mxu0 0.0
    %2390 = vmatpush1.msra.mxu0 %v2363
    %2391 = vmatprep.subr.mxu0 0.0
    %2392 = vmatpush1.msra.mxu0 %v2364
    %2393 = vmatprep.subr.mxu0 0.0
    %2394 = vmatpush1.msra.mxu0 %v2365
    %2395 = vmatprep.subr.mxu0 0.0
    %2396 = vmatpush1.msra.mxu0 %v2366
    %2397 = vmatprep.subr.mxu0 0.0
    %2398 = vmatpush1.msra.mxu0 %v2367
    %2399 = vmatprep.subr.mxu0 0.0
    %2400 = vmatpush1.msra.mxu0 %v2368
    %2401 = vmatprep.subr.mxu0 0.0
    %2402 = vmatpush1.msra.mxu0 0.0
    %2403 = vmatprep.subr.mxu0 0.0
    %2404 = vmatpush1.msra.mxu0 0.0
    %2405 = vmatprep.subr.mxu0 0.0
    %2406 = vmatpush1.msra.mxu0 0.0
    %2407 = vmatprep.subr.mxu0 0.0
    %2408 = vmatpush1.msra.mxu0 0.0
    %2409 = vmatprep.subr.mxu0 0.0
    %2410 = vmatpush1.msra.mxu0 0.0
    %2411 = vmatprep.subr.mxu0 0.0
    %2412 = vmatpush1.msra.mxu0 0.0
    %2413 = vmatprep.subr.mxu0 0.0
    %2414 = vmatpush1.msra.mxu0 0.0
    %2415 = vmatprep.subr.mxu0 0.0
    %2416 = vmatpush1.msra.mxu0 0.0
    %2417 = vmatprep.subr.mxu0 0.0
    %2418 = vmatpush1.msra.mxu0 0.0
    %2419 = vmatprep.subr.mxu0 0.0
    %2420 = vmatpush1.msra.mxu0 0.0
    %2421 = vmatprep.subr.mxu0 0.0
    %2422 = vmatpush1.msra.mxu0 0.0
    %2423 = vmatprep.subr.mxu0 0.0
    %2424 = vmatpush1.msra.mxu0 0.0
    %2425 = vmatprep.subr.mxu0 0.0
    %2426 = vmatpush1.msra.mxu0 0.0
    %2427 = vmatprep.subr.mxu0 0.0
    %2428 = vmatpush1.msra.mxu0 0.0
    %2429 = vmatprep.subr.mxu0 0.0
    %2430 = vmatpush1.msra.mxu0 0.0
    %2431 = vmatprep.subr.mxu0 0.0
    %2432 = vmatpush1.msra.mxu0 0.0
    %2433 = vmatprep.mubr.f32.mxu0 0.0
    %2434 = vmatmul.mubr.f32.gmra.mrb[0].mxu0 %v2337
    %v2435 = vpop.f32.mrb[0].mxu0
    %v2436 = vadd.f32 0.0, %v2435
    %v2437 = vpop.f32.mrb[0].mxu0
    %2438 = vmatprep.mubr.f32.mxu0 0.0
    %2439 = vmatmul.mubr.f32.gmra.mrb[0].mxu0 %v2338
    %v2440 = vpop.f32.mrb[0].mxu0
    %v2441 = vadd.f32 0.0, %v2440
    %v2442 = vpop.f32.mrb[0].mxu0
    %2443 = vmatprep.mubr.f32.mxu0 0.0
    %2444 = vmatmul.mubr.f32.gmra.mrb[0].mxu0 %v2339
    %v2445 = vpop.f32.mrb[0].mxu0
    %v2446 = vadd.f32 0.0, %v2445
    %v2447 = vpop.f32.mrb[0].mxu0
    %2448 = vmatprep.mubr.f32.mxu0 0.0
    %2449 = vmatmul.mubr.f32.gmra.mrb[0].mxu0 %v2340
    %v2450 = vpop.f32.mrb[0].mxu0
    %v2451 = vadd.f32 0.0, %v2450
    %v2452 = vpop.f32.mrb[0].mxu0
    %2453 = vmatprep.mubr.f32.mxu0 0.0
    %2454 = vmatmul.mubr.f32.gmra.mrb[0].mxu0 %v2341
    %v2455 = vpop.f32.mrb[0].mxu0
    %v2456 = vadd.f32 0.0, %v2455
    %v2457 = vpop.f32.mrb[0].mxu0
    %2458 = vmatprep.mubr.f32.mxu0 0.0
    %2459 = vmatmul.mubr.f32.gmra.mrb[0].mxu0 %v2342
    %v2460 = vpop.f32.mrb[0].mxu0
    %v2461 = vadd.f32 0.0, %v2460
    %v2462 = vpop.f32.mrb[0].mxu0
    %2463 = vmatprep.mubr.f32.mxu0 0.0
    %2464 = vmatmul.mubr.f32.gmra.mrb[0].mxu0 %v2343
    %v2465 = vpop.f32.mrb[0].mxu0
    %v2466 = vadd.f32 0.0, %v2465
    %v2467 = vpop.f32.mrb[0].mxu0
    %2468 = vmatprep.mubr.f32.mxu0 0.0
    %2469 = vmatmul.mubr.f32.gmra.mrb[0].mxu0 %v2344
    %v2470 = vpop.f32.mrb[0].mxu0
    %v2471 = vadd.f32 0.0, %v2470
    %v2472 = vpop.f32.mrb[0].mxu0
    %2473 = vmatprep.mubr.f32.mxu0 0.0
    %2474 = vmatmul.mubr.f32.gmra.mrb[0].mxu0 %v2345
    %v2475 = vpop.f32.mrb[0].mxu0
    %v2476 = vadd.f32 0.0, %v2475
    %v2477 = vpop.f32.mrb[0].mxu0
    %2478 = vmatprep.mubr.f32.mxu0 0.0
    %2479 = vmatmul.mubr.f32.gmra.mrb[0].mxu0 %v2346
    %v2480 = vpop.f32.mrb[0].mxu0
    %v2481 = vadd.f32 0.0, %v2480
    %v2482 = vpop.f32.mrb[0].mxu0
    %2483 = vmatprep.mubr.f32.mxu0 0.0
    %2484 = vmatmul.mubr.f32.gmra.mrb[0].mxu0 %v2347
    %v2485 = vpop.f32.mrb[0].mxu0
    %v2486 = vadd.f32 0.0, %v2485
    %v2487 = vpop.f32.mrb[0].mxu0
    %2488 = vmatprep.mubr.f32.mxu0 0.0
    %2489 = vmatmul.mubr.f32.gmra.mrb[0].mxu0 %v2348
    %v2490 = vpop.f32.mrb[0].mxu0
    %v2491 = vadd.f32 0.0, %v2490
    %v2492 = vpop.f32.mrb[0].mxu0
    %2493 = vmatprep.mubr.f32.mxu0 0.0
    %2494 = vmatmul.mubr.f32.gmra.mrb[0].mxu0 %v2349
    %v2495 = vpop.f32.mrb[0].mxu0
    %v2496 = vadd.f32 0.0, %v2495
    %v2497 = vpop.f32.mrb[0].mxu0
    %2498 = vmatprep.mubr.f32.mxu0 0.0
    %2499 = vmatmul.mubr.f32.gmra.mrb[0].mxu0 %v2350
    %v2500 = vpop.f32.mrb[0].mxu0
    %v2501 = vadd.f32 0.0, %v2500
    %v2502 = vpop.f32.mrb[0].mxu0
    %2503 = vmatprep.mubr.f32.mxu0 0.0
    %2504 = vmatmul.mubr.f32.gmra.mrb[0].mxu0 %v2351
    %v2505 = vpop.f32.mrb[0].mxu0
    %v2506 = vadd.f32 0.0, %v2505
    %v2507 = vpop.f32.mrb[0].mxu0
    %2508 = vmatprep.mubr.f32.mxu0 0.0
    %2509 = vmatmul.mubr.f32.gmra.mrb[0].mxu0 %v2352
    %v2510 = vpop.f32.mrb[0].mxu0
    %v2511 = vadd.f32 0.0, %v2510
    %v2512 = vpop.f32.mrb[0].mxu0
    %2513 = vdwg.mxu0
    %v2514 = vmul.f32 %v2436, %v1453
    %v2515 = vmul.f32 %v2441, %v1454
    %v2516 = vmul.f32 %v2446, %v1455
    %v2517 = vmul.f32 %v2451, %v1456
    %v2518 = vmul.f32 %v2456, %v1457
    %v2519 = vmul.f32 %v2461, %v1458
    %v2520 = vmul.f32 %v2466, %v1459
    %v2521 = vmul.f32 %v2471, %v1460
    %v2522 = vmul.f32 %v2476, %v1461
    %v2523 = vmul.f32 %v2481, %v1462
    %v2524 = vmul.f32 %v2486, %v1463
    %v2525 = vmul.f32 %v2491, %v1464
    %v2526 = vmul.f32 %v2496, %v1465
    %v2527 = vmul.f32 %v2501, %v1466
    %v2528 = vmul.f32 %v2506, %v1467
    %v2529 = vmul.f32 %v2511, %v1468
    %v2530 = vld [vmem:[%s12] sm:$0xff]
    %2531 = vmatprep.subr.mxu0 0.0
    %2532 = vmatpush1.msra.mxu0 %v2514
    %2533 = vmatprep.subr.mxu0 0.0
    %2534 = vmatpush1.msra.mxu0 %v2515
    %2535 = vmatprep.subr.mxu0 0.0
    %2536 = vmatpush1.msra.mxu0 %v2516
    %2537 = vmatprep.subr.mxu0 0.0
    %2538 = vmatpush1.msra.mxu0 %v2517
    %2539 = vmatprep.subr.mxu0 0.0
    %2540 = vmatpush1.msra.mxu0 %v2518
    %2541 = vmatprep.subr.mxu0 0.0
    %2542 = vmatpush1.msra.mxu0 %v2519
    %2543 = vmatprep.subr.mxu0 0.0
    %2544 = vmatpush1.msra.mxu0 %v2520
    %2545 = vmatprep.subr.mxu0 0.0
    %2546 = vmatpush1.msra.mxu0 %v2521
    %2547 = vmatprep.subr.mxu0 0.0
    %2548 = vmatpush1.msra.mxu0 %v2522
    %2549 = vmatprep.subr.mxu0 0.0
    %2550 = vmatpush1.msra.mxu0 %v2523
    %2551 = vmatprep.subr.mxu0 0.0
    %2552 = vmatpush1.msra.mxu0 %v2524
    %2553 = vmatprep.subr.mxu0 0.0
    %2554 = vmatpush1.msra.mxu0 %v2525
    %2555 = vmatprep.subr.mxu0 0.0
    %2556 = vmatpush1.msra.mxu0 %v2526
    %2557 = vmatprep.subr.mxu0 0.0
    %2558 = vmatpush1.msra.mxu0 %v2527
    %2559 = vmatprep.subr.mxu0 0.0
    %2560 = vmatpush1.msra.mxu0 %v2528
    %2561 = vmatprep.subr.mxu0 0.0
    %2562 = vmatpush1.msra.mxu0 %v2529
    %2563 = vmatprep.subr.mxu0 0.0
    %2564 = vmatpush1.msra.mxu0 0.0
    %2565 = vmatprep.subr.mxu0 0.0
    %2566 = vmatpush1.msra.mxu0 0.0
    %2567 = vmatprep.subr.mxu0 0.0
    %2568 = vmatpush1.msra.mxu0 0.0
    %2569 = vmatprep.subr.mxu0 0.0
    %2570 = vmatpush1.msra.mxu0 0.0
    %2571 = vmatprep.subr.mxu0 0.0
    %2572 = vmatpush1.msra.mxu0 0.0
    %2573 = vmatprep.subr.mxu0 0.0
    %2574 = vmatpush1.msra.mxu0 0.0
    %2575 = vmatprep.subr.mxu0 0.0
    %2576 = vmatpush1.msra.mxu0 0.0
    %2577 = vmatprep.subr.mxu0 0.0
    %2578 = vmatpush1.msra.mxu0 0.0
    %2579 = vmatprep.subr.mxu0 0.0
    %2580 = vmatpush1.msra.mxu0 0.0
    %2581 = vmatprep.subr.mxu0 0.0
    %2582 = vmatpush1.msra.mxu0 0.0
    %2583 = vmatprep.subr.mxu0 0.0
    %2584 = vmatpush1.msra.mxu0 0.0
    %2585 = vmatprep.subr.mxu0 0.0
    %2586 = vmatpush1.msra.mxu0 0.0
    %2587 = vmatprep.subr.mxu0 0.0
    %2588 = vmatpush1.msra.mxu0 0.0
    %2589 = vmatprep.subr.mxu0 0.0
    %2590 = vmatpush1.msra.mxu0 0.0
    %2591 = vmatprep.subr.mxu0 0.0
    %2592 = vmatpush1.msra.mxu0 0.0
    %2593 = vmatprep.subr.mxu0 0.0
    %2594 = vmatpush1.msra.mxu0 0.0
    %2595 = vmatprep.mubr.f32.mxu0 0.0
    %2596 = vmatmul.mubr.f32.gmra.mrb[0].mxu0 %v2530
    %v2597 = vpop.f32.mrb[0].mxu0
    %v2598 = vadd.f32 0.0, %v2597
    %v2599 = vpop.f32.mrb[0].mxu0
    %2600 = vdwg.mxu0
    %v2601 = vadd.f32 %v1242, %v2598
    %v2602 = vmul.f32 %v914, %v2601
    %v2603 = vsub.f32 1.0, %v914
    %v2604 = vmul.f32 %v2603, %v193
    %v2605 = vadd.f32 %v2602, %v2604
    %2606 = vst [vmem:[%s19] sm:$0xff] %v2605
    %2607 = vst [vmem:[%s20] sm:$0xff] %v914
    // Predicated region
    $region118: #{sparse_rim_cell_forward.1} parent=1 // pred_check
      _
    $region119: #{sparse_rim_cell_forward.1} parent=1 // pred_check_branch
      %2609 = sbr.rel (0) target = $region121
    $region120: #{sparse_rim_cell_forward.1} parent=1 // pred_region
      _
    $region121: #{sparse_rim_cell_forward.1} parent=1 // pred_fallthru
      _
    // Predicated region
    $region122: #{sparse_rim_cell_forward.1} parent=1 // pred_check
      _
    $region123: #{sparse_rim_cell_forward.1} parent=1 // pred_check_branch
      %2611 = sbr.rel (0) target = $region125
    $region124: #{sparse_rim_cell_forward.1} parent=1 // pred_region
      _
    $region125: #{sparse_rim_cell_forward.1} parent=1 // pred_fallthru
      _
    // Predicated region
    $region126: #{sparse_rim_cell_forward.1} parent=1 // pred_check
      _
    $region127: #{sparse_rim_cell_forward.1} parent=1 // pred_check_branch
      %2613 = sbr.rel (0) target = $region129
    $region128: #{sparse_rim_cell_forward.1} parent=1 // pred_region
      _
    $region129: #{sparse_rim_cell_forward.1} parent=1 // pred_fallthru
      _
    // Predicated region
    $region130: #{sparse_rim_cell_forward.1} parent=1 // pred_check
      _
    $region131: #{sparse_rim_cell_forward.1} parent=1 // pred_check_branch
      %2615 = sbr.rel (0) target = $region133
    $region132: #{sparse_rim_cell_forward.1} parent=1 // pred_region
      _
    $region133: #{sparse_rim_cell_forward.1} parent=1 // pred_fallthru
      _
    %2616 = vsyncpa [#allocation3], 1
    %2617 = vsyncpa [#allocation5], 1
    %2618 = vsyncpa [#allocation8], 1
    %2619 = vsyncpa [#allocation11], 1
    %2620 = vsyncpa [#allocation14], 1
    %2621 = vsyncpa [#allocation17], 1

</llo_original>
